<compile_context>
chip_gen: v7x
topology: tpu7x:2x2x1
jax: 0.10.0
libtpu: 0.0.40
codegen_flags: <defaults>
</compile_context>

<pallas_src>
import jax
import jax.numpy as jnp
from jax.experimental import pallas as pl
from jax.experimental.pallas import tpu as pltpu

# ---------------- model hyper-parameters (small, synthetic) ----------------
B = 2            # batch
S = 8            # sequence length
D = 32           # d_model
NUM_HEADS = 4
HEAD_DIM = D // NUM_HEADS
FF = 64          # dim_feedforward
NUM_LAYERS = 2
LN_EPS = 1e-5
BS = B * S       # flattened row count


def _layernorm(x, gamma, beta):
    # x: [R, D]; PyTorch LayerNorm (biased variance, eps inside sqrt).
    mean = jnp.mean(x, axis=-1, keepdims=True)
    xc = x - mean
    var = jnp.mean(xc * xc, axis=-1, keepdims=True)
    inv = jax.lax.rsqrt(var + LN_EPS)
    return xc * inv * gamma + beta


# ---------------- single fused Pallas kernel ----------------
def _bran_kernel(x_ref,
                 wqkv_ref, bqkv_ref,      # [L, D, 3D], [L, 1, 3D]
                 wo_ref, bo_ref,          # [L, D, D],  [L, 1, D]
                 w1_ref, b1_ref,          # [L, D, FF], [L, 1, FF]
                 w2_ref, b2_ref,          # [L, FF, D], [L, 1, D]
                 g1_ref, be1_ref,         # [L, 1, D]
                 g2_ref, be2_ref,         # [L, 1, D]
                 fg_ref, fb_ref,          # [1, D]
                 out_ref):
    x = x_ref[...]                                    # [B*S, D] flattened rows
    scale = jnp.float32(1.0 / (HEAD_DIM ** 0.5))

    for l in range(NUM_LAYERS):                       # static, fully unrolled layer loop
        # Read each layer's params once (no re-broadcast per use inside the body).
        wqkv_t = wqkv_ref[l]                          # [D, 3D]
        wo_t = wo_ref[l]                              # [D, D]
        w1_t = w1_ref[l]                              # [D, FF]
        w2_t = w2_ref[l]                              # [FF, D]
        bqkv = bqkv_ref[l]                            # [1, 3D]
        bo = bo_ref[l]                                # [1, D]
        b1 = b1_ref[l]                                # [1, FF]
        b2 = b2_ref[l]                                # [1, D]
        g1, be1 = g1_ref[l], be1_ref[l]
        g2, be2 = g2_ref[l], be2_ref[l]

        # ---- fused QKV projection over all B*S rows (one dot) ----
        qkv = jnp.dot(x, wqkv_t, preferred_element_type=jnp.float32) + bqkv   # [BS, 3D]
        qkv3 = qkv.reshape(B, S, 3 * D)               # leading-dim split only (lane dim unchanged)
        q3 = qkv3[:, :, :D]                           # [B, S, D]
        k3 = qkv3[:, :, D:2 * D]
        v3 = qkv3[:, :, 2 * D:]

        # ---- attention: static head loop, batched over B via single-batch einsums ----
        # TODO(synk): src_mask / src_key_padding_mask are None here; additive masking
        # would be a single `scores + mask` before the softmax.
        attn = None
        for h in range(NUM_HEADS):
            sl = slice(h * HEAD_DIM, (h + 1) * HEAD_DIM)
            qh, kh, vh = q3[:, :, sl], k3[:, :, sl], v3[:, :, sl]              # [B, S, hd]
            scores = jnp.einsum('bqd,bkd->bqk', qh, kh,
                                preferred_element_type=jnp.float32) * scale    # [B, S, S]
            scores = scores - jnp.max(scores, axis=-1, keepdims=True)
            p = jnp.exp(scores)
            # EUP approximate reciprocal for the softmax denominator (frees VALU slots).
            p = p * pl.reciprocal(jnp.sum(p, axis=-1, keepdims=True), approx=True)
            ctx_h = jnp.einsum('bqk,bkd->bqd', p, vh,
                               preferred_element_type=jnp.float32)             # [B, S, hd]
            # Fold out_proj into the head loop: ctx @ Wo^T == sum_h ctx_h @ Wo^T[h rows].
            part = jnp.dot(ctx_h.reshape(BS, HEAD_DIM),
                           wo_t[h * HEAD_DIM:(h + 1) * HEAD_DIM, :],
                           preferred_element_type=jnp.float32)                 # [BS, D]
            attn = part if attn is None else attn + part
        attn = attn + bo

        # ---- residual + norm1 ----
        x = _layernorm(x + attn, g1, be1)

        # ---- feed-forward (ReLU), one dot each over all rows ----
        h1 = jnp.maximum(jnp.dot(x, w1_t, preferred_element_type=jnp.float32) + b1, 0.0)
        h2 = jnp.dot(h1, w2_t, preferred_element_type=jnp.float32) + b2

        # ---- residual + norm2 ----
        x = _layernorm(x + h2, g2, be2)

    # final BRANEncoder.norm
    out_ref[...] = _layernorm(x, fg_ref[...], fb_ref[...])


# ---------------- wrapper ----------------
def _full_spec(arr):
    ndim = arr.ndim
    return pl.BlockSpec(arr.shape, lambda i, _n=ndim: (0,) * _n)


def bran_encoder_pallas(x, stacked, final_gamma, final_beta):
    """x: [B, S, D] f32; stacked: dict of [NUM_LAYERS, ...] parameter stacks."""
    x2 = x.reshape(BS, D)
    args = (x2,
            stacked["wqkv_t"], stacked["bqkv"],
            stacked["wo_t"], stacked["bo"],
            stacked["w1_t"], stacked["b1"],
            stacked["w2_t"], stacked["b2"],
            stacked["g1"], stacked["be1"],
            stacked["g2"], stacked["be2"],
            final_gamma, final_beta)
    # Single fused call, single grid step, everything resident in VMEM (~75 KB of
    # weights + 2 KB activations — trivial even for v7x's 64 MiB VMEM).
    # NOTE(v7x): at real sizes, shard a leading batch/row grid axis with
    # dimension_semantics=("parallel",) to use both TensorCores; at B=2 the single
    # fused block is strictly better.
    out2 = pl.pallas_call(
        _bran_kernel,
        out_shape=jax.ShapeDtypeStruct((BS, D), jnp.float32),
        grid=(1,),
        in_specs=[_full_spec(a) for a in args],
        out_specs=pl.BlockSpec((BS, D), lambda i: (0, 0)),
        compiler_params=pltpu.CompilerParams(dimension_semantics=("arbitrary",)),
    )(*args)
    return out2.reshape(B, S, D)


@jax.jit
def bran_encoder_forward(x, stacked, final_gamma, final_beta):
    return bran_encoder_pallas(x, stacked, final_gamma, final_beta)


# ---------------- deterministic parameter init ----------------
def init_layer_params(key):
    ks = jax.random.split(key, 6)
    std = 0.02
    wqkv = jax.random.normal(ks[0], (3 * D, D), jnp.float32) * std   # in_proj_weight
    bqkv = jax.random.normal(ks[1], (3 * D,), jnp.float32) * std
    wo = jax.random.normal(ks[2], (D, D), jnp.float32) * std         # out_proj
    bo = jnp.zeros((D,), jnp.float32)
    w1 = jax.random.normal(ks[3], (FF, D), jnp.float32) * std        # linear1
    b1 = jax.random.normal(ks[4], (FF,), jnp.float32) * std
    w2 = jax.random.normal(ks[5], (D, FF), jnp.float32) * std        # linear2
    b2 = jnp.zeros((D,), jnp.float32)
    return {
        # pre-transposed weights so kernels do x @ W^T as plain x @ W_t
        "wqkv_t": wqkv.T, "bqkv": bqkv.reshape(1, -1),
        "wo_t": wo.T, "bo": bo.reshape(1, -1),
        "w1_t": w1.T, "b1": b1.reshape(1, -1),
        "w2_t": w2.T, "b2": b2.reshape(1, -1),
        "g1": jnp.ones((1, D), jnp.float32), "be1": jnp.zeros((1, D), jnp.float32),
        "g2": jnp.ones((1, D), jnp.float32), "be2": jnp.zeros((1, D), jnp.float32),
    }


def stack_layer_params(layer_params):
    keys = layer_params[0].keys()
    return {k: jnp.stack([p[k] for p in layer_params], axis=0) for k in keys}


# ---------------- pure-JAX reference for correctness ----------------
def _ref_layernorm(x, g, b):
    mean = jnp.mean(x, axis=-1, keepdims=True)
    var = jnp.mean((x - mean) ** 2, axis=-1, keepdims=True)
    return (x - mean) / jnp.sqrt(var + LN_EPS) * g + b


def reference_forward(x, layer_params, fg, fb):
    out = x
    for p in layer_params:
        qkv = out @ p["wqkv_t"] + p["bqkv"]                  # [B,S,3D]
        q, k, v = qkv[..., :D], qkv[..., D:2 * D], qkv[..., 2 * D:]
        qh = q.reshape(B, S, NUM_HEADS, HEAD_DIM)
        kh = k.reshape(B, S, NUM_HEADS, HEAD_DIM)
        vh = v.reshape(B, S, NUM_HEADS, HEAD_DIM)
        scores = jnp.einsum("bqhd,bkhd->bhqk", qh, kh) / (HEAD_DIM ** 0.5)
        probs = jax.nn.softmax(scores, axis=-1)
        ctx = jnp.einsum("bhqk,bkhd->bqhd", probs, vh).reshape(B, S, D)
        attn = ctx @ p["wo_t"] + p["bo"]
        y = _ref_layernorm(out + attn, p["g1"], p["be1"])
        ff = jnp.maximum(y @ p["w1_t"] + p["b1"], 0.0) @ p["w2_t"] + p["b2"]
        out = _ref_layernorm(y + ff, p["g2"], p["be2"])
    return _ref_layernorm(out, fg, fb)


if __name__ == "__main__":
    key = jax.random.PRNGKey(0)
    k_x, *k_layers = jax.random.split(key, NUM_LAYERS + 1)

    src = jax.random.normal(k_x, (B, S, D), jnp.float32)
    layer_params = [init_layer_params(k) for k in k_layers]
    stacked = stack_layer_params(layer_params)
    final_gamma = jnp.ones((1, D), jnp.float32)
    final_beta = jnp.zeros((1, D), jnp.float32)

    out = bran_encoder_forward(src, stacked, final_gamma, final_beta)
    out = jax.block_until_ready(out)

    ref = reference_forward(src, layer_params, final_gamma, final_beta)
    assert out.shape == (B, S, D)
    # Tolerance 1e-3 (not 1e-4): the kernel uses the EUP approximate reciprocal in
    # the softmax; everything else is exact f32.
    assert jnp.allclose(out, ref, rtol=1e-3, atol=1e-3), "mismatch vs pure-JAX reference"

    print("KERNEL_OK")
</pallas_src>

<mosaic_0001>
module attributes {stable_mosaic.version = 11 : i64} {
  func.func @_bran_kernel(%arg0: i32, %arg1: memref<16x32xf32, #tpu.memory_space<vmem>>, %arg2: memref<2x32x96xf32, #tpu.memory_space<vmem>>, %arg3: memref<2x1x96xf32, #tpu.memory_space<vmem>>, %arg4: memref<2x32x32xf32, #tpu.memory_space<vmem>>, %arg5: memref<2x1x32xf32, #tpu.memory_space<vmem>>, %arg6: memref<2x32x64xf32, #tpu.memory_space<vmem>>, %arg7: memref<2x1x64xf32, #tpu.memory_space<vmem>>, %arg8: memref<2x64x32xf32, #tpu.memory_space<vmem>>, %arg9: memref<2x1x32xf32, #tpu.memory_space<vmem>>, %arg10: memref<2x1x32xf32, #tpu.memory_space<vmem>>, %arg11: memref<2x1x32xf32, #tpu.memory_space<vmem>>, %arg12: memref<2x1x32xf32, #tpu.memory_space<vmem>>, %arg13: memref<2x1x32xf32, #tpu.memory_space<vmem>>, %arg14: memref<1x32xf32, #tpu.memory_space<vmem>>, %arg15: memref<1x32xf32, #tpu.memory_space<vmem>>, %arg16: memref<16x32xf32, #tpu.memory_space<vmem>>) attributes {dimension_semantics = [#tpu.dimension_semantics<arbitrary>], iteration_bounds = array<i64: 1>, scalar_prefetch = 0 : i64, scratch_operands = 0 : i64, tpu.core_type = #tpu.core_type<tc>, window_params = [{pipeline_mode = #tpu.pipeline_mode<synchronous>, transform_indices = @transform_0, window_bounds = array<i64: 16, 32>}, {pipeline_mode = #tpu.pipeline_mode<synchronous>, transform_indices = @transform_1, window_bounds = array<i64: 2, 32, 96>}, {pipeline_mode = #tpu.pipeline_mode<synchronous>, transform_indices = @transform_2, window_bounds = array<i64: 2, 1, 96>}, {pipeline_mode = #tpu.pipeline_mode<synchronous>, transform_indices = @transform_3, window_bounds = array<i64: 2, 32, 32>}, {pipeline_mode = #tpu.pipeline_mode<synchronous>, transform_indices = @transform_4, window_bounds = array<i64: 2, 1, 32>}, {pipeline_mode = #tpu.pipeline_mode<synchronous>, transform_indices = @transform_5, window_bounds = array<i64: 2, 32, 64>}, {pipeline_mode = #tpu.pipeline_mode<synchronous>, transform_indices = @transform_6, window_bounds = array<i64: 2, 1, 64>}, {pipeline_mode = #tpu.pipeline_mode<synchronous>, transform_indices = @transform_7, window_bounds = array<i64: 2, 64, 32>}, {pipeline_mode = #tpu.pipeline_mode<synchronous>, transform_indices = @transform_8, window_bounds = array<i64: 2, 1, 32>}, {pipeline_mode = #tpu.pipeline_mode<synchronous>, transform_indices = @transform_9, window_bounds = array<i64: 2, 1, 32>}, {pipeline_mode = #tpu.pipeline_mode<synchronous>, transform_indices = @transform_10, window_bounds = array<i64: 2, 1, 32>}, {pipeline_mode = #tpu.pipeline_mode<synchronous>, transform_indices = @transform_11, window_bounds = array<i64: 2, 1, 32>}, {pipeline_mode = #tpu.pipeline_mode<synchronous>, transform_indices = @transform_12, window_bounds = array<i64: 2, 1, 32>}, {pipeline_mode = #tpu.pipeline_mode<synchronous>, transform_indices = @transform_13, window_bounds = array<i64: 1, 32>}, {pipeline_mode = #tpu.pipeline_mode<synchronous>, transform_indices = @transform_14, window_bounds = array<i64: 1, 32>}, {pipeline_mode = #tpu.pipeline_mode<synchronous>, transform_indices = @transform_15, window_bounds = array<i64: 16, 32>}]} {
    %c0 = arith.constant 0 : index
    %c0_0 = arith.constant 0 : index
    %0 = vector.load %arg1[%c0, %c0_0] : memref<16x32xf32, #tpu.memory_space<vmem>>, vector<16x32xf32>
    %c0_1 = arith.constant 0 : index
    %c0_2 = arith.constant 0 : index
    %c0_3 = arith.constant 0 : index
    %1 = vector.load %arg2[%c0_1, %c0_2, %c0_3] : memref<2x32x96xf32, #tpu.memory_space<vmem>>, vector<1x32x96xf32>
    %2 = vector.shape_cast %1 : vector<1x32x96xf32> to vector<32x96xf32>
    %c0_4 = arith.constant 0 : index
    %c0_5 = arith.constant 0 : index
    %c0_6 = arith.constant 0 : index
    %3 = vector.load %arg4[%c0_4, %c0_5, %c0_6] : memref<2x32x32xf32, #tpu.memory_space<vmem>>, vector<1x32x32xf32>
    %4 = vector.shape_cast %3 : vector<1x32x32xf32> to vector<32x32xf32>
    %c0_7 = arith.constant 0 : index
    %c0_8 = arith.constant 0 : index
    %c0_9 = arith.constant 0 : index
    %5 = vector.load %arg6[%c0_7, %c0_8, %c0_9] : memref<2x32x64xf32, #tpu.memory_space<vmem>>, vector<1x32x64xf32>
    %6 = vector.shape_cast %5 : vector<1x32x64xf32> to vector<32x64xf32>
    %c0_10 = arith.constant 0 : index
    %c0_11 = arith.constant 0 : index
    %c0_12 = arith.constant 0 : index
    %7 = vector.load %arg8[%c0_10, %c0_11, %c0_12] : memref<2x64x32xf32, #tpu.memory_space<vmem>>, vector<1x64x32xf32>
    %8 = vector.shape_cast %7 : vector<1x64x32xf32> to vector<64x32xf32>
    %c0_13 = arith.constant 0 : index
    %c0_14 = arith.constant 0 : index
    %c0_15 = arith.constant 0 : index
    %9 = vector.load %arg3[%c0_13, %c0_14, %c0_15] : memref<2x1x96xf32, #tpu.memory_space<vmem>>, vector<1x1x96xf32>
    %10 = vector.shape_cast %9 : vector<1x1x96xf32> to vector<1x96xf32>
    %c0_16 = arith.constant 0 : index
    %c0_17 = arith.constant 0 : index
    %c0_18 = arith.constant 0 : index
    %11 = vector.load %arg5[%c0_16, %c0_17, %c0_18] : memref<2x1x32xf32, #tpu.memory_space<vmem>>, vector<1x1x32xf32>
    %12 = vector.shape_cast %11 : vector<1x1x32xf32> to vector<1x32xf32>
    %c0_19 = arith.constant 0 : index
    %c0_20 = arith.constant 0 : index
    %c0_21 = arith.constant 0 : index
    %13 = vector.load %arg7[%c0_19, %c0_20, %c0_21] : memref<2x1x64xf32, #tpu.memory_space<vmem>>, vector<1x1x64xf32>
    %14 = vector.shape_cast %13 : vector<1x1x64xf32> to vector<1x64xf32>
    %c0_22 = arith.constant 0 : index
    %c0_23 = arith.constant 0 : index
    %c0_24 = arith.constant 0 : index
    %15 = vector.load %arg9[%c0_22, %c0_23, %c0_24] : memref<2x1x32xf32, #tpu.memory_space<vmem>>, vector<1x1x32xf32>
    %16 = vector.shape_cast %15 : vector<1x1x32xf32> to vector<1x32xf32>
    %c0_25 = arith.constant 0 : index
    %c0_26 = arith.constant 0 : index
    %c0_27 = arith.constant 0 : index
    %17 = vector.load %arg10[%c0_25, %c0_26, %c0_27] : memref<2x1x32xf32, #tpu.memory_space<vmem>>, vector<1x1x32xf32>
    %18 = vector.shape_cast %17 : vector<1x1x32xf32> to vector<1x32xf32>
    %c0_28 = arith.constant 0 : index
    %c0_29 = arith.constant 0 : index
    %c0_30 = arith.constant 0 : index
    %19 = vector.load %arg11[%c0_28, %c0_29, %c0_30] : memref<2x1x32xf32, #tpu.memory_space<vmem>>, vector<1x1x32xf32>
    %20 = vector.shape_cast %19 : vector<1x1x32xf32> to vector<1x32xf32>
    %c0_31 = arith.constant 0 : index
    %c0_32 = arith.constant 0 : index
    %c0_33 = arith.constant 0 : index
    %21 = vector.load %arg12[%c0_31, %c0_32, %c0_33] : memref<2x1x32xf32, #tpu.memory_space<vmem>>, vector<1x1x32xf32>
    %22 = vector.shape_cast %21 : vector<1x1x32xf32> to vector<1x32xf32>
    %c0_34 = arith.constant 0 : index
    %c0_35 = arith.constant 0 : index
    %c0_36 = arith.constant 0 : index
    %23 = vector.load %arg13[%c0_34, %c0_35, %c0_36] : memref<2x1x32xf32, #tpu.memory_space<vmem>>, vector<1x1x32xf32>
    %24 = vector.shape_cast %23 : vector<1x1x32xf32> to vector<1x32xf32>
    %cst = arith.constant dense<0.000000e+00> : vector<16x96xf32>
    %25 = tpu.matmul %0, %2, %cst {dimension_numbers = #tpu.dot_dimension_numbers<[1], [0], [0], [1], [0, 0, 1, 1], [], []>} : vector<16x32xf32>, vector<32x96xf32>, vector<16x96xf32> -> vector<16x96xf32>
    %26 = vector.broadcast %10 : vector<1x96xf32> to vector<16x96xf32>
    %27 = arith.addf %25, %26 : vector<16x96xf32>
    %28 = vector.shape_cast %27 : vector<16x96xf32> to vector<2x8x96xf32>
    %29 = vector.extract_strided_slice %28 {offsets = [0, 0, 0], sizes = [2, 8, 32], strides = [1, 1, 1]} : vector<2x8x96xf32> to vector<2x8x32xf32>
    %30 = vector.extract_strided_slice %28 {offsets = [0, 0, 32], sizes = [2, 8, 32], strides = [1, 1, 1]} : vector<2x8x96xf32> to vector<2x8x32xf32>
    %31 = vector.extract_strided_slice %28 {offsets = [0, 0, 64], sizes = [2, 8, 32], strides = [1, 1, 1]} : vector<2x8x96xf32> to vector<2x8x32xf32>
    %32 = vector.extract_strided_slice %29 {offsets = [0, 0, 0], sizes = [2, 8, 8], strides = [1, 1, 1]} : vector<2x8x32xf32> to vector<2x8x8xf32>
    %33 = vector.extract_strided_slice %30 {offsets = [0, 0, 0], sizes = [2, 8, 8], strides = [1, 1, 1]} : vector<2x8x32xf32> to vector<2x8x8xf32>
    %34 = vector.extract_strided_slice %31 {offsets = [0, 0, 0], sizes = [2, 8, 8], strides = [1, 1, 1]} : vector<2x8x32xf32> to vector<2x8x8xf32>
    "tpu.trace_start"() <{level = 10 : i32, message = "bqd,bkd->bqk"}> : () -> ()
    %cst_37 = arith.constant dense<0.000000e+00> : vector<2x8x8xf32>
    %35 = tpu.matmul %32, %33, %cst_37 {dimension_numbers = #tpu.dot_dimension_numbers<[2], [2], [1], [1], [0, 0, 0, 1, 1, 1], [0], [0]>} : vector<2x8x8xf32>, vector<2x8x8xf32>, vector<2x8x8xf32> -> vector<2x8x8xf32>
    "tpu.trace_stop"() : () -> ()
    %cst_38 = arith.constant 0.353553385 : f32
    %36 = vector.broadcast %cst_38 : f32 to vector<2x8x8xf32>
    %37 = arith.mulf %35, %36 : vector<2x8x8xf32>
    %cst_39 = arith.constant dense<0xFF800000> : vector<2x8xf32>
    %38 = vector.multi_reduction <maximumf>, %37, %cst_39 [2] : vector<2x8x8xf32> to vector<2x8xf32>
    %39 = vector.shape_cast %38 : vector<2x8xf32> to vector<2x8x1xf32>
    %40 = vector.broadcast %39 : vector<2x8x1xf32> to vector<2x8x8xf32>
    %41 = arith.subf %37, %40 : vector<2x8x8xf32>
    %42 = math.exp %41 : vector<2x8x8xf32>
    %cst_40 = arith.constant dense<0.000000e+00> : vector<2x8xf32>
    %43 = vector.multi_reduction <add>, %42, %cst_40 [2] : vector<2x8x8xf32> to vector<2x8xf32>
    %44 = vector.shape_cast %43 : vector<2x8xf32> to vector<2x8x1xf32>
    %45 = tpu.reciprocal %44 {approx = true} : vector<2x8x1xf32> -> vector<2x8x1xf32>
    %46 = vector.broadcast %45 : vector<2x8x1xf32> to vector<2x8x8xf32>
    %47 = arith.mulf %42, %46 : vector<2x8x8xf32>
    "tpu.trace_start"() <{level = 10 : i32, message = "bqk,bkd->bqd"}> : () -> ()
    %cst_41 = arith.constant dense<0.000000e+00> : vector<2x8x8xf32>
    %48 = tpu.matmul %47, %34, %cst_41 {dimension_numbers = #tpu.dot_dimension_numbers<[2], [1], [1], [2], [0, 0, 0, 1, 1, 2], [0], [0]>} : vector<2x8x8xf32>, vector<2x8x8xf32>, vector<2x8x8xf32> -> vector<2x8x8xf32>
    "tpu.trace_stop"() : () -> ()
    %49 = vector.shape_cast %48 : vector<2x8x8xf32> to vector<16x8xf32>
    %50 = vector.extract_strided_slice %4 {offsets = [0, 0], sizes = [8, 32], strides = [1, 1]} : vector<32x32xf32> to vector<8x32xf32>
    %cst_42 = arith.constant dense<0.000000e+00> : vector<16x32xf32>
    %51 = tpu.matmul %49, %50, %cst_42 {dimension_numbers = #tpu.dot_dimension_numbers<[1], [0], [0], [1], [0, 0, 1, 1], [], []>} : vector<16x8xf32>, vector<8x32xf32>, vector<16x32xf32> -> vector<16x32xf32>
    %52 = vector.extract_strided_slice %29 {offsets = [0, 0, 8], sizes = [2, 8, 8], strides = [1, 1, 1]} : vector<2x8x32xf32> to vector<2x8x8xf32>
    %53 = vector.extract_strided_slice %30 {offsets = [0, 0, 8], sizes = [2, 8, 8], strides = [1, 1, 1]} : vector<2x8x32xf32> to vector<2x8x8xf32>
    %54 = vector.extract_strided_slice %31 {offsets = [0, 0, 8], sizes = [2, 8, 8], strides = [1, 1, 1]} : vector<2x8x32xf32> to vector<2x8x8xf32>
    "tpu.trace_start"() <{level = 10 : i32, message = "bqd,bkd->bqk"}> : () -> ()
    %cst_43 = arith.constant dense<0.000000e+00> : vector<2x8x8xf32>
    %55 = tpu.matmul %52, %53, %cst_43 {dimension_numbers = #tpu.dot_dimension_numbers<[2], [2], [1], [1], [0, 0, 0, 1, 1, 1], [0], [0]>} : vector<2x8x8xf32>, vector<2x8x8xf32>, vector<2x8x8xf32> -> vector<2x8x8xf32>
    "tpu.trace_stop"() : () -> ()
    %cst_44 = arith.constant 0.353553385 : f32
    %56 = vector.broadcast %cst_44 : f32 to vector<2x8x8xf32>
    %57 = arith.mulf %55, %56 : vector<2x8x8xf32>
    %cst_45 = arith.constant dense<0xFF800000> : vector<2x8xf32>
    %58 = vector.multi_reduction <maximumf>, %57, %cst_45 [2] : vector<2x8x8xf32> to vector<2x8xf32>
    %59 = vector.shape_cast %58 : vector<2x8xf32> to vector<2x8x1xf32>
    %60 = vector.broadcast %59 : vector<2x8x1xf32> to vector<2x8x8xf32>
    %61 = arith.subf %57, %60 : vector<2x8x8xf32>
    %62 = math.exp %61 : vector<2x8x8xf32>
    %cst_46 = arith.constant dense<0.000000e+00> : vector<2x8xf32>
    %63 = vector.multi_reduction <add>, %62, %cst_46 [2] : vector<2x8x8xf32> to vector<2x8xf32>
    %64 = vector.shape_cast %63 : vector<2x8xf32> to vector<2x8x1xf32>
    %65 = tpu.reciprocal %64 {approx = true} : vector<2x8x1xf32> -> vector<2x8x1xf32>
    %66 = vector.broadcast %65 : vector<2x8x1xf32> to vector<2x8x8xf32>
    %67 = arith.mulf %62, %66 : vector<2x8x8xf32>
    "tpu.trace_start"() <{level = 10 : i32, message = "bqk,bkd->bqd"}> : () -> ()
    %cst_47 = arith.constant dense<0.000000e+00> : vector<2x8x8xf32>
    %68 = tpu.matmul %67, %54, %cst_47 {dimension_numbers = #tpu.dot_dimension_numbers<[2], [1], [1], [2], [0, 0, 0, 1, 1, 2], [0], [0]>} : vector<2x8x8xf32>, vector<2x8x8xf32>, vector<2x8x8xf32> -> vector<2x8x8xf32>
    "tpu.trace_stop"() : () -> ()
    %69 = vector.shape_cast %68 : vector<2x8x8xf32> to vector<16x8xf32>
    %70 = vector.extract_strided_slice %4 {offsets = [8, 0], sizes = [8, 32], strides = [1, 1]} : vector<32x32xf32> to vector<8x32xf32>
    %cst_48 = arith.constant dense<0.000000e+00> : vector<16x32xf32>
    %71 = tpu.matmul %69, %70, %cst_48 {dimension_numbers = #tpu.dot_dimension_numbers<[1], [0], [0], [1], [0, 0, 1, 1], [], []>} : vector<16x8xf32>, vector<8x32xf32>, vector<16x32xf32> -> vector<16x32xf32>
    %72 = arith.addf %51, %71 : vector<16x32xf32>
    %73 = vector.extract_strided_slice %29 {offsets = [0, 0, 16], sizes = [2, 8, 8], strides = [1, 1, 1]} : vector<2x8x32xf32> to vector<2x8x8xf32>
    %74 = vector.extract_strided_slice %30 {offsets = [0, 0, 16], sizes = [2, 8, 8], strides = [1, 1, 1]} : vector<2x8x32xf32> to vector<2x8x8xf32>
    %75 = vector.extract_strided_slice %31 {offsets = [0, 0, 16], sizes = [2, 8, 8], strides = [1, 1, 1]} : vector<2x8x32xf32> to vector<2x8x8xf32>
    "tpu.trace_start"() <{level = 10 : i32, message = "bqd,bkd->bqk"}> : () -> ()
    %cst_49 = arith.constant dense<0.000000e+00> : vector<2x8x8xf32>
    %76 = tpu.matmul %73, %74, %cst_49 {dimension_numbers = #tpu.dot_dimension_numbers<[2], [2], [1], [1], [0, 0, 0, 1, 1, 1], [0], [0]>} : vector<2x8x8xf32>, vector<2x8x8xf32>, vector<2x8x8xf32> -> vector<2x8x8xf32>
    "tpu.trace_stop"() : () -> ()
    %cst_50 = arith.constant 0.353553385 : f32
    %77 = vector.broadcast %cst_50 : f32 to vector<2x8x8xf32>
    %78 = arith.mulf %76, %77 : vector<2x8x8xf32>
    %cst_51 = arith.constant dense<0xFF800000> : vector<2x8xf32>
    %79 = vector.multi_reduction <maximumf>, %78, %cst_51 [2] : vector<2x8x8xf32> to vector<2x8xf32>
    %80 = vector.shape_cast %79 : vector<2x8xf32> to vector<2x8x1xf32>
    %81 = vector.broadcast %80 : vector<2x8x1xf32> to vector<2x8x8xf32>
    %82 = arith.subf %78, %81 : vector<2x8x8xf32>
    %83 = math.exp %82 : vector<2x8x8xf32>
    %cst_52 = arith.constant dense<0.000000e+00> : vector<2x8xf32>
    %84 = vector.multi_reduction <add>, %83, %cst_52 [2] : vector<2x8x8xf32> to vector<2x8xf32>
    %85 = vector.shape_cast %84 : vector<2x8xf32> to vector<2x8x1xf32>
    %86 = tpu.reciprocal %85 {approx = true} : vector<2x8x1xf32> -> vector<2x8x1xf32>
    %87 = vector.broadcast %86 : vector<2x8x1xf32> to vector<2x8x8xf32>
    %88 = arith.mulf %83, %87 : vector<2x8x8xf32>
    "tpu.trace_start"() <{level = 10 : i32, message = "bqk,bkd->bqd"}> : () -> ()
    %cst_53 = arith.constant dense<0.000000e+00> : vector<2x8x8xf32>
    %89 = tpu.matmul %88, %75, %cst_53 {dimension_numbers = #tpu.dot_dimension_numbers<[2], [1], [1], [2], [0, 0, 0, 1, 1, 2], [0], [0]>} : vector<2x8x8xf32>, vector<2x8x8xf32>, vector<2x8x8xf32> -> vector<2x8x8xf32>
    "tpu.trace_stop"() : () -> ()
    %90 = vector.shape_cast %89 : vector<2x8x8xf32> to vector<16x8xf32>
    %91 = vector.extract_strided_slice %4 {offsets = [16, 0], sizes = [8, 32], strides = [1, 1]} : vector<32x32xf32> to vector<8x32xf32>
    %cst_54 = arith.constant dense<0.000000e+00> : vector<16x32xf32>
    %92 = tpu.matmul %90, %91, %cst_54 {dimension_numbers = #tpu.dot_dimension_numbers<[1], [0], [0], [1], [0, 0, 1, 1], [], []>} : vector<16x8xf32>, vector<8x32xf32>, vector<16x32xf32> -> vector<16x32xf32>
    %93 = arith.addf %72, %92 : vector<16x32xf32>
    %94 = vector.extract_strided_slice %29 {offsets = [0, 0, 24], sizes = [2, 8, 8], strides = [1, 1, 1]} : vector<2x8x32xf32> to vector<2x8x8xf32>
    %95 = vector.extract_strided_slice %30 {offsets = [0, 0, 24], sizes = [2, 8, 8], strides = [1, 1, 1]} : vector<2x8x32xf32> to vector<2x8x8xf32>
    %96 = vector.extract_strided_slice %31 {offsets = [0, 0, 24], sizes = [2, 8, 8], strides = [1, 1, 1]} : vector<2x8x32xf32> to vector<2x8x8xf32>
    "tpu.trace_start"() <{level = 10 : i32, message = "bqd,bkd->bqk"}> : () -> ()
    %cst_55 = arith.constant dense<0.000000e+00> : vector<2x8x8xf32>
    %97 = tpu.matmul %94, %95, %cst_55 {dimension_numbers = #tpu.dot_dimension_numbers<[2], [2], [1], [1], [0, 0, 0, 1, 1, 1], [0], [0]>} : vector<2x8x8xf32>, vector<2x8x8xf32>, vector<2x8x8xf32> -> vector<2x8x8xf32>
    "tpu.trace_stop"() : () -> ()
    %cst_56 = arith.constant 0.353553385 : f32
    %98 = vector.broadcast %cst_56 : f32 to vector<2x8x8xf32>
    %99 = arith.mulf %97, %98 : vector<2x8x8xf32>
    %cst_57 = arith.constant dense<0xFF800000> : vector<2x8xf32>
    %100 = vector.multi_reduction <maximumf>, %99, %cst_57 [2] : vector<2x8x8xf32> to vector<2x8xf32>
    %101 = vector.shape_cast %100 : vector<2x8xf32> to vector<2x8x1xf32>
    %102 = vector.broadcast %101 : vector<2x8x1xf32> to vector<2x8x8xf32>
    %103 = arith.subf %99, %102 : vector<2x8x8xf32>
    %104 = math.exp %103 : vector<2x8x8xf32>
    %cst_58 = arith.constant dense<0.000000e+00> : vector<2x8xf32>
    %105 = vector.multi_reduction <add>, %104, %cst_58 [2] : vector<2x8x8xf32> to vector<2x8xf32>
    %106 = vector.shape_cast %105 : vector<2x8xf32> to vector<2x8x1xf32>
    %107 = tpu.reciprocal %106 {approx = true} : vector<2x8x1xf32> -> vector<2x8x1xf32>
    %108 = vector.broadcast %107 : vector<2x8x1xf32> to vector<2x8x8xf32>
    %109 = arith.mulf %104, %108 : vector<2x8x8xf32>
    "tpu.trace_start"() <{level = 10 : i32, message = "bqk,bkd->bqd"}> : () -> ()
    %cst_59 = arith.constant dense<0.000000e+00> : vector<2x8x8xf32>
    %110 = tpu.matmul %109, %96, %cst_59 {dimension_numbers = #tpu.dot_dimension_numbers<[2], [1], [1], [2], [0, 0, 0, 1, 1, 2], [0], [0]>} : vector<2x8x8xf32>, vector<2x8x8xf32>, vector<2x8x8xf32> -> vector<2x8x8xf32>
    "tpu.trace_stop"() : () -> ()
    %111 = vector.shape_cast %110 : vector<2x8x8xf32> to vector<16x8xf32>
    %112 = vector.extract_strided_slice %4 {offsets = [24, 0], sizes = [8, 32], strides = [1, 1]} : vector<32x32xf32> to vector<8x32xf32>
    %cst_60 = arith.constant dense<0.000000e+00> : vector<16x32xf32>
    %113 = tpu.matmul %111, %112, %cst_60 {dimension_numbers = #tpu.dot_dimension_numbers<[1], [0], [0], [1], [0, 0, 1, 1], [], []>} : vector<16x8xf32>, vector<8x32xf32>, vector<16x32xf32> -> vector<16x32xf32>
    %114 = arith.addf %93, %113 : vector<16x32xf32>
    %115 = vector.broadcast %12 : vector<1x32xf32> to vector<16x32xf32>
    %116 = arith.addf %114, %115 : vector<16x32xf32>
    %117 = arith.addf %0, %116 : vector<16x32xf32>
    %cst_61 = arith.constant dense<0.000000e+00> : vector<16xf32>
    %118 = vector.multi_reduction <add>, %117, %cst_61 [1] : vector<16x32xf32> to vector<16xf32>
    %119 = vector.shape_cast %118 : vector<16xf32> to vector<16x1xf32>
    %cst_62 = arith.constant 3.200000e+01 : f32
    %120 = vector.broadcast %cst_62 : f32 to vector<16x1xf32>
    %121 = arith.divf %119, %120 : vector<16x1xf32>
    %122 = vector.broadcast %121 : vector<16x1xf32> to vector<16x32xf32>
    %123 = arith.subf %117, %122 : vector<16x32xf32>
    %124 = arith.mulf %123, %123 : vector<16x32xf32>
    %cst_63 = arith.constant dense<0.000000e+00> : vector<16xf32>
    %125 = vector.multi_reduction <add>, %124, %cst_63 [1] : vector<16x32xf32> to vector<16xf32>
    %126 = vector.shape_cast %125 : vector<16xf32> to vector<16x1xf32>
    %cst_64 = arith.constant 3.200000e+01 : f32
    %127 = vector.broadcast %cst_64 : f32 to vector<16x1xf32>
    %128 = arith.divf %126, %127 : vector<16x1xf32>
    %cst_65 = arith.constant 9.99999974E-6 : f32
    %129 = vector.broadcast %cst_65 : f32 to vector<16x1xf32>
    %130 = arith.addf %128, %129 : vector<16x1xf32>
    %131 = math.rsqrt %130 : vector<16x1xf32>
    %132 = vector.broadcast %131 : vector<16x1xf32> to vector<16x32xf32>
    %133 = arith.mulf %123, %132 : vector<16x32xf32>
    %134 = vector.broadcast %18 : vector<1x32xf32> to vector<16x32xf32>
    %135 = arith.mulf %133, %134 : vector<16x32xf32>
    %136 = vector.broadcast %20 : vector<1x32xf32> to vector<16x32xf32>
    %137 = arith.addf %135, %136 : vector<16x32xf32>
    %cst_66 = arith.constant dense<0.000000e+00> : vector<16x64xf32>
    %138 = tpu.matmul %137, %6, %cst_66 {dimension_numbers = #tpu.dot_dimension_numbers<[1], [0], [0], [1], [0, 0, 1, 1], [], []>} : vector<16x32xf32>, vector<32x64xf32>, vector<16x64xf32> -> vector<16x64xf32>
    %139 = vector.broadcast %14 : vector<1x64xf32> to vector<16x64xf32>
    %140 = arith.addf %138, %139 : vector<16x64xf32>
    %cst_67 = arith.constant 0.000000e+00 : f32
    %141 = vector.broadcast %cst_67 : f32 to vector<16x64xf32>
    %142 = arith.maximumf %140, %141 : vector<16x64xf32>
    %cst_68 = arith.constant dense<0.000000e+00> : vector<16x32xf32>
    %143 = tpu.matmul %142, %8, %cst_68 {dimension_numbers = #tpu.dot_dimension_numbers<[1], [0], [0], [1], [0, 0, 1, 1], [], []>} : vector<16x64xf32>, vector<64x32xf32>, vector<16x32xf32> -> vector<16x32xf32>
    %144 = vector.broadcast %16 : vector<1x32xf32> to vector<16x32xf32>
    %145 = arith.addf %143, %144 : vector<16x32xf32>
    %146 = arith.addf %137, %145 : vector<16x32xf32>
    %cst_69 = arith.constant dense<0.000000e+00> : vector<16xf32>
    %147 = vector.multi_reduction <add>, %146, %cst_69 [1] : vector<16x32xf32> to vector<16xf32>
    %148 = vector.shape_cast %147 : vector<16xf32> to vector<16x1xf32>
    %cst_70 = arith.constant 3.200000e+01 : f32
    %149 = vector.broadcast %cst_70 : f32 to vector<16x1xf32>
    %150 = arith.divf %148, %149 : vector<16x1xf32>
    %151 = vector.broadcast %150 : vector<16x1xf32> to vector<16x32xf32>
    %152 = arith.subf %146, %151 : vector<16x32xf32>
    %153 = arith.mulf %152, %152 : vector<16x32xf32>
    %cst_71 = arith.constant dense<0.000000e+00> : vector<16xf32>
    %154 = vector.multi_reduction <add>, %153, %cst_71 [1] : vector<16x32xf32> to vector<16xf32>
    %155 = vector.shape_cast %154 : vector<16xf32> to vector<16x1xf32>
    %cst_72 = arith.constant 3.200000e+01 : f32
    %156 = vector.broadcast %cst_72 : f32 to vector<16x1xf32>
    %157 = arith.divf %155, %156 : vector<16x1xf32>
    %cst_73 = arith.constant 9.99999974E-6 : f32
    %158 = vector.broadcast %cst_73 : f32 to vector<16x1xf32>
    %159 = arith.addf %157, %158 : vector<16x1xf32>
    %160 = math.rsqrt %159 : vector<16x1xf32>
    %161 = vector.broadcast %160 : vector<16x1xf32> to vector<16x32xf32>
    %162 = arith.mulf %152, %161 : vector<16x32xf32>
    %163 = vector.broadcast %22 : vector<1x32xf32> to vector<16x32xf32>
    %164 = arith.mulf %162, %163 : vector<16x32xf32>
    %165 = vector.broadcast %24 : vector<1x32xf32> to vector<16x32xf32>
    %166 = arith.addf %164, %165 : vector<16x32xf32>
    %c1 = arith.constant 1 : index
    %c0_74 = arith.constant 0 : index
    %c0_75 = arith.constant 0 : index
    %167 = vector.load %arg2[%c1, %c0_74, %c0_75] : memref<2x32x96xf32, #tpu.memory_space<vmem>>, vector<1x32x96xf32>
    %168 = vector.shape_cast %167 : vector<1x32x96xf32> to vector<32x96xf32>
    %c1_76 = arith.constant 1 : index
    %c0_77 = arith.constant 0 : index
    %c0_78 = arith.constant 0 : index
    %169 = vector.load %arg4[%c1_76, %c0_77, %c0_78] : memref<2x32x32xf32, #tpu.memory_space<vmem>>, vector<1x32x32xf32>
    %170 = vector.shape_cast %169 : vector<1x32x32xf32> to vector<32x32xf32>
    %c1_79 = arith.constant 1 : index
    %c0_80 = arith.constant 0 : index
    %c0_81 = arith.constant 0 : index
    %171 = vector.load %arg6[%c1_79, %c0_80, %c0_81] : memref<2x32x64xf32, #tpu.memory_space<vmem>>, vector<1x32x64xf32>
    %172 = vector.shape_cast %171 : vector<1x32x64xf32> to vector<32x64xf32>
    %c1_82 = arith.constant 1 : index
    %c0_83 = arith.constant 0 : index
    %c0_84 = arith.constant 0 : index
    %173 = vector.load %arg8[%c1_82, %c0_83, %c0_84] : memref<2x64x32xf32, #tpu.memory_space<vmem>>, vector<1x64x32xf32>
    %174 = vector.shape_cast %173 : vector<1x64x32xf32> to vector<64x32xf32>
    %c1_85 = arith.constant 1 : index
    %c0_86 = arith.constant 0 : index
    %c0_87 = arith.constant 0 : index
    %175 = vector.load %arg3[%c1_85, %c0_86, %c0_87] : memref<2x1x96xf32, #tpu.memory_space<vmem>>, vector<1x1x96xf32>
    %176 = vector.shape_cast %175 : vector<1x1x96xf32> to vector<1x96xf32>
    %c1_88 = arith.constant 1 : index
    %c0_89 = arith.constant 0 : index
    %c0_90 = arith.constant 0 : index
    %177 = vector.load %arg5[%c1_88, %c0_89, %c0_90] : memref<2x1x32xf32, #tpu.memory_space<vmem>>, vector<1x1x32xf32>
    %178 = vector.shape_cast %177 : vector<1x1x32xf32> to vector<1x32xf32>
    %c1_91 = arith.constant 1 : index
    %c0_92 = arith.constant 0 : index
    %c0_93 = arith.constant 0 : index
    %179 = vector.load %arg7[%c1_91, %c0_92, %c0_93] : memref<2x1x64xf32, #tpu.memory_space<vmem>>, vector<1x1x64xf32>
    %180 = vector.shape_cast %179 : vector<1x1x64xf32> to vector<1x64xf32>
    %c1_94 = arith.constant 1 : index
    %c0_95 = arith.constant 0 : index
    %c0_96 = arith.constant 0 : index
    %181 = vector.load %arg9[%c1_94, %c0_95, %c0_96] : memref<2x1x32xf32, #tpu.memory_space<vmem>>, vector<1x1x32xf32>
    %182 = vector.shape_cast %181 : vector<1x1x32xf32> to vector<1x32xf32>
    %c1_97 = arith.constant 1 : index
    %c0_98 = arith.constant 0 : index
    %c0_99 = arith.constant 0 : index
    %183 = vector.load %arg10[%c1_97, %c0_98, %c0_99] : memref<2x1x32xf32, #tpu.memory_space<vmem>>, vector<1x1x32xf32>
    %184 = vector.shape_cast %183 : vector<1x1x32xf32> to vector<1x32xf32>
    %c1_100 = arith.constant 1 : index
    %c0_101 = arith.constant 0 : index
    %c0_102 = arith.constant 0 : index
    %185 = vector.load %arg11[%c1_100, %c0_101, %c0_102] : memref<2x1x32xf32, #tpu.memory_space<vmem>>, vector<1x1x32xf32>
    %186 = vector.shape_cast %185 : vector<1x1x32xf32> to vector<1x32xf32>
    %c1_103 = arith.constant 1 : index
    %c0_104 = arith.constant 0 : index
    %c0_105 = arith.constant 0 : index
    %187 = vector.load %arg12[%c1_103, %c0_104, %c0_105] : memref<2x1x32xf32, #tpu.memory_space<vmem>>, vector<1x1x32xf32>
    %188 = vector.shape_cast %187 : vector<1x1x32xf32> to vector<1x32xf32>
    %c1_106 = arith.constant 1 : index
    %c0_107 = arith.constant 0 : index
    %c0_108 = arith.constant 0 : index
    %189 = vector.load %arg13[%c1_106, %c0_107, %c0_108] : memref<2x1x32xf32, #tpu.memory_space<vmem>>, vector<1x1x32xf32>
    %190 = vector.shape_cast %189 : vector<1x1x32xf32> to vector<1x32xf32>
    %cst_109 = arith.constant dense<0.000000e+00> : vector<16x96xf32>
    %191 = tpu.matmul %166, %168, %cst_109 {dimension_numbers = #tpu.dot_dimension_numbers<[1], [0], [0], [1], [0, 0, 1, 1], [], []>} : vector<16x32xf32>, vector<32x96xf32>, vector<16x96xf32> -> vector<16x96xf32>
    %192 = vector.broadcast %176 : vector<1x96xf32> to vector<16x96xf32>
    %193 = arith.addf %191, %192 : vector<16x96xf32>
    %194 = vector.shape_cast %193 : vector<16x96xf32> to vector<2x8x96xf32>
    %195 = vector.extract_strided_slice %194 {offsets = [0, 0, 0], sizes = [2, 8, 32], strides = [1, 1, 1]} : vector<2x8x96xf32> to vector<2x8x32xf32>
    %196 = vector.extract_strided_slice %194 {offsets = [0, 0, 32], sizes = [2, 8, 32], strides = [1, 1, 1]} : vector<2x8x96xf32> to vector<2x8x32xf32>
    %197 = vector.extract_strided_slice %194 {offsets = [0, 0, 64], sizes = [2, 8, 32], strides = [1, 1, 1]} : vector<2x8x96xf32> to vector<2x8x32xf32>
    %198 = vector.extract_strided_slice %195 {offsets = [0, 0, 0], sizes = [2, 8, 8], strides = [1, 1, 1]} : vector<2x8x32xf32> to vector<2x8x8xf32>
    %199 = vector.extract_strided_slice %196 {offsets = [0, 0, 0], sizes = [2, 8, 8], strides = [1, 1, 1]} : vector<2x8x32xf32> to vector<2x8x8xf32>
    %200 = vector.extract_strided_slice %197 {offsets = [0, 0, 0], sizes = [2, 8, 8], strides = [1, 1, 1]} : vector<2x8x32xf32> to vector<2x8x8xf32>
    "tpu.trace_start"() <{level = 10 : i32, message = "bqd,bkd->bqk"}> : () -> ()
    %cst_110 = arith.constant dense<0.000000e+00> : vector<2x8x8xf32>
    %201 = tpu.matmul %198, %199, %cst_110 {dimension_numbers = #tpu.dot_dimension_numbers<[2], [2], [1], [1], [0, 0, 0, 1, 1, 1], [0], [0]>} : vector<2x8x8xf32>, vector<2x8x8xf32>, vector<2x8x8xf32> -> vector<2x8x8xf32>
    "tpu.trace_stop"() : () -> ()
    %cst_111 = arith.constant 0.353553385 : f32
    %202 = vector.broadcast %cst_111 : f32 to vector<2x8x8xf32>
    %203 = arith.mulf %201, %202 : vector<2x8x8xf32>
    %cst_112 = arith.constant dense<0xFF800000> : vector<2x8xf32>
    %204 = vector.multi_reduction <maximumf>, %203, %cst_112 [2] : vector<2x8x8xf32> to vector<2x8xf32>
    %205 = vector.shape_cast %204 : vector<2x8xf32> to vector<2x8x1xf32>
    %206 = vector.broadcast %205 : vector<2x8x1xf32> to vector<2x8x8xf32>
    %207 = arith.subf %203, %206 : vector<2x8x8xf32>
    %208 = math.exp %207 : vector<2x8x8xf32>
    %cst_113 = arith.constant dense<0.000000e+00> : vector<2x8xf32>
    %209 = vector.multi_reduction <add>, %208, %cst_113 [2] : vector<2x8x8xf32> to vector<2x8xf32>
    %210 = vector.shape_cast %209 : vector<2x8xf32> to vector<2x8x1xf32>
    %211 = tpu.reciprocal %210 {approx = true} : vector<2x8x1xf32> -> vector<2x8x1xf32>
    %212 = vector.broadcast %211 : vector<2x8x1xf32> to vector<2x8x8xf32>
    %213 = arith.mulf %208, %212 : vector<2x8x8xf32>
    "tpu.trace_start"() <{level = 10 : i32, message = "bqk,bkd->bqd"}> : () -> ()
    %cst_114 = arith.constant dense<0.000000e+00> : vector<2x8x8xf32>
    %214 = tpu.matmul %213, %200, %cst_114 {dimension_numbers = #tpu.dot_dimension_numbers<[2], [1], [1], [2], [0, 0, 0, 1, 1, 2], [0], [0]>} : vector<2x8x8xf32>, vector<2x8x8xf32>, vector<2x8x8xf32> -> vector<2x8x8xf32>
    "tpu.trace_stop"() : () -> ()
    %215 = vector.shape_cast %214 : vector<2x8x8xf32> to vector<16x8xf32>
    %216 = vector.extract_strided_slice %170 {offsets = [0, 0], sizes = [8, 32], strides = [1, 1]} : vector<32x32xf32> to vector<8x32xf32>
    %cst_115 = arith.constant dense<0.000000e+00> : vector<16x32xf32>
    %217 = tpu.matmul %215, %216, %cst_115 {dimension_numbers = #tpu.dot_dimension_numbers<[1], [0], [0], [1], [0, 0, 1, 1], [], []>} : vector<16x8xf32>, vector<8x32xf32>, vector<16x32xf32> -> vector<16x32xf32>
    %218 = vector.extract_strided_slice %195 {offsets = [0, 0, 8], sizes = [2, 8, 8], strides = [1, 1, 1]} : vector<2x8x32xf32> to vector<2x8x8xf32>
    %219 = vector.extract_strided_slice %196 {offsets = [0, 0, 8], sizes = [2, 8, 8], strides = [1, 1, 1]} : vector<2x8x32xf32> to vector<2x8x8xf32>
    %220 = vector.extract_strided_slice %197 {offsets = [0, 0, 8], sizes = [2, 8, 8], strides = [1, 1, 1]} : vector<2x8x32xf32> to vector<2x8x8xf32>
    "tpu.trace_start"() <{level = 10 : i32, message = "bqd,bkd->bqk"}> : () -> ()
    %cst_116 = arith.constant dense<0.000000e+00> : vector<2x8x8xf32>
    %221 = tpu.matmul %218, %219, %cst_116 {dimension_numbers = #tpu.dot_dimension_numbers<[2], [2], [1], [1], [0, 0, 0, 1, 1, 1], [0], [0]>} : vector<2x8x8xf32>, vector<2x8x8xf32>, vector<2x8x8xf32> -> vector<2x8x8xf32>
    "tpu.trace_stop"() : () -> ()
    %cst_117 = arith.constant 0.353553385 : f32
    %222 = vector.broadcast %cst_117 : f32 to vector<2x8x8xf32>
    %223 = arith.mulf %221, %222 : vector<2x8x8xf32>
    %cst_118 = arith.constant dense<0xFF800000> : vector<2x8xf32>
    %224 = vector.multi_reduction <maximumf>, %223, %cst_118 [2] : vector<2x8x8xf32> to vector<2x8xf32>
    %225 = vector.shape_cast %224 : vector<2x8xf32> to vector<2x8x1xf32>
    %226 = vector.broadcast %225 : vector<2x8x1xf32> to vector<2x8x8xf32>
    %227 = arith.subf %223, %226 : vector<2x8x8xf32>
    %228 = math.exp %227 : vector<2x8x8xf32>
    %cst_119 = arith.constant dense<0.000000e+00> : vector<2x8xf32>
    %229 = vector.multi_reduction <add>, %228, %cst_119 [2] : vector<2x8x8xf32> to vector<2x8xf32>
    %230 = vector.shape_cast %229 : vector<2x8xf32> to vector<2x8x1xf32>
    %231 = tpu.reciprocal %230 {approx = true} : vector<2x8x1xf32> -> vector<2x8x1xf32>
    %232 = vector.broadcast %231 : vector<2x8x1xf32> to vector<2x8x8xf32>
    %233 = arith.mulf %228, %232 : vector<2x8x8xf32>
    "tpu.trace_start"() <{level = 10 : i32, message = "bqk,bkd->bqd"}> : () -> ()
    %cst_120 = arith.constant dense<0.000000e+00> : vector<2x8x8xf32>
    %234 = tpu.matmul %233, %220, %cst_120 {dimension_numbers = #tpu.dot_dimension_numbers<[2], [1], [1], [2], [0, 0, 0, 1, 1, 2], [0], [0]>} : vector<2x8x8xf32>, vector<2x8x8xf32>, vector<2x8x8xf32> -> vector<2x8x8xf32>
    "tpu.trace_stop"() : () -> ()
    %235 = vector.shape_cast %234 : vector<2x8x8xf32> to vector<16x8xf32>
    %236 = vector.extract_strided_slice %170 {offsets = [8, 0], sizes = [8, 32], strides = [1, 1]} : vector<32x32xf32> to vector<8x32xf32>
    %cst_121 = arith.constant dense<0.000000e+00> : vector<16x32xf32>
    %237 = tpu.matmul %235, %236, %cst_121 {dimension_numbers = #tpu.dot_dimension_numbers<[1], [0], [0], [1], [0, 0, 1, 1], [], []>} : vector<16x8xf32>, vector<8x32xf32>, vector<16x32xf32> -> vector<16x32xf32>
    %238 = arith.addf %217, %237 : vector<16x32xf32>
    %239 = vector.extract_strided_slice %195 {offsets = [0, 0, 16], sizes = [2, 8, 8], strides = [1, 1, 1]} : vector<2x8x32xf32> to vector<2x8x8xf32>
    %240 = vector.extract_strided_slice %196 {offsets = [0, 0, 16], sizes = [2, 8, 8], strides = [1, 1, 1]} : vector<2x8x32xf32> to vector<2x8x8xf32>
    %241 = vector.extract_strided_slice %197 {offsets = [0, 0, 16], sizes = [2, 8, 8], strides = [1, 1, 1]} : vector<2x8x32xf32> to vector<2x8x8xf32>
    "tpu.trace_start"() <{level = 10 : i32, message = "bqd,bkd->bqk"}> : () -> ()
    %cst_122 = arith.constant dense<0.000000e+00> : vector<2x8x8xf32>
    %242 = tpu.matmul %239, %240, %cst_122 {dimension_numbers = #tpu.dot_dimension_numbers<[2], [2], [1], [1], [0, 0, 0, 1, 1, 1], [0], [0]>} : vector<2x8x8xf32>, vector<2x8x8xf32>, vector<2x8x8xf32> -> vector<2x8x8xf32>
    "tpu.trace_stop"() : () -> ()
    %cst_123 = arith.constant 0.353553385 : f32
    %243 = vector.broadcast %cst_123 : f32 to vector<2x8x8xf32>
    %244 = arith.mulf %242, %243 : vector<2x8x8xf32>
    %cst_124 = arith.constant dense<0xFF800000> : vector<2x8xf32>
    %245 = vector.multi_reduction <maximumf>, %244, %cst_124 [2] : vector<2x8x8xf32> to vector<2x8xf32>
    %246 = vector.shape_cast %245 : vector<2x8xf32> to vector<2x8x1xf32>
    %247 = vector.broadcast %246 : vector<2x8x1xf32> to vector<2x8x8xf32>
    %248 = arith.subf %244, %247 : vector<2x8x8xf32>
    %249 = math.exp %248 : vector<2x8x8xf32>
    %cst_125 = arith.constant dense<0.000000e+00> : vector<2x8xf32>
    %250 = vector.multi_reduction <add>, %249, %cst_125 [2] : vector<2x8x8xf32> to vector<2x8xf32>
    %251 = vector.shape_cast %250 : vector<2x8xf32> to vector<2x8x1xf32>
    %252 = tpu.reciprocal %251 {approx = true} : vector<2x8x1xf32> -> vector<2x8x1xf32>
    %253 = vector.broadcast %252 : vector<2x8x1xf32> to vector<2x8x8xf32>
    %254 = arith.mulf %249, %253 : vector<2x8x8xf32>
    "tpu.trace_start"() <{level = 10 : i32, message = "bqk,bkd->bqd"}> : () -> ()
    %cst_126 = arith.constant dense<0.000000e+00> : vector<2x8x8xf32>
    %255 = tpu.matmul %254, %241, %cst_126 {dimension_numbers = #tpu.dot_dimension_numbers<[2], [1], [1], [2], [0, 0, 0, 1, 1, 2], [0], [0]>} : vector<2x8x8xf32>, vector<2x8x8xf32>, vector<2x8x8xf32> -> vector<2x8x8xf32>
    "tpu.trace_stop"() : () -> ()
    %256 = vector.shape_cast %255 : vector<2x8x8xf32> to vector<16x8xf32>
    %257 = vector.extract_strided_slice %170 {offsets = [16, 0], sizes = [8, 32], strides = [1, 1]} : vector<32x32xf32> to vector<8x32xf32>
    %cst_127 = arith.constant dense<0.000000e+00> : vector<16x32xf32>
    %258 = tpu.matmul %256, %257, %cst_127 {dimension_numbers = #tpu.dot_dimension_numbers<[1], [0], [0], [1], [0, 0, 1, 1], [], []>} : vector<16x8xf32>, vector<8x32xf32>, vector<16x32xf32> -> vector<16x32xf32>
    %259 = arith.addf %238, %258 : vector<16x32xf32>
    %260 = vector.extract_strided_slice %195 {offsets = [0, 0, 24], sizes = [2, 8, 8], strides = [1, 1, 1]} : vector<2x8x32xf32> to vector<2x8x8xf32>
    %261 = vector.extract_strided_slice %196 {offsets = [0, 0, 24], sizes = [2, 8, 8], strides = [1, 1, 1]} : vector<2x8x32xf32> to vector<2x8x8xf32>
    %262 = vector.extract_strided_slice %197 {offsets = [0, 0, 24], sizes = [2, 8, 8], strides = [1, 1, 1]} : vector<2x8x32xf32> to vector<2x8x8xf32>
    "tpu.trace_start"() <{level = 10 : i32, message = "bqd,bkd->bqk"}> : () -> ()
    %cst_128 = arith.constant dense<0.000000e+00> : vector<2x8x8xf32>
    %263 = tpu.matmul %260, %261, %cst_128 {dimension_numbers = #tpu.dot_dimension_numbers<[2], [2], [1], [1], [0, 0, 0, 1, 1, 1], [0], [0]>} : vector<2x8x8xf32>, vector<2x8x8xf32>, vector<2x8x8xf32> -> vector<2x8x8xf32>
    "tpu.trace_stop"() : () -> ()
    %cst_129 = arith.constant 0.353553385 : f32
    %264 = vector.broadcast %cst_129 : f32 to vector<2x8x8xf32>
    %265 = arith.mulf %263, %264 : vector<2x8x8xf32>
    %cst_130 = arith.constant dense<0xFF800000> : vector<2x8xf32>
    %266 = vector.multi_reduction <maximumf>, %265, %cst_130 [2] : vector<2x8x8xf32> to vector<2x8xf32>
    %267 = vector.shape_cast %266 : vector<2x8xf32> to vector<2x8x1xf32>
    %268 = vector.broadcast %267 : vector<2x8x1xf32> to vector<2x8x8xf32>
    %269 = arith.subf %265, %268 : vector<2x8x8xf32>
    %270 = math.exp %269 : vector<2x8x8xf32>
    %cst_131 = arith.constant dense<0.000000e+00> : vector<2x8xf32>
    %271 = vector.multi_reduction <add>, %270, %cst_131 [2] : vector<2x8x8xf32> to vector<2x8xf32>
    %272 = vector.shape_cast %271 : vector<2x8xf32> to vector<2x8x1xf32>
    %273 = tpu.reciprocal %272 {approx = true} : vector<2x8x1xf32> -> vector<2x8x1xf32>
    %274 = vector.broadcast %273 : vector<2x8x1xf32> to vector<2x8x8xf32>
    %275 = arith.mulf %270, %274 : vector<2x8x8xf32>
    "tpu.trace_start"() <{level = 10 : i32, message = "bqk,bkd->bqd"}> : () -> ()
    %cst_132 = arith.constant dense<0.000000e+00> : vector<2x8x8xf32>
    %276 = tpu.matmul %275, %262, %cst_132 {dimension_numbers = #tpu.dot_dimension_numbers<[2], [1], [1], [2], [0, 0, 0, 1, 1, 2], [0], [0]>} : vector<2x8x8xf32>, vector<2x8x8xf32>, vector<2x8x8xf32> -> vector<2x8x8xf32>
    "tpu.trace_stop"() : () -> ()
    %277 = vector.shape_cast %276 : vector<2x8x8xf32> to vector<16x8xf32>
    %278 = vector.extract_strided_slice %170 {offsets = [24, 0], sizes = [8, 32], strides = [1, 1]} : vector<32x32xf32> to vector<8x32xf32>
    %cst_133 = arith.constant dense<0.000000e+00> : vector<16x32xf32>
    %279 = tpu.matmul %277, %278, %cst_133 {dimension_numbers = #tpu.dot_dimension_numbers<[1], [0], [0], [1], [0, 0, 1, 1], [], []>} : vector<16x8xf32>, vector<8x32xf32>, vector<16x32xf32> -> vector<16x32xf32>
    %280 = arith.addf %259, %279 : vector<16x32xf32>
    %281 = vector.broadcast %178 : vector<1x32xf32> to vector<16x32xf32>
    %282 = arith.addf %280, %281 : vector<16x32xf32>
    %283 = arith.addf %166, %282 : vector<16x32xf32>
    %cst_134 = arith.constant dense<0.000000e+00> : vector<16xf32>
    %284 = vector.multi_reduction <add>, %283, %cst_134 [1] : vector<16x32xf32> to vector<16xf32>
    %285 = vector.shape_cast %284 : vector<16xf32> to vector<16x1xf32>
    %cst_135 = arith.constant 3.200000e+01 : f32
    %286 = vector.broadcast %cst_135 : f32 to vector<16x1xf32>
    %287 = arith.divf %285, %286 : vector<16x1xf32>
    %288 = vector.broadcast %287 : vector<16x1xf32> to vector<16x32xf32>
    %289 = arith.subf %283, %288 : vector<16x32xf32>
    %290 = arith.mulf %289, %289 : vector<16x32xf32>
    %cst_136 = arith.constant dense<0.000000e+00> : vector<16xf32>
    %291 = vector.multi_reduction <add>, %290, %cst_136 [1] : vector<16x32xf32> to vector<16xf32>
    %292 = vector.shape_cast %291 : vector<16xf32> to vector<16x1xf32>
    %cst_137 = arith.constant 3.200000e+01 : f32
    %293 = vector.broadcast %cst_137 : f32 to vector<16x1xf32>
    %294 = arith.divf %292, %293 : vector<16x1xf32>
    %cst_138 = arith.constant 9.99999974E-6 : f32
    %295 = vector.broadcast %cst_138 : f32 to vector<16x1xf32>
    %296 = arith.addf %294, %295 : vector<16x1xf32>
    %297 = math.rsqrt %296 : vector<16x1xf32>
    %298 = vector.broadcast %297 : vector<16x1xf32> to vector<16x32xf32>
    %299 = arith.mulf %289, %298 : vector<16x32xf32>
    %300 = vector.broadcast %184 : vector<1x32xf32> to vector<16x32xf32>
    %301 = arith.mulf %299, %300 : vector<16x32xf32>
    %302 = vector.broadcast %186 : vector<1x32xf32> to vector<16x32xf32>
    %303 = arith.addf %301, %302 : vector<16x32xf32>
    %cst_139 = arith.constant dense<0.000000e+00> : vector<16x64xf32>
    %304 = tpu.matmul %303, %172, %cst_139 {dimension_numbers = #tpu.dot_dimension_numbers<[1], [0], [0], [1], [0, 0, 1, 1], [], []>} : vector<16x32xf32>, vector<32x64xf32>, vector<16x64xf32> -> vector<16x64xf32>
    %305 = vector.broadcast %180 : vector<1x64xf32> to vector<16x64xf32>
    %306 = arith.addf %304, %305 : vector<16x64xf32>
    %cst_140 = arith.constant 0.000000e+00 : f32
    %307 = vector.broadcast %cst_140 : f32 to vector<16x64xf32>
    %308 = arith.maximumf %306, %307 : vector<16x64xf32>
    %cst_141 = arith.constant dense<0.000000e+00> : vector<16x32xf32>
    %309 = tpu.matmul %308, %174, %cst_141 {dimension_numbers = #tpu.dot_dimension_numbers<[1], [0], [0], [1], [0, 0, 1, 1], [], []>} : vector<16x64xf32>, vector<64x32xf32>, vector<16x32xf32> -> vector<16x32xf32>
    %310 = vector.broadcast %182 : vector<1x32xf32> to vector<16x32xf32>
    %311 = arith.addf %309, %310 : vector<16x32xf32>
    %312 = arith.addf %303, %311 : vector<16x32xf32>
    %cst_142 = arith.constant dense<0.000000e+00> : vector<16xf32>
    %313 = vector.multi_reduction <add>, %312, %cst_142 [1] : vector<16x32xf32> to vector<16xf32>
    %314 = vector.shape_cast %313 : vector<16xf32> to vector<16x1xf32>
    %cst_143 = arith.constant 3.200000e+01 : f32
    %315 = vector.broadcast %cst_143 : f32 to vector<16x1xf32>
    %316 = arith.divf %314, %315 : vector<16x1xf32>
    %317 = vector.broadcast %316 : vector<16x1xf32> to vector<16x32xf32>
    %318 = arith.subf %312, %317 : vector<16x32xf32>
    %319 = arith.mulf %318, %318 : vector<16x32xf32>
    %cst_144 = arith.constant dense<0.000000e+00> : vector<16xf32>
    %320 = vector.multi_reduction <add>, %319, %cst_144 [1] : vector<16x32xf32> to vector<16xf32>
    %321 = vector.shape_cast %320 : vector<16xf32> to vector<16x1xf32>
    %cst_145 = arith.constant 3.200000e+01 : f32
    %322 = vector.broadcast %cst_145 : f32 to vector<16x1xf32>
    %323 = arith.divf %321, %322 : vector<16x1xf32>
    %cst_146 = arith.constant 9.99999974E-6 : f32
    %324 = vector.broadcast %cst_146 : f32 to vector<16x1xf32>
    %325 = arith.addf %323, %324 : vector<16x1xf32>
    %326 = math.rsqrt %325 : vector<16x1xf32>
    %327 = vector.broadcast %326 : vector<16x1xf32> to vector<16x32xf32>
    %328 = arith.mulf %318, %327 : vector<16x32xf32>
    %329 = vector.broadcast %188 : vector<1x32xf32> to vector<16x32xf32>
    %330 = arith.mulf %328, %329 : vector<16x32xf32>
    %331 = vector.broadcast %190 : vector<1x32xf32> to vector<16x32xf32>
    %332 = arith.addf %330, %331 : vector<16x32xf32>
    %c0_147 = arith.constant 0 : index
    %c0_148 = arith.constant 0 : index
    %333 = vector.load %arg14[%c0_147, %c0_148] : memref<1x32xf32, #tpu.memory_space<vmem>>, vector<1x32xf32>
    %c0_149 = arith.constant 0 : index
    %c0_150 = arith.constant 0 : index
    %334 = vector.load %arg15[%c0_149, %c0_150] : memref<1x32xf32, #tpu.memory_space<vmem>>, vector<1x32xf32>
    %cst_151 = arith.constant dense<0.000000e+00> : vector<16xf32>
    %335 = vector.multi_reduction <add>, %332, %cst_151 [1] : vector<16x32xf32> to vector<16xf32>
    %336 = vector.shape_cast %335 : vector<16xf32> to vector<16x1xf32>
    %cst_152 = arith.constant 3.200000e+01 : f32
    %337 = vector.broadcast %cst_152 : f32 to vector<16x1xf32>
    %338 = arith.divf %336, %337 : vector<16x1xf32>
    %339 = vector.broadcast %338 : vector<16x1xf32> to vector<16x32xf32>
    %340 = arith.subf %332, %339 : vector<16x32xf32>
    %341 = arith.mulf %340, %340 : vector<16x32xf32>
    %cst_153 = arith.constant dense<0.000000e+00> : vector<16xf32>
    %342 = vector.multi_reduction <add>, %341, %cst_153 [1] : vector<16x32xf32> to vector<16xf32>
    %343 = vector.shape_cast %342 : vector<16xf32> to vector<16x1xf32>
    %cst_154 = arith.constant 3.200000e+01 : f32
    %344 = vector.broadcast %cst_154 : f32 to vector<16x1xf32>
    %345 = arith.divf %343, %344 : vector<16x1xf32>
    %cst_155 = arith.constant 9.99999974E-6 : f32
    %346 = vector.broadcast %cst_155 : f32 to vector<16x1xf32>
    %347 = arith.addf %345, %346 : vector<16x1xf32>
    %348 = math.rsqrt %347 : vector<16x1xf32>
    %349 = vector.broadcast %348 : vector<16x1xf32> to vector<16x32xf32>
    %350 = arith.mulf %340, %349 : vector<16x32xf32>
    %351 = vector.broadcast %333 : vector<1x32xf32> to vector<16x32xf32>
    %352 = arith.mulf %350, %351 : vector<16x32xf32>
    %353 = vector.broadcast %334 : vector<1x32xf32> to vector<16x32xf32>
    %354 = arith.addf %352, %353 : vector<16x32xf32>
    %c0_156 = arith.constant 0 : index
    %c0_157 = arith.constant 0 : index
    %355 = vector.load %arg16[%c0_156, %c0_157] : memref<16x32xf32, #tpu.memory_space<vmem>>, vector<16x32xf32>
    tpu.vector_store %arg16[%c0_156, %c0_157], %354 {strides = array<i32>} : memref<16x32xf32, #tpu.memory_space<vmem>>, vector<16x32xf32>,
    return
  }
  func.func @transform_0(%arg0: i32) -> (i32, i32) {
    %c0_i32 = arith.constant 0 : i32
    %c0_i32_0 = arith.constant 0 : i32
    %c0_i32_1 = arith.constant 0 : i32
    return %c0_i32, %c0_i32_0 : i32, i32
  }
  func.func @transform_1(%arg0: i32) -> (i32, i32, i32) {
    %c0_i32 = arith.constant 0 : i32
    %c0_i32_0 = arith.constant 0 : i32
    %c0_i32_1 = arith.constant 0 : i32
    %c0_i32_2 = arith.constant 0 : i32
    return %c0_i32, %c0_i32_0, %c0_i32_1 : i32, i32, i32
  }
  func.func @transform_2(%arg0: i32) -> (i32, i32, i32) {
    %c0_i32 = arith.constant 0 : i32
    %c0_i32_0 = arith.constant 0 : i32
    %c0_i32_1 = arith.constant 0 : i32
    %c0_i32_2 = arith.constant 0 : i32
    return %c0_i32, %c0_i32_0, %c0_i32_1 : i32, i32, i32
  }
  func.func @transform_3(%arg0: i32) -> (i32, i32, i32) {
    %c0_i32 = arith.constant 0 : i32
    %c0_i32_0 = arith.constant 0 : i32
    %c0_i32_1 = arith.constant 0 : i32
    %c0_i32_2 = arith.constant 0 : i32
    return %c0_i32, %c0_i32_0, %c0_i32_1 : i32, i32, i32
  }
  func.func @transform_4(%arg0: i32) -> (i32, i32, i32) {
    %c0_i32 = arith.constant 0 : i32
    %c0_i32_0 = arith.constant 0 : i32
    %c0_i32_1 = arith.constant 0 : i32
    %c0_i32_2 = arith.constant 0 : i32
    return %c0_i32, %c0_i32_0, %c0_i32_1 : i32, i32, i32
  }
  func.func @transform_5(%arg0: i32) -> (i32, i32, i32) {
    %c0_i32 = arith.constant 0 : i32
    %c0_i32_0 = arith.constant 0 : i32
    %c0_i32_1 = arith.constant 0 : i32
    %c0_i32_2 = arith.constant 0 : i32
    return %c0_i32, %c0_i32_0, %c0_i32_1 : i32, i32, i32
  }
  func.func @transform_6(%arg0: i32) -> (i32, i32, i32) {
    %c0_i32 = arith.constant 0 : i32
    %c0_i32_0 = arith.constant 0 : i32
    %c0_i32_1 = arith.constant 0 : i32
    %c0_i32_2 = arith.constant 0 : i32
    return %c0_i32, %c0_i32_0, %c0_i32_1 : i32, i32, i32
  }
  func.func @transform_7(%arg0: i32) -> (i32, i32, i32) {
    %c0_i32 = arith.constant 0 : i32
    %c0_i32_0 = arith.constant 0 : i32
    %c0_i32_1 = arith.constant 0 : i32
    %c0_i32_2 = arith.constant 0 : i32
    return %c0_i32, %c0_i32_0, %c0_i32_1 : i32, i32, i32
  }
  func.func @transform_8(%arg0: i32) -> (i32, i32, i32) {
    %c0_i32 = arith.constant 0 : i32
    %c0_i32_0 = arith.constant 0 : i32
    %c0_i32_1 = arith.constant 0 : i32
    %c0_i32_2 = arith.constant 0 : i32
    return %c0_i32, %c0_i32_0, %c0_i32_1 : i32, i32, i32
  }
  func.func @transform_9(%arg0: i32) -> (i32, i32, i32) {
    %c0_i32 = arith.constant 0 : i32
    %c0_i32_0 = arith.constant 0 : i32
    %c0_i32_1 = arith.constant 0 : i32
    %c0_i32_2 = arith.constant 0 : i32
    return %c0_i32, %c0_i32_0, %c0_i32_1 : i32, i32, i32
  }
  func.func @transform_10(%arg0: i32) -> (i32, i32, i32) {
    %c0_i32 = arith.constant 0 : i32
    %c0_i32_0 = arith.constant 0 : i32
    %c0_i32_1 = arith.constant 0 : i32
    %c0_i32_2 = arith.constant 0 : i32
    return %c0_i32, %c0_i32_0, %c0_i32_1 : i32, i32, i32
  }
  func.func @transform_11(%arg0: i32) -> (i32, i32, i32) {
    %c0_i32 = arith.constant 0 : i32
    %c0_i32_0 = arith.constant 0 : i32
    %c0_i32_1 = arith.constant 0 : i32
    %c0_i32_2 = arith.constant 0 : i32
    return %c0_i32, %c0_i32_0, %c0_i32_1 : i32, i32, i32
  }
  func.func @transform_12(%arg0: i32) -> (i32, i32, i32) {
    %c0_i32 = arith.constant 0 : i32
    %c0_i32_0 = arith.constant 0 : i32
    %c0_i32_1 = arith.constant 0 : i32
    %c0_i32_2 = arith.constant 0 : i32
    return %c0_i32, %c0_i32_0, %c0_i32_1 : i32, i32, i32
  }
  func.func @transform_13(%arg0: i32) -> (i32, i32) {
    %c0_i32 = arith.constant 0 : i32
    %c0_i32_0 = arith.constant 0 : i32
    %c0_i32_1 = arith.constant 0 : i32
    return %c0_i32, %c0_i32_0 : i32, i32
  }
  func.func @transform_14(%arg0: i32) -> (i32, i32) {
    %c0_i32 = arith.constant 0 : i32
    %c0_i32_0 = arith.constant 0 : i32
    %c0_i32_1 = arith.constant 0 : i32
    return %c0_i32, %c0_i32_0 : i32, i32
  }
  func.func @transform_15(%arg0: i32) -> (i32, i32) {
    %c0_i32 = arith.constant 0 : i32
    %c0_i32_0 = arith.constant 0 : i32
    %c0_i32_1 = arith.constant 0 : i32
    return %c0_i32, %c0_i32_0 : i32, i32
  }
}

</mosaic_0001>

<llo_original>
// kernel: bran_encoder_forward.1
$region0: #{bran_encoder_forward.1}
  #allocation0 [shape = 'u32[]', space=smem, size = 0x4, offset = 0x4, fixed_abs, tag = 'smem constant byte address 0x4 - core index']
  #allocation1 [shape = 'u32[144,128]{1,0:T(1,128)}', space=vmem, size = 0x12000, scoped, tag = 'internal scratch']
  %s0 = inlined_call_operand.hbm [shape: f32[16,32], index: 0, kind: input, shape index: {}]
  %s1 = inlined_call_operand.vmem [shape: f32[2,32,96], index: 1, kind: input, shape index: {}]
  %s2 = inlined_call_operand.vmem [shape: f32[2,1,96], index: 2, kind: input, shape index: {}]
  %s3 = inlined_call_operand.vmem [shape: f32[2,32,32], index: 3, kind: input, shape index: {}]
  %s4 = inlined_call_operand.vmem [shape: f32[2,1,32], index: 4, kind: input, shape index: {}]
  %s5 = inlined_call_operand.vmem [shape: f32[2,32,64], index: 5, kind: input, shape index: {}]
  %s6 = inlined_call_operand.vmem [shape: f32[2,1,64], index: 6, kind: input, shape index: {}]
  %s7 = inlined_call_operand.vmem [shape: f32[2,64,32], index: 7, kind: input, shape index: {}]
  %s8 = inlined_call_operand.vmem [shape: f32[2,1,32], index: 8, kind: input, shape index: {}]
  %s9 = inlined_call_operand.vmem [shape: f32[2,1,32], index: 9, kind: input, shape index: {}]
  %s10 = inlined_call_operand.vmem [shape: f32[2,1,32], index: 10, kind: input, shape index: {}]
  %s11 = inlined_call_operand.vmem [shape: f32[2,1,32], index: 11, kind: input, shape index: {}]
  %s12 = inlined_call_operand.vmem [shape: f32[2,1,32], index: 12, kind: input, shape index: {}]
  %s13 = inlined_call_operand.vmem [shape: f32[1,32], index: 13, kind: input, shape index: {}]
  %s14 = inlined_call_operand.vmem [shape: f32[1,32], index: 14, kind: input, shape index: {}]
  %s15 = inlined_call_operand.hbm [shape: f32[16,32], index: 15, kind: output, shape index: {}]
  %s16 = sld [smem:[#allocation0]]
  $region74: #{bran_encoder_forward.1} parent=0
    _
  %s18 = ssub.s32 1, %s16
  %s19 = scalar_select 0, %s18, %s16
  $region1: #{bran_encoder_forward.1} parent=0
    #allocation2 [shape = 'u8[8192]{0}', space=vmem, size = 0x2000, scoped, tag = 'input window, operand 0, single buffered']
    #allocation3 [shape = 's32[1]{0}', space=sflag, size = 0x4, scoped, tag = 'scoped memory for bran_encoder_forward.1']
    #allocation4 [shape = 's32[1]{0}', space=sflag, size = 0x4, scoped, tag = 'scoped memory for bran_encoder_forward.1']
    #allocation5 [shape = 'u8[8192]{0}', space=vmem, size = 0x2000, scoped, tag = 'output window, operand 0, single buffered']
    %20 = vsyncpa [#allocation3], 0
    %21 = vsyncpa [#allocation4], 0
    // Predicated region
    $region2: #{bran_encoder_forward.1} parent=1 // pred_check
      _
    $region3: #{bran_encoder_forward.1} parent=1 // pred_check_branch
      %23 = sbr.rel (0) target = $region5
    $region4: #{bran_encoder_forward.1} parent=1 // pred_region
      %s25 = ssub.s32 256, 256
      %26 = vsyncadd [#allocation3], %s25
      %s27 = sshll.u32 [#allocation2], 4
      %s28 = int_to_ptr.vmem [resolvable:$true] %s27
      %33 = dma.hbm_to_vmem [thread:$0]  %s0, 256, %s28, [#allocation3], 128, 128, 8
    $region5: #{bran_encoder_forward.1} parent=1 // pred_fallthru
      _
    // Predicated region
    $region6: #{bran_encoder_forward.1} parent=1 // pred_check
      _
    $region7: #{bran_encoder_forward.1} parent=1 // pred_check_branch
      %35 = sbr.rel (0) target = $region9
    $region8: #{bran_encoder_forward.1} parent=1 // pred_region
      _
    $region9: #{bran_encoder_forward.1} parent=1 // pred_fallthru
      _
    // Predicated region
    $region10: #{bran_encoder_forward.1} parent=1 // pred_check
      _
    $region11: #{bran_encoder_forward.1} parent=1 // pred_check_branch
      %37 = sbr.rel (0) target = $region13
    $region12: #{bran_encoder_forward.1} parent=1 // pred_region
      _
    $region13: #{bran_encoder_forward.1} parent=1 // pred_fallthru
      _
    // Predicated region
    $region14: #{bran_encoder_forward.1} parent=1 // pred_check
      _
    $region15: #{bran_encoder_forward.1} parent=1 // pred_check_branch
      %39 = sbr.rel (0) target = $region17
    $region16: #{bran_encoder_forward.1} parent=1 // pred_region
      _
    $region17: #{bran_encoder_forward.1} parent=1 // pred_fallthru
      _
    // Predicated region
    $region18: #{bran_encoder_forward.1} parent=1 // pred_check
      _
    $region19: #{bran_encoder_forward.1} parent=1 // pred_check_branch
      %41 = sbr.rel (0) target = $region21
    $region20: #{bran_encoder_forward.1} parent=1 // pred_region
      _
    $region21: #{bran_encoder_forward.1} parent=1 // pred_fallthru
      _
    // Predicated region
    $region22: #{bran_encoder_forward.1} parent=1 // pred_check
      _
    $region23: #{bran_encoder_forward.1} parent=1 // pred_check_branch
      %43 = sbr.rel (0) target = $region25
    $region24: #{bran_encoder_forward.1} parent=1 // pred_region
      _
    $region25: #{bran_encoder_forward.1} parent=1 // pred_fallthru
      _
    // Predicated region
    $region26: #{bran_encoder_forward.1} parent=1 // pred_check
      _
    $region27: #{bran_encoder_forward.1} parent=1 // pred_check_branch
      %45 = sbr.rel (0) target = $region29
    $region28: #{bran_encoder_forward.1} parent=1 // pred_region
      _
    $region29: #{bran_encoder_forward.1} parent=1 // pred_fallthru
      _
    // Predicated region
    $region30: #{bran_encoder_forward.1} parent=1 // pred_check
      _
    $region31: #{bran_encoder_forward.1} parent=1 // pred_check_branch
      %47 = sbr.rel (0) target = $region33
    $region32: #{bran_encoder_forward.1} parent=1 // pred_region
      _
    $region33: #{bran_encoder_forward.1} parent=1 // pred_fallthru
      _
    // Predicated region
    $region34: #{bran_encoder_forward.1} parent=1 // pred_check
      _
    $region35: #{bran_encoder_forward.1} parent=1 // pred_check_branch
      %49 = sbr.rel (0) target = $region37
    $region36: #{bran_encoder_forward.1} parent=1 // pred_region
      _
    $region37: #{bran_encoder_forward.1} parent=1 // pred_fallthru
      _
    // Predicated region
    $region38: #{bran_encoder_forward.1} parent=1 // pred_check
      _
    $region39: #{bran_encoder_forward.1} parent=1 // pred_check_branch
      %51 = sbr.rel (0) target = $region41
    $region40: #{bran_encoder_forward.1} parent=1 // pred_region
      _
    $region41: #{bran_encoder_forward.1} parent=1 // pred_fallthru
      _
    // Predicated region
    $region42: #{bran_encoder_forward.1} parent=1 // pred_check
      _
    $region43: #{bran_encoder_forward.1} parent=1 // pred_check_branch
      %53 = sbr.rel (0) target = $region45
    $region44: #{bran_encoder_forward.1} parent=1 // pred_region
      _
    $region45: #{bran_encoder_forward.1} parent=1 // pred_fallthru
      _
    // Predicated region
    $region46: #{bran_encoder_forward.1} parent=1 // pred_check
      _
    $region47: #{bran_encoder_forward.1} parent=1 // pred_check_branch
      %55 = sbr.rel (0) target = $region49
    $region48: #{bran_encoder_forward.1} parent=1 // pred_region
      _
    $region49: #{bran_encoder_forward.1} parent=1 // pred_fallthru
      _
    // Predicated region
    $region50: #{bran_encoder_forward.1} parent=1 // pred_check
      _
    $region51: #{bran_encoder_forward.1} parent=1 // pred_check_branch
      %57 = sbr.rel (0) target = $region53
    $region52: #{bran_encoder_forward.1} parent=1 // pred_region
      _
    $region53: #{bran_encoder_forward.1} parent=1 // pred_fallthru
      _
    // Predicated region
    $region54: #{bran_encoder_forward.1} parent=1 // pred_check
      _
    $region55: #{bran_encoder_forward.1} parent=1 // pred_check_branch
      %59 = sbr.rel (0) target = $region57
    $region56: #{bran_encoder_forward.1} parent=1 // pred_region
      _
    $region57: #{bran_encoder_forward.1} parent=1 // pred_fallthru
      _
    // Predicated region
    $region58: #{bran_encoder_forward.1} parent=1 // pred_check
      _
    $region59: #{bran_encoder_forward.1} parent=1 // pred_check_branch
      %61 = sbr.rel (0) target = $region61
    $region60: #{bran_encoder_forward.1} parent=1 // pred_region
      _
    $region61: #{bran_encoder_forward.1} parent=1 // pred_fallthru
      _
    // Predicated region
    $region62: #{bran_encoder_forward.1} parent=1 // pred_check
      _
    $region63: #{bran_encoder_forward.1} parent=1 // pred_check_branch
      %63 = sbr.rel (0) target = $region65
    $region64: #{bran_encoder_forward.1} parent=1 // pred_region
      %64 = dma.done [#allocation3], 256
    $region65: #{bran_encoder_forward.1} parent=1 // pred_fallthru
      _
    %v65 = vld [vmem:[#allocation2] sm:$0xff]
    %v66 = vld [vmem:[#allocation2 + $0x8] sm:$0xff]
    %v67 = vld [vmem:[%s1] sm:$0xff]
    %v68 = vld [vmem:[%s1 + $0x8] sm:$0xff]
    %v69 = vld [vmem:[%s1 + $0x10] sm:$0xff]
    %v70 = vld [vmem:[%s1 + $0x18] sm:$0xff]
    %v71 = vld [vmem:[%s3] sm:$0xff]
    %v72 = vld [vmem:[%s3 + $0x8] sm:$0xff]
    %v73 = vld [vmem:[%s3 + $0x10] sm:$0xff]
    %v74 = vld [vmem:[%s3 + $0x18] sm:$0xff]
    %v75 = vld [vmem:[%s5] sm:$0xff]
    %v76 = vld [vmem:[%s5 + $0x8] sm:$0xff]
    %v77 = vld [vmem:[%s5 + $0x10] sm:$0xff]
    %v78 = vld [vmem:[%s5 + $0x18] sm:$0xff]
    %v79 = vld [vmem:[%s7] sm:$0xff]
    %v80 = vld [vmem:[%s7 + $0x8] sm:$0xff]
    %v81 = vld [vmem:[%s7 + $0x10] sm:$0xff]
    %v82 = vld [vmem:[%s7 + $0x18] sm:$0xff]
    %v83 = vld [vmem:[%s7 + $0x20] sm:$0xff]
    %v84 = vld [vmem:[%s7 + $0x28] sm:$0xff]
    %v85 = vld [vmem:[%s7 + $0x30] sm:$0xff]
    %v86 = vld [vmem:[%s7 + $0x38] sm:$0xff]
    %v87 = vld [vmem:[%s2] sm:$0x1]
    %v88 = vld [vmem:[%s4] sm:$0x1]
    %v89 = vld [vmem:[%s6] sm:$0x1]
    %v90 = vld [vmem:[%s8] sm:$0x1]
    %v91 = vld [vmem:[%s9] sm:$0x1]
    %v92 = vld [vmem:[%s10] sm:$0x1]
    %v93 = vld [vmem:[%s11] sm:$0x1]
    %v94 = vld [vmem:[%s12] sm:$0x1]
    %v96 = vlaneseq
    %v97 = vshrl.u32 %v96, 7
    %v98 = vsub.s32 0, %v97
    %v99 = vrot.slane %v87, %v98
    %vm101 = vcmask 261120
    %v103 = vsel %vm101, %v65, 0
    %v106 = vsel %vm101, %v66, 0
    %108 = vmatprep.subr.mxu0 0.0
    %109 = vmatpush1.msra.mxu0 %v67
    %110 = vmatprep.subr.mxu0 0.0
    %111 = vmatpush1.msra.mxu0 %v68
    %112 = vmatprep.subr.mxu0 0.0
    %113 = vmatpush1.msra.mxu0 %v69
    %114 = vmatprep.subr.mxu0 0.0
    %115 = vmatpush1.msra.mxu0 %v70
    %116 = vmatprep.subr.mxu0 0.0
    %117 = vmatpush1.msra.mxu0 0.0
    %118 = vmatprep.subr.mxu0 0.0
    %119 = vmatpush1.msra.mxu0 0.0
    %120 = vmatprep.subr.mxu0 0.0
    %121 = vmatpush1.msra.mxu0 0.0
    %122 = vmatprep.subr.mxu0 0.0
    %123 = vmatpush1.msra.mxu0 0.0
    %124 = vmatprep.subr.mxu0 0.0
    %125 = vmatpush1.msra.mxu0 0.0
    %126 = vmatprep.subr.mxu0 0.0
    %127 = vmatpush1.msra.mxu0 0.0
    %128 = vmatprep.subr.mxu0 0.0
    %129 = vmatpush1.msra.mxu0 0.0
    %130 = vmatprep.subr.mxu0 0.0
    %131 = vmatpush1.msra.mxu0 0.0
    %132 = vmatprep.subr.mxu0 0.0
    %133 = vmatpush1.msra.mxu0 0.0
    %134 = vmatprep.subr.mxu0 0.0
    %135 = vmatpush1.msra.mxu0 0.0
    %136 = vmatprep.subr.mxu0 0.0
    %137 = vmatpush1.msra.mxu0 0.0
    %138 = vmatprep.subr.mxu0 0.0
    %139 = vmatpush1.msra.mxu0 0.0
    %140 = vmatprep.subr.mxu0 0.0
    %141 = vmatpush1.msra.mxu0 0.0
    %142 = vmatprep.subr.mxu0 0.0
    %143 = vmatpush1.msra.mxu0 0.0
    %144 = vmatprep.subr.mxu0 0.0
    %145 = vmatpush1.msra.mxu0 0.0
    %146 = vmatprep.subr.mxu0 0.0
    %147 = vmatpush1.msra.mxu0 0.0
    %148 = vmatprep.subr.mxu0 0.0
    %149 = vmatpush1.msra.mxu0 0.0
    %150 = vmatprep.subr.mxu0 0.0
    %151 = vmatpush1.msra.mxu0 0.0
    %152 = vmatprep.subr.mxu0 0.0
    %153 = vmatpush1.msra.mxu0 0.0
    %154 = vmatprep.subr.mxu0 0.0
    %155 = vmatpush1.msra.mxu0 0.0
    %156 = vmatprep.subr.mxu0 0.0
    %157 = vmatpush1.msra.mxu0 0.0
    %158 = vmatprep.subr.mxu0 0.0
    %159 = vmatpush1.msra.mxu0 0.0
    %160 = vmatprep.subr.mxu0 0.0
    %161 = vmatpush1.msra.mxu0 0.0
    %162 = vmatprep.subr.mxu0 0.0
    %163 = vmatpush1.msra.mxu0 0.0
    %164 = vmatprep.subr.mxu0 0.0
    %165 = vmatpush1.msra.mxu0 0.0
    %166 = vmatprep.subr.mxu0 0.0
    %167 = vmatpush1.msra.mxu0 0.0
    %168 = vmatprep.subr.mxu0 0.0
    %169 = vmatpush1.msra.mxu0 0.0
    %170 = vmatprep.subr.mxu0 0.0
    %171 = vmatpush1.msra.mxu0 0.0
    %172 = vmatprep.mubr.f32.mxu0 0.0
    %173 = vmatmul.mubr.f32.gmra.mrb[0].mxu0 %v103
    %v174 = vpop.f32.mrb[0].mxu0
    %v175 = vadd.f32 %v99, %v174
    %v176 = vpop.f32.mrb[0].mxu0
    %177 = vmatprep.mubr.f32.mxu0 0.0
    %178 = vmatmul.mubr.f32.gmra.mrb[0].mxu0 %v106
    %v179 = vpop.f32.mrb[0].mxu0
    %v180 = vadd.f32 %v99, %v179
    %v181 = vpop.f32.mrb[0].mxu0
    %182 = vdwg.mxu0
    %184 = vrot.lane.b32.xlu0 %v175, 96
    %v185 = vpop.permute.xlu0 %184
    %vm186 = vcmask 64512
    %v187 = vsel %vm186, %v175, 0
    %v189 = vsel %vm186, %v185, 0
    %191 = vmatprep.subr.mxu0 0.0
    %192 = vmatpush1.xpose.msra.mxu0 %v189
    %193 = vmatprep.subr.mxu0 0.0
    %194 = vmatpush1.xpose.msra.mxu0 0.0
    %195 = vmatprep.subr.mxu0 0.0
    %196 = vmatpush1.xpose.msra.mxu0 0.0
    %197 = vmatprep.subr.mxu0 0.0
    %198 = vmatpush1.xpose.msra.mxu0 0.0
    %199 = vmatprep.subr.mxu0 0.0
    %200 = vmatpush1.xpose.msra.mxu0 0.0
    %201 = vmatprep.subr.mxu0 0.0
    %202 = vmatpush1.xpose.msra.mxu0 0.0
    %203 = vmatprep.subr.mxu0 0.0
    %204 = vmatpush1.xpose.msra.mxu0 0.0
    %205 = vmatprep.subr.mxu0 0.0
    %206 = vmatpush1.xpose.msra.mxu0 0.0
    %207 = vmatprep.subr.mxu0 0.0
    %208 = vmatpush1.xpose.msra.mxu0 0.0
    %209 = vmatprep.subr.mxu0 0.0
    %210 = vmatpush1.xpose.msra.mxu0 0.0
    %211 = vmatprep.subr.mxu0 0.0
    %212 = vmatpush1.xpose.msra.mxu0 0.0
    %213 = vmatprep.subr.mxu0 0.0
    %214 = vmatpush1.xpose.msra.mxu0 0.0
    %215 = vmatprep.subr.mxu0 0.0
    %216 = vmatpush1.xpose.msra.mxu0 0.0
    %217 = vmatprep.subr.mxu0 0.0
    %218 = vmatpush1.xpose.msra.mxu0 0.0
    %219 = vmatprep.subr.mxu0 0.0
    %220 = vmatpush1.xpose.msra.mxu0 0.0
    %221 = vmatprep.subr.mxu0 0.0
    %222 = vmatpush1.xpose.msra.mxu0 0.0
    %223 = vmatprep.subr.mxu0 0.0
    %224 = vmatpush1.xpose.msra.mxu0 0.0
    %225 = vmatprep.subr.mxu0 0.0
    %226 = vmatpush1.xpose.msra.mxu0 0.0
    %227 = vmatprep.subr.mxu0 0.0
    %228 = vmatpush1.xpose.msra.mxu0 0.0
    %229 = vmatprep.subr.mxu0 0.0
    %230 = vmatpush1.xpose.msra.mxu0 0.0
    %231 = vmatprep.subr.mxu0 0.0
    %232 = vmatpush1.xpose.msra.mxu0 0.0
    %233 = vmatprep.subr.mxu0 0.0
    %234 = vmatpush1.xpose.msra.mxu0 0.0
    %235 = vmatprep.subr.mxu0 0.0
    %236 = vmatpush1.xpose.msra.mxu0 0.0
    %237 = vmatprep.subr.mxu0 0.0
    %238 = vmatpush1.xpose.msra.mxu0 0.0
    %239 = vmatprep.subr.mxu0 0.0
    %240 = vmatpush1.xpose.msra.mxu0 0.0
    %241 = vmatprep.subr.mxu0 0.0
    %242 = vmatpush1.xpose.msra.mxu0 0.0
    %243 = vmatprep.subr.mxu0 0.0
    %244 = vmatpush1.xpose.msra.mxu0 0.0
    %245 = vmatprep.subr.mxu0 0.0
    %246 = vmatpush1.xpose.msra.mxu0 0.0
    %247 = vmatprep.subr.mxu0 0.0
    %248 = vmatpush1.xpose.msra.mxu0 0.0
    %249 = vmatprep.subr.mxu0 0.0
    %250 = vmatpush1.xpose.msra.mxu0 0.0
    %251 = vmatprep.subr.mxu0 0.0
    %252 = vmatpush1.xpose.msra.mxu0 0.0
    %253 = vmatprep.subr.mxu0 0.0
    %254 = vmatpush1.xpose.msra.mxu0 0.0
    %255 = vmatprep.mubr.f32.mxu0 0.0
    %256 = vmatmul.mubr.f32.gmra.mrb[0].mxu0 %v187
    %v257 = vpop.f32.mrb[0].mxu0
    %v258 = vadd.f32 0.0, %v257
    %v259 = vpop.f32.mrb[0].mxu0
    %260 = vdwg.mxu0
    %262 = vrot.lane.b32.xlu0 %v180, 96
    %v263 = vpop.permute.xlu0 %262
    %v264 = vsel %vm186, %v180, 0
    %v266 = vsel %vm186, %v263, 0
    %268 = vmatprep.subr.mxu0 0.0
    %269 = vmatpush1.xpose.msra.mxu0 %v266
    %270 = vmatprep.subr.mxu0 0.0
    %271 = vmatpush1.xpose.msra.mxu0 0.0
    %272 = vmatprep.subr.mxu0 0.0
    %273 = vmatpush1.xpose.msra.mxu0 0.0
    %274 = vmatprep.subr.mxu0 0.0
    %275 = vmatpush1.xpose.msra.mxu0 0.0
    %276 = vmatprep.subr.mxu0 0.0
    %277 = vmatpush1.xpose.msra.mxu0 0.0
    %278 = vmatprep.subr.mxu0 0.0
    %279 = vmatpush1.xpose.msra.mxu0 0.0
    %280 = vmatprep.subr.mxu0 0.0
    %281 = vmatpush1.xpose.msra.mxu0 0.0
    %282 = vmatprep.subr.mxu0 0.0
    %283 = vmatpush1.xpose.msra.mxu0 0.0
    %284 = vmatprep.subr.mxu0 0.0
    %285 = vmatpush1.xpose.msra.mxu0 0.0
    %286 = vmatprep.subr.mxu0 0.0
    %287 = vmatpush1.xpose.msra.mxu0 0.0
    %288 = vmatprep.subr.mxu0 0.0
    %289 = vmatpush1.xpose.msra.mxu0 0.0
    %290 = vmatprep.subr.mxu0 0.0
    %291 = vmatpush1.xpose.msra.mxu0 0.0
    %292 = vmatprep.subr.mxu0 0.0
    %293 = vmatpush1.xpose.msra.mxu0 0.0
    %294 = vmatprep.subr.mxu0 0.0
    %295 = vmatpush1.xpose.msra.mxu0 0.0
    %296 = vmatprep.subr.mxu0 0.0
    %297 = vmatpush1.xpose.msra.mxu0 0.0
    %298 = vmatprep.subr.mxu0 0.0
    %299 = vmatpush1.xpose.msra.mxu0 0.0
    %300 = vmatprep.subr.mxu0 0.0
    %301 = vmatpush1.xpose.msra.mxu0 0.0
    %302 = vmatprep.subr.mxu0 0.0
    %303 = vmatpush1.xpose.msra.mxu0 0.0
    %304 = vmatprep.subr.mxu0 0.0
    %305 = vmatpush1.xpose.msra.mxu0 0.0
    %306 = vmatprep.subr.mxu0 0.0
    %307 = vmatpush1.xpose.msra.mxu0 0.0
    %308 = vmatprep.subr.mxu0 0.0
    %309 = vmatpush1.xpose.msra.mxu0 0.0
    %310 = vmatprep.subr.mxu0 0.0
    %311 = vmatpush1.xpose.msra.mxu0 0.0
    %312 = vmatprep.subr.mxu0 0.0
    %313 = vmatpush1.xpose.msra.mxu0 0.0
    %314 = vmatprep.subr.mxu0 0.0
    %315 = vmatpush1.xpose.msra.mxu0 0.0
    %316 = vmatprep.subr.mxu0 0.0
    %317 = vmatpush1.xpose.msra.mxu0 0.0
    %318 = vmatprep.subr.mxu0 0.0
    %319 = vmatpush1.xpose.msra.mxu0 0.0
    %320 = vmatprep.subr.mxu0 0.0
    %321 = vmatpush1.xpose.msra.mxu0 0.0
    %322 = vmatprep.subr.mxu0 0.0
    %323 = vmatpush1.xpose.msra.mxu0 0.0
    %324 = vmatprep.subr.mxu0 0.0
    %325 = vmatpush1.xpose.msra.mxu0 0.0
    %326 = vmatprep.subr.mxu0 0.0
    %327 = vmatpush1.xpose.msra.mxu0 0.0
    %328 = vmatprep.subr.mxu0 0.0
    %329 = vmatpush1.xpose.msra.mxu0 0.0
    %330 = vmatprep.subr.mxu0 0.0
    %331 = vmatpush1.xpose.msra.mxu0 0.0
    %332 = vmatprep.mubr.f32.mxu0 0.0
    %333 = vmatmul.mubr.f32.gmra.mrb[0].mxu0 %v264
    %v334 = vpop.f32.mrb[0].mxu0
    %v335 = vadd.f32 0.0, %v334
    %v336 = vpop.f32.mrb[0].mxu0
    %337 = vdwg.mxu0
    %v338 = vmul.f32 %v258, 0.35355338
    %v339 = vmul.f32 %v335, 0.35355338
    %v340 = vsel %vm186, %v338, -inf
    %341 = vmax.xlane.f32.xlu0 %v340
    %v342 = vpop.xlane.xlu0 %341
    %v343 = vsel %vm186, %v339, -inf
    %344 = vmax.xlane.f32.xlu0 %v343
    %v345 = vpop.xlane.xlu0 %344
    %v346 = vsub.f32 %v338, %v342
    %v347 = vsub.f32 %v339, %v345
    %v348 = vmul.f32 %v346, 1.442695
    %v349 = vpow.pop %v348
    %v350 = vmul.f32 %v347, 1.442695
    %v351 = vpow.pop %v350
    %v352 = vsel %vm186, %v349, 0.0
    %353 = vadd.xlane.f32.xlu0 %v352
    %v354 = vpop.xlane.xlu0 %353
    %v355 = vsel %vm186, %v351, 0.0
    %356 = vadd.xlane.f32.xlu0 %v355
    %v357 = vpop.xlane.xlu0 %356
    %v358 = vrcp.pop %v354
    %v359 = vrcp.pop %v357
    %v360 = vmul.f32 %v349, %v358
    %v361 = vmul.f32 %v351, %v359
    %362 = vrot.lane.b32.xlu0 %v175, 64
    %v363 = vpop.permute.xlu0 %362
    %v366 = vsel %vm186, %v360, 0
    %368 = vmatprep.subr.mxu0 0.0
    %369 = vmatpush1.msra.mxu0 %v363
    %370 = vmatprep.subr.mxu0 0.0
    %371 = vmatpush1.msra.mxu0 0.0
    %372 = vmatprep.subr.mxu0 0.0
    %373 = vmatpush1.msra.mxu0 0.0
    %374 = vmatprep.subr.mxu0 0.0
    %375 = vmatpush1.msra.mxu0 0.0
    %376 = vmatprep.subr.mxu0 0.0
    %377 = vmatpush1.msra.mxu0 0.0
    %378 = vmatprep.subr.mxu0 0.0
    %379 = vmatpush1.msra.mxu0 0.0
    %380 = vmatprep.subr.mxu0 0.0
    %381 = vmatpush1.msra.mxu0 0.0
    %382 = vmatprep.subr.mxu0 0.0
    %383 = vmatpush1.msra.mxu0 0.0
    %384 = vmatprep.subr.mxu0 0.0
    %385 = vmatpush1.msra.mxu0 0.0
    %386 = vmatprep.subr.mxu0 0.0
    %387 = vmatpush1.msra.mxu0 0.0
    %388 = vmatprep.subr.mxu0 0.0
    %389 = vmatpush1.msra.mxu0 0.0
    %390 = vmatprep.subr.mxu0 0.0
    %391 = vmatpush1.msra.mxu0 0.0
    %392 = vmatprep.subr.mxu0 0.0
    %393 = vmatpush1.msra.mxu0 0.0
    %394 = vmatprep.subr.mxu0 0.0
    %395 = vmatpush1.msra.mxu0 0.0
    %396 = vmatprep.subr.mxu0 0.0
    %397 = vmatpush1.msra.mxu0 0.0
    %398 = vmatprep.subr.mxu0 0.0
    %399 = vmatpush1.msra.mxu0 0.0
    %400 = vmatprep.subr.mxu0 0.0
    %401 = vmatpush1.msra.mxu0 0.0
    %402 = vmatprep.subr.mxu0 0.0
    %403 = vmatpush1.msra.mxu0 0.0
    %404 = vmatprep.subr.mxu0 0.0
    %405 = vmatpush1.msra.mxu0 0.0
    %406 = vmatprep.subr.mxu0 0.0
    %407 = vmatpush1.msra.mxu0 0.0
    %408 = vmatprep.subr.mxu0 0.0
    %409 = vmatpush1.msra.mxu0 0.0
    %410 = vmatprep.subr.mxu0 0.0
    %411 = vmatpush1.msra.mxu0 0.0
    %412 = vmatprep.subr.mxu0 0.0
    %413 = vmatpush1.msra.mxu0 0.0
    %414 = vmatprep.subr.mxu0 0.0
    %415 = vmatpush1.msra.mxu0 0.0
    %416 = vmatprep.subr.mxu0 0.0
    %417 = vmatpush1.msra.mxu0 0.0
    %418 = vmatprep.subr.mxu0 0.0
    %419 = vmatpush1.msra.mxu0 0.0
    %420 = vmatprep.subr.mxu0 0.0
    %421 = vmatpush1.msra.mxu0 0.0
    %422 = vmatprep.subr.mxu0 0.0
    %423 = vmatpush1.msra.mxu0 0.0
    %424 = vmatprep.subr.mxu0 0.0
    %425 = vmatpush1.msra.mxu0 0.0
    %426 = vmatprep.subr.mxu0 0.0
    %427 = vmatpush1.msra.mxu0 0.0
    %428 = vmatprep.subr.mxu0 0.0
    %429 = vmatpush1.msra.mxu0 0.0
    %430 = vmatprep.subr.mxu0 0.0
    %431 = vmatpush1.msra.mxu0 0.0
    %432 = vmatprep.mubr.f32.mxu0 0.0
    %433 = vmatmul.mubr.f32.gmra.mrb[0].mxu0 %v366
    %v434 = vpop.f32.mrb[0].mxu0
    %v435 = vadd.f32 0.0, %v434
    %v436 = vpop.f32.mrb[0].mxu0
    %437 = vdwg.mxu0
    %438 = vrot.lane.b32.xlu0 %v180, 64
    %v439 = vpop.permute.xlu0 %438
    %v442 = vsel %vm186, %v361, 0
    %444 = vmatprep.subr.mxu0 0.0
    %445 = vmatpush1.msra.mxu0 %v439
    %446 = vmatprep.subr.mxu0 0.0
    %447 = vmatpush1.msra.mxu0 0.0
    %448 = vmatprep.subr.mxu0 0.0
    %449 = vmatpush1.msra.mxu0 0.0
    %450 = vmatprep.subr.mxu0 0.0
    %451 = vmatpush1.msra.mxu0 0.0
    %452 = vmatprep.subr.mxu0 0.0
    %453 = vmatpush1.msra.mxu0 0.0
    %454 = vmatprep.subr.mxu0 0.0
    %455 = vmatpush1.msra.mxu0 0.0
    %456 = vmatprep.subr.mxu0 0.0
    %457 = vmatpush1.msra.mxu0 0.0
    %458 = vmatprep.subr.mxu0 0.0
    %459 = vmatpush1.msra.mxu0 0.0
    %460 = vmatprep.subr.mxu0 0.0
    %461 = vmatpush1.msra.mxu0 0.0
    %462 = vmatprep.subr.mxu0 0.0
    %463 = vmatpush1.msra.mxu0 0.0
    %464 = vmatprep.subr.mxu0 0.0
    %465 = vmatpush1.msra.mxu0 0.0
    %466 = vmatprep.subr.mxu0 0.0
    %467 = vmatpush1.msra.mxu0 0.0
    %468 = vmatprep.subr.mxu0 0.0
    %469 = vmatpush1.msra.mxu0 0.0
    %470 = vmatprep.subr.mxu0 0.0
    %471 = vmatpush1.msra.mxu0 0.0
    %472 = vmatprep.subr.mxu0 0.0
    %473 = vmatpush1.msra.mxu0 0.0
    %474 = vmatprep.subr.mxu0 0.0
    %475 = vmatpush1.msra.mxu0 0.0
    %476 = vmatprep.subr.mxu0 0.0
    %477 = vmatpush1.msra.mxu0 0.0
    %478 = vmatprep.subr.mxu0 0.0
    %479 = vmatpush1.msra.mxu0 0.0
    %480 = vmatprep.subr.mxu0 0.0
    %481 = vmatpush1.msra.mxu0 0.0
    %482 = vmatprep.subr.mxu0 0.0
    %483 = vmatpush1.msra.mxu0 0.0
    %484 = vmatprep.subr.mxu0 0.0
    %485 = vmatpush1.msra.mxu0 0.0
    %486 = vmatprep.subr.mxu0 0.0
    %487 = vmatpush1.msra.mxu0 0.0
    %488 = vmatprep.subr.mxu0 0.0
    %489 = vmatpush1.msra.mxu0 0.0
    %490 = vmatprep.subr.mxu0 0.0
    %491 = vmatpush1.msra.mxu0 0.0
    %492 = vmatprep.subr.mxu0 0.0
    %493 = vmatpush1.msra.mxu0 0.0
    %494 = vmatprep.subr.mxu0 0.0
    %495 = vmatpush1.msra.mxu0 0.0
    %496 = vmatprep.subr.mxu0 0.0
    %497 = vmatpush1.msra.mxu0 0.0
    %498 = vmatprep.subr.mxu0 0.0
    %499 = vmatpush1.msra.mxu0 0.0
    %500 = vmatprep.subr.mxu0 0.0
    %501 = vmatpush1.msra.mxu0 0.0
    %502 = vmatprep.subr.mxu0 0.0
    %503 = vmatpush1.msra.mxu0 0.0
    %504 = vmatprep.subr.mxu0 0.0
    %505 = vmatpush1.msra.mxu0 0.0
    %506 = vmatprep.subr.mxu0 0.0
    %507 = vmatpush1.msra.mxu0 0.0
    %508 = vmatprep.mubr.f32.mxu0 0.0
    %509 = vmatmul.mubr.f32.gmra.mrb[0].mxu0 %v442
    %v510 = vpop.f32.mrb[0].mxu0
    %v511 = vadd.f32 0.0, %v510
    %v512 = vpop.f32.mrb[0].mxu0
    %513 = vdwg.mxu0
    %514 = vrot.lane.b32.xlu0 %v175, 120
    %v515 = vpop.permute.xlu0 %514
    %516 = vrot.lane.b32.xlu0 %v175, 88
    %v517 = vpop.permute.xlu0 %516
    %v518 = vsel %vm186, %v515, 0
    %v520 = vsel %vm186, %v517, 0
    %522 = vmatprep.subr.mxu0 0.0
    %523 = vmatpush1.xpose.msra.mxu0 %v520
    %524 = vmatprep.subr.mxu0 0.0
    %525 = vmatpush1.xpose.msra.mxu0 0.0
    %526 = vmatprep.subr.mxu0 0.0
    %527 = vmatpush1.xpose.msra.mxu0 0.0
    %528 = vmatprep.subr.mxu0 0.0
    %529 = vmatpush1.xpose.msra.mxu0 0.0
    %530 = vmatprep.subr.mxu0 0.0
    %531 = vmatpush1.xpose.msra.mxu0 0.0
    %532 = vmatprep.subr.mxu0 0.0
    %533 = vmatpush1.xpose.msra.mxu0 0.0
    %534 = vmatprep.subr.mxu0 0.0
    %535 = vmatpush1.xpose.msra.mxu0 0.0
    %536 = vmatprep.subr.mxu0 0.0
    %537 = vmatpush1.xpose.msra.mxu0 0.0
    %538 = vmatprep.subr.mxu0 0.0
    %539 = vmatpush1.xpose.msra.mxu0 0.0
    %540 = vmatprep.subr.mxu0 0.0
    %541 = vmatpush1.xpose.msra.mxu0 0.0
    %542 = vmatprep.subr.mxu0 0.0
    %543 = vmatpush1.xpose.msra.mxu0 0.0
    %544 = vmatprep.subr.mxu0 0.0
    %545 = vmatpush1.xpose.msra.mxu0 0.0
    %546 = vmatprep.subr.mxu0 0.0
    %547 = vmatpush1.xpose.msra.mxu0 0.0
    %548 = vmatprep.subr.mxu0 0.0
    %549 = vmatpush1.xpose.msra.mxu0 0.0
    %550 = vmatprep.subr.mxu0 0.0
    %551 = vmatpush1.xpose.msra.mxu0 0.0
    %552 = vmatprep.subr.mxu0 0.0
    %553 = vmatpush1.xpose.msra.mxu0 0.0
    %554 = vmatprep.subr.mxu0 0.0
    %555 = vmatpush1.xpose.msra.mxu0 0.0
    %556 = vmatprep.subr.mxu0 0.0
    %557 = vmatpush1.xpose.msra.mxu0 0.0
    %558 = vmatprep.subr.mxu0 0.0
    %559 = vmatpush1.xpose.msra.mxu0 0.0
    %560 = vmatprep.subr.mxu0 0.0
    %561 = vmatpush1.xpose.msra.mxu0 0.0
    %562 = vmatprep.subr.mxu0 0.0
    %563 = vmatpush1.xpose.msra.mxu0 0.0
    %564 = vmatprep.subr.mxu0 0.0
    %565 = vmatpush1.xpose.msra.mxu0 0.0
    %566 = vmatprep.subr.mxu0 0.0
    %567 = vmatpush1.xpose.msra.mxu0 0.0
    %568 = vmatprep.subr.mxu0 0.0
    %569 = vmatpush1.xpose.msra.mxu0 0.0
    %570 = vmatprep.subr.mxu0 0.0
    %571 = vmatpush1.xpose.msra.mxu0 0.0
    %572 = vmatprep.subr.mxu0 0.0
    %573 = vmatpush1.xpose.msra.mxu0 0.0
    %574 = vmatprep.subr.mxu0 0.0
    %575 = vmatpush1.xpose.msra.mxu0 0.0
    %576 = vmatprep.subr.mxu0 0.0
    %577 = vmatpush1.xpose.msra.mxu0 0.0
    %578 = vmatprep.subr.mxu0 0.0
    %579 = vmatpush1.xpose.msra.mxu0 0.0
    %580 = vmatprep.subr.mxu0 0.0
    %581 = vmatpush1.xpose.msra.mxu0 0.0
    %582 = vmatprep.subr.mxu0 0.0
    %583 = vmatpush1.xpose.msra.mxu0 0.0
    %584 = vmatprep.subr.mxu0 0.0
    %585 = vmatpush1.xpose.msra.mxu0 0.0
    %586 = vmatprep.mubr.f32.mxu0 0.0
    %587 = vmatmul.mubr.f32.gmra.mrb[0].mxu0 %v518
    %v588 = vpop.f32.mrb[0].mxu0
    %v589 = vadd.f32 0.0, %v588
    %v590 = vpop.f32.mrb[0].mxu0
    %591 = vdwg.mxu0
    %592 = vrot.lane.b32.xlu0 %v180, 120
    %v593 = vpop.permute.xlu0 %592
    %594 = vrot.lane.b32.xlu0 %v180, 88
    %v595 = vpop.permute.xlu0 %594
    %v596 = vsel %vm186, %v593, 0
    %v598 = vsel %vm186, %v595, 0
    %600 = vmatprep.subr.mxu0 0.0
    %601 = vmatpush1.xpose.msra.mxu0 %v598
    %602 = vmatprep.subr.mxu0 0.0
    %603 = vmatpush1.xpose.msra.mxu0 0.0
    %604 = vmatprep.subr.mxu0 0.0
    %605 = vmatpush1.xpose.msra.mxu0 0.0
    %606 = vmatprep.subr.mxu0 0.0
    %607 = vmatpush1.xpose.msra.mxu0 0.0
    %608 = vmatprep.subr.mxu0 0.0
    %609 = vmatpush1.xpose.msra.mxu0 0.0
    %610 = vmatprep.subr.mxu0 0.0
    %611 = vmatpush1.xpose.msra.mxu0 0.0
    %612 = vmatprep.subr.mxu0 0.0
    %613 = vmatpush1.xpose.msra.mxu0 0.0
    %614 = vmatprep.subr.mxu0 0.0
    %615 = vmatpush1.xpose.msra.mxu0 0.0
    %616 = vmatprep.subr.mxu0 0.0
    %617 = vmatpush1.xpose.msra.mxu0 0.0
    %618 = vmatprep.subr.mxu0 0.0
    %619 = vmatpush1.xpose.msra.mxu0 0.0
    %620 = vmatprep.subr.mxu0 0.0
    %621 = vmatpush1.xpose.msra.mxu0 0.0
    %622 = vmatprep.subr.mxu0 0.0
    %623 = vmatpush1.xpose.msra.mxu0 0.0
    %624 = vmatprep.subr.mxu0 0.0
    %625 = vmatpush1.xpose.msra.mxu0 0.0
    %626 = vmatprep.subr.mxu0 0.0
    %627 = vmatpush1.xpose.msra.mxu0 0.0
    %628 = vmatprep.subr.mxu0 0.0
    %629 = vmatpush1.xpose.msra.mxu0 0.0
    %630 = vmatprep.subr.mxu0 0.0
    %631 = vmatpush1.xpose.msra.mxu0 0.0
    %632 = vmatprep.subr.mxu0 0.0
    %633 = vmatpush1.xpose.msra.mxu0 0.0
    %634 = vmatprep.subr.mxu0 0.0
    %635 = vmatpush1.xpose.msra.mxu0 0.0
    %636 = vmatprep.subr.mxu0 0.0
    %637 = vmatpush1.xpose.msra.mxu0 0.0
    %638 = vmatprep.subr.mxu0 0.0
    %639 = vmatpush1.xpose.msra.mxu0 0.0
    %640 = vmatprep.subr.mxu0 0.0
    %641 = vmatpush1.xpose.msra.mxu0 0.0
    %642 = vmatprep.subr.mxu0 0.0
    %643 = vmatpush1.xpose.msra.mxu0 0.0
    %644 = vmatprep.subr.mxu0 0.0
    %645 = vmatpush1.xpose.msra.mxu0 0.0
    %646 = vmatprep.subr.mxu0 0.0
    %647 = vmatpush1.xpose.msra.mxu0 0.0
    %648 = vmatprep.subr.mxu0 0.0
    %649 = vmatpush1.xpose.msra.mxu0 0.0
    %650 = vmatprep.subr.mxu0 0.0
    %651 = vmatpush1.xpose.msra.mxu0 0.0
    %652 = vmatprep.subr.mxu0 0.0
    %653 = vmatpush1.xpose.msra.mxu0 0.0
    %654 = vmatprep.subr.mxu0 0.0
    %655 = vmatpush1.xpose.msra.mxu0 0.0
    %656 = vmatprep.subr.mxu0 0.0
    %657 = vmatpush1.xpose.msra.mxu0 0.0
    %658 = vmatprep.subr.mxu0 0.0
    %659 = vmatpush1.xpose.msra.mxu0 0.0
    %660 = vmatprep.subr.mxu0 0.0
    %661 = vmatpush1.xpose.msra.mxu0 0.0
    %662 = vmatprep.subr.mxu0 0.0
    %663 = vmatpush1.xpose.msra.mxu0 0.0
    %664 = vmatprep.mubr.f32.mxu0 0.0
    %665 = vmatmul.mubr.f32.gmra.mrb[0].mxu0 %v596
    %v666 = vpop.f32.mrb[0].mxu0
    %v667 = vadd.f32 0.0, %v666
    %v668 = vpop.f32.mrb[0].mxu0
    %669 = vdwg.mxu0
    %v670 = vmul.f32 %v589, 0.35355338
    %v671 = vmul.f32 %v667, 0.35355338
    %v672 = vsel %vm186, %v670, -inf
    %673 = vmax.xlane.f32.xlu0 %v672
    %v674 = vpop.xlane.xlu0 %673
    %v675 = vsel %vm186, %v671, -inf
    %676 = vmax.xlane.f32.xlu0 %v675
    %v677 = vpop.xlane.xlu0 %676
    %v678 = vsub.f32 %v670, %v674
    %v679 = vsub.f32 %v671, %v677
    %v680 = vmul.f32 %v678, 1.442695
    %v681 = vpow.pop %v680
    %v682 = vmul.f32 %v679, 1.442695
    %v683 = vpow.pop %v682
    %v684 = vsel %vm186, %v681, 0.0
    %685 = vadd.xlane.f32.xlu0 %v684
    %v686 = vpop.xlane.xlu0 %685
    %v687 = vsel %vm186, %v683, 0.0
    %688 = vadd.xlane.f32.xlu0 %v687
    %v689 = vpop.xlane.xlu0 %688
    %v690 = vrcp.pop %v686
    %v691 = vrcp.pop %v689
    %v692 = vmul.f32 %v681, %v690
    %v693 = vmul.f32 %v683, %v691
    %694 = vrot.lane.b32.xlu0 %v175, 56
    %v695 = vpop.permute.xlu0 %694
    %v698 = vsel %vm186, %v692, 0
    %700 = vmatprep.subr.mxu0 0.0
    %701 = vmatpush1.msra.mxu0 %v695
    %702 = vmatprep.subr.mxu0 0.0
    %703 = vmatpush1.msra.mxu0 0.0
    %704 = vmatprep.subr.mxu0 0.0
    %705 = vmatpush1.msra.mxu0 0.0
    %706 = vmatprep.subr.mxu0 0.0
    %707 = vmatpush1.msra.mxu0 0.0
    %708 = vmatprep.subr.mxu0 0.0
    %709 = vmatpush1.msra.mxu0 0.0
    %710 = vmatprep.subr.mxu0 0.0
    %711 = vmatpush1.msra.mxu0 0.0
    %712 = vmatprep.subr.mxu0 0.0
    %713 = vmatpush1.msra.mxu0 0.0
    %714 = vmatprep.subr.mxu0 0.0
    %715 = vmatpush1.msra.mxu0 0.0
    %716 = vmatprep.subr.mxu0 0.0
    %717 = vmatpush1.msra.mxu0 0.0
    %718 = vmatprep.subr.mxu0 0.0
    %719 = vmatpush1.msra.mxu0 0.0
    %720 = vmatprep.subr.mxu0 0.0
    %721 = vmatpush1.msra.mxu0 0.0
    %722 = vmatprep.subr.mxu0 0.0
    %723 = vmatpush1.msra.mxu0 0.0
    %724 = vmatprep.subr.mxu0 0.0
    %725 = vmatpush1.msra.mxu0 0.0
    %726 = vmatprep.subr.mxu0 0.0
    %727 = vmatpush1.msra.mxu0 0.0
    %728 = vmatprep.subr.mxu0 0.0
    %729 = vmatpush1.msra.mxu0 0.0
    %730 = vmatprep.subr.mxu0 0.0
    %731 = vmatpush1.msra.mxu0 0.0
    %732 = vmatprep.subr.mxu0 0.0
    %733 = vmatpush1.msra.mxu0 0.0
    %734 = vmatprep.subr.mxu0 0.0
    %735 = vmatpush1.msra.mxu0 0.0
    %736 = vmatprep.subr.mxu0 0.0
    %737 = vmatpush1.msra.mxu0 0.0
    %738 = vmatprep.subr.mxu0 0.0
    %739 = vmatpush1.msra.mxu0 0.0
    %740 = vmatprep.subr.mxu0 0.0
    %741 = vmatpush1.msra.mxu0 0.0
    %742 = vmatprep.subr.mxu0 0.0
    %743 = vmatpush1.msra.mxu0 0.0
    %744 = vmatprep.subr.mxu0 0.0
    %745 = vmatpush1.msra.mxu0 0.0
    %746 = vmatprep.subr.mxu0 0.0
    %747 = vmatpush1.msra.mxu0 0.0
    %748 = vmatprep.subr.mxu0 0.0
    %749 = vmatpush1.msra.mxu0 0.0
    %750 = vmatprep.subr.mxu0 0.0
    %751 = vmatpush1.msra.mxu0 0.0
    %752 = vmatprep.subr.mxu0 0.0
    %753 = vmatpush1.msra.mxu0 0.0
    %754 = vmatprep.subr.mxu0 0.0
    %755 = vmatpush1.msra.mxu0 0.0
    %756 = vmatprep.subr.mxu0 0.0
    %757 = vmatpush1.msra.mxu0 0.0
    %758 = vmatprep.subr.mxu0 0.0
    %759 = vmatpush1.msra.mxu0 0.0
    %760 = vmatprep.subr.mxu0 0.0
    %761 = vmatpush1.msra.mxu0 0.0
    %762 = vmatprep.subr.mxu0 0.0
    %763 = vmatpush1.msra.mxu0 0.0
    %764 = vmatprep.mubr.f32.mxu0 0.0
    %765 = vmatmul.mubr.f32.gmra.mrb[0].mxu0 %v698
    %v766 = vpop.f32.mrb[0].mxu0
    %v767 = vadd.f32 0.0, %v766
    %v768 = vpop.f32.mrb[0].mxu0
    %769 = vdwg.mxu0
    %770 = vrot.lane.b32.xlu0 %v180, 56
    %v771 = vpop.permute.xlu0 %770
    %v774 = vsel %vm186, %v693, 0
    %776 = vmatprep.subr.mxu0 0.0
    %777 = vmatpush1.msra.mxu0 %v771
    %778 = vmatprep.subr.mxu0 0.0
    %779 = vmatpush1.msra.mxu0 0.0
    %780 = vmatprep.subr.mxu0 0.0
    %781 = vmatpush1.msra.mxu0 0.0
    %782 = vmatprep.subr.mxu0 0.0
    %783 = vmatpush1.msra.mxu0 0.0
    %784 = vmatprep.subr.mxu0 0.0
    %785 = vmatpush1.msra.mxu0 0.0
    %786 = vmatprep.subr.mxu0 0.0
    %787 = vmatpush1.msra.mxu0 0.0
    %788 = vmatprep.subr.mxu0 0.0
    %789 = vmatpush1.msra.mxu0 0.0
    %790 = vmatprep.subr.mxu0 0.0
    %791 = vmatpush1.msra.mxu0 0.0
    %792 = vmatprep.subr.mxu0 0.0
    %793 = vmatpush1.msra.mxu0 0.0
    %794 = vmatprep.subr.mxu0 0.0
    %795 = vmatpush1.msra.mxu0 0.0
    %796 = vmatprep.subr.mxu0 0.0
    %797 = vmatpush1.msra.mxu0 0.0
    %798 = vmatprep.subr.mxu0 0.0
    %799 = vmatpush1.msra.mxu0 0.0
    %800 = vmatprep.subr.mxu0 0.0
    %801 = vmatpush1.msra.mxu0 0.0
    %802 = vmatprep.subr.mxu0 0.0
    %803 = vmatpush1.msra.mxu0 0.0
    %804 = vmatprep.subr.mxu0 0.0
    %805 = vmatpush1.msra.mxu0 0.0
    %806 = vmatprep.subr.mxu0 0.0
    %807 = vmatpush1.msra.mxu0 0.0
    %808 = vmatprep.subr.mxu0 0.0
    %809 = vmatpush1.msra.mxu0 0.0
    %810 = vmatprep.subr.mxu0 0.0
    %811 = vmatpush1.msra.mxu0 0.0
    %812 = vmatprep.subr.mxu0 0.0
    %813 = vmatpush1.msra.mxu0 0.0
    %814 = vmatprep.subr.mxu0 0.0
    %815 = vmatpush1.msra.mxu0 0.0
    %816 = vmatprep.subr.mxu0 0.0
    %817 = vmatpush1.msra.mxu0 0.0
    %818 = vmatprep.subr.mxu0 0.0
    %819 = vmatpush1.msra.mxu0 0.0
    %820 = vmatprep.subr.mxu0 0.0
    %821 = vmatpush1.msra.mxu0 0.0
    %822 = vmatprep.subr.mxu0 0.0
    %823 = vmatpush1.msra.mxu0 0.0
    %824 = vmatprep.subr.mxu0 0.0
    %825 = vmatpush1.msra.mxu0 0.0
    %826 = vmatprep.subr.mxu0 0.0
    %827 = vmatpush1.msra.mxu0 0.0
    %828 = vmatprep.subr.mxu0 0.0
    %829 = vmatpush1.msra.mxu0 0.0
    %830 = vmatprep.subr.mxu0 0.0
    %831 = vmatpush1.msra.mxu0 0.0
    %832 = vmatprep.subr.mxu0 0.0
    %833 = vmatpush1.msra.mxu0 0.0
    %834 = vmatprep.subr.mxu0 0.0
    %835 = vmatpush1.msra.mxu0 0.0
    %836 = vmatprep.subr.mxu0 0.0
    %837 = vmatpush1.msra.mxu0 0.0
    %838 = vmatprep.subr.mxu0 0.0
    %839 = vmatpush1.msra.mxu0 0.0
    %840 = vmatprep.mubr.f32.mxu0 0.0
    %841 = vmatmul.mubr.f32.gmra.mrb[0].mxu0 %v774
    %v842 = vpop.f32.mrb[0].mxu0
    %v843 = vadd.f32 0.0, %v842
    %v844 = vpop.f32.mrb[0].mxu0
    %845 = vdwg.mxu0
    %v847 = vsel %vm186, %v767, 0
    %v850 = vsel %vm186, %v843, 0
    %852 = vmatprep.subr.mxu0 0.0
    %853 = vmatpush1.msra.mxu0 %v72
    %854 = vmatprep.subr.mxu0 0.0
    %855 = vmatpush1.msra.mxu0 0.0
    %856 = vmatprep.subr.mxu0 0.0
    %857 = vmatpush1.msra.mxu0 0.0
    %858 = vmatprep.subr.mxu0 0.0
    %859 = vmatpush1.msra.mxu0 0.0
    %860 = vmatprep.subr.mxu0 0.0
    %861 = vmatpush1.msra.mxu0 0.0
    %862 = vmatprep.subr.mxu0 0.0
    %863 = vmatpush1.msra.mxu0 0.0
    %864 = vmatprep.subr.mxu0 0.0
    %865 = vmatpush1.msra.mxu0 0.0
    %866 = vmatprep.subr.mxu0 0.0
    %867 = vmatpush1.msra.mxu0 0.0
    %868 = vmatprep.subr.mxu0 0.0
    %869 = vmatpush1.msra.mxu0 0.0
    %870 = vmatprep.subr.mxu0 0.0
    %871 = vmatpush1.msra.mxu0 0.0
    %872 = vmatprep.subr.mxu0 0.0
    %873 = vmatpush1.msra.mxu0 0.0
    %874 = vmatprep.subr.mxu0 0.0
    %875 = vmatpush1.msra.mxu0 0.0
    %876 = vmatprep.subr.mxu0 0.0
    %877 = vmatpush1.msra.mxu0 0.0
    %878 = vmatprep.subr.mxu0 0.0
    %879 = vmatpush1.msra.mxu0 0.0
    %880 = vmatprep.subr.mxu0 0.0
    %881 = vmatpush1.msra.mxu0 0.0
    %882 = vmatprep.subr.mxu0 0.0
    %883 = vmatpush1.msra.mxu0 0.0
    %884 = vmatprep.subr.mxu0 0.0
    %885 = vmatpush1.msra.mxu0 0.0
    %886 = vmatprep.subr.mxu0 0.0
    %887 = vmatpush1.msra.mxu0 0.0
    %888 = vmatprep.subr.mxu0 0.0
    %889 = vmatpush1.msra.mxu0 0.0
    %890 = vmatprep.subr.mxu0 0.0
    %891 = vmatpush1.msra.mxu0 0.0
    %892 = vmatprep.subr.mxu0 0.0
    %893 = vmatpush1.msra.mxu0 0.0
    %894 = vmatprep.subr.mxu0 0.0
    %895 = vmatpush1.msra.mxu0 0.0
    %896 = vmatprep.subr.mxu0 0.0
    %897 = vmatpush1.msra.mxu0 0.0
    %898 = vmatprep.subr.mxu0 0.0
    %899 = vmatpush1.msra.mxu0 0.0
    %900 = vmatprep.subr.mxu0 0.0
    %901 = vmatpush1.msra.mxu0 0.0
    %902 = vmatprep.subr.mxu0 0.0
    %903 = vmatpush1.msra.mxu0 0.0
    %904 = vmatprep.subr.mxu0 0.0
    %905 = vmatpush1.msra.mxu0 0.0
    %906 = vmatprep.subr.mxu0 0.0
    %907 = vmatpush1.msra.mxu0 0.0
    %908 = vmatprep.subr.mxu0 0.0
    %909 = vmatpush1.msra.mxu0 0.0
    %910 = vmatprep.subr.mxu0 0.0
    %911 = vmatpush1.msra.mxu0 0.0
    %912 = vmatprep.subr.mxu0 0.0
    %913 = vmatpush1.msra.mxu0 0.0
    %914 = vmatprep.subr.mxu0 0.0
    %915 = vmatpush1.msra.mxu0 0.0
    %916 = vmatprep.mubr.f32.mxu0 0.0
    %917 = vmatmul.mubr.f32.gmra.mrb[0].mxu0 %v847
    %v918 = vpop.f32.mrb[0].mxu0
    %v919 = vadd.f32 0.0, %v918
    %v920 = vpop.f32.mrb[0].mxu0
    %921 = vmatprep.mubr.f32.mxu0 0.0
    %922 = vmatmul.mubr.f32.gmra.mrb[0].mxu0 %v850
    %v923 = vpop.f32.mrb[0].mxu0
    %v924 = vadd.f32 0.0, %v923
    %v925 = vpop.f32.mrb[0].mxu0
    %926 = vdwg.mxu0
    %v928 = vsel %vm186, %v435, 0
    %v931 = vsel %vm186, %v511, 0
    %933 = vmatprep.subr.mxu0 0.0
    %934 = vmatpush1.msra.mxu0 %v71
    %935 = vmatprep.subr.mxu0 0.0
    %936 = vmatpush1.msra.mxu0 0.0
    %937 = vmatprep.subr.mxu0 0.0
    %938 = vmatpush1.msra.mxu0 0.0
    %939 = vmatprep.subr.mxu0 0.0
    %940 = vmatpush1.msra.mxu0 0.0
    %941 = vmatprep.subr.mxu0 0.0
    %942 = vmatpush1.msra.mxu0 0.0
    %943 = vmatprep.subr.mxu0 0.0
    %944 = vmatpush1.msra.mxu0 0.0
    %945 = vmatprep.subr.mxu0 0.0
    %946 = vmatpush1.msra.mxu0 0.0
    %947 = vmatprep.subr.mxu0 0.0
    %948 = vmatpush1.msra.mxu0 0.0
    %949 = vmatprep.subr.mxu0 0.0
    %950 = vmatpush1.msra.mxu0 0.0
    %951 = vmatprep.subr.mxu0 0.0
    %952 = vmatpush1.msra.mxu0 0.0
    %953 = vmatprep.subr.mxu0 0.0
    %954 = vmatpush1.msra.mxu0 0.0
    %955 = vmatprep.subr.mxu0 0.0
    %956 = vmatpush1.msra.mxu0 0.0
    %957 = vmatprep.subr.mxu0 0.0
    %958 = vmatpush1.msra.mxu0 0.0
    %959 = vmatprep.subr.mxu0 0.0
    %960 = vmatpush1.msra.mxu0 0.0
    %961 = vmatprep.subr.mxu0 0.0
    %962 = vmatpush1.msra.mxu0 0.0
    %963 = vmatprep.subr.mxu0 0.0
    %964 = vmatpush1.msra.mxu0 0.0
    %965 = vmatprep.subr.mxu0 0.0
    %966 = vmatpush1.msra.mxu0 0.0
    %967 = vmatprep.subr.mxu0 0.0
    %968 = vmatpush1.msra.mxu0 0.0
    %969 = vmatprep.subr.mxu0 0.0
    %970 = vmatpush1.msra.mxu0 0.0
    %971 = vmatprep.subr.mxu0 0.0
    %972 = vmatpush1.msra.mxu0 0.0
    %973 = vmatprep.subr.mxu0 0.0
    %974 = vmatpush1.msra.mxu0 0.0
    %975 = vmatprep.subr.mxu0 0.0
    %976 = vmatpush1.msra.mxu0 0.0
    %977 = vmatprep.subr.mxu0 0.0
    %978 = vmatpush1.msra.mxu0 0.0
    %979 = vmatprep.subr.mxu0 0.0
    %980 = vmatpush1.msra.mxu0 0.0
    %981 = vmatprep.subr.mxu0 0.0
    %982 = vmatpush1.msra.mxu0 0.0
    %983 = vmatprep.subr.mxu0 0.0
    %984 = vmatpush1.msra.mxu0 0.0
    %985 = vmatprep.subr.mxu0 0.0
    %986 = vmatpush1.msra.mxu0 0.0
    %987 = vmatprep.subr.mxu0 0.0
    %988 = vmatpush1.msra.mxu0 0.0
    %989 = vmatprep.subr.mxu0 0.0
    %990 = vmatpush1.msra.mxu0 0.0
    %991 = vmatprep.subr.mxu0 0.0
    %992 = vmatpush1.msra.mxu0 0.0
    %993 = vmatprep.subr.mxu0 0.0
    %994 = vmatpush1.msra.mxu0 0.0
    %995 = vmatprep.subr.mxu0 0.0
    %996 = vmatpush1.msra.mxu0 0.0
    %997 = vmatprep.mubr.f32.mxu0 0.0
    %998 = vmatmul.mubr.f32.gmra.mrb[0].mxu0 %v928
    %v999 = vpop.f32.mrb[0].mxu0
    %v1000 = vadd.f32 %v919, %v999
    %v1001 = vpop.f32.mrb[0].mxu0
    %1002 = vmatprep.mubr.f32.mxu0 0.0
    %1003 = vmatmul.mubr.f32.gmra.mrb[0].mxu0 %v931
    %v1004 = vpop.f32.mrb[0].mxu0
    %v1005 = vadd.f32 %v924, %v1004
    %v1006 = vpop.f32.mrb[0].mxu0
    %1007 = vdwg.mxu0
    %1008 = vrot.lane.b32.xlu0 %v175, 112
    %v1009 = vpop.permute.xlu0 %1008
    %1010 = vrot.lane.b32.xlu0 %v175, 80
    %v1011 = vpop.permute.xlu0 %1010
    %v1012 = vsel %vm186, %v1009, 0
    %v1014 = vsel %vm186, %v1011, 0
    %1016 = vmatprep.subr.mxu0 0.0
    %1017 = vmatpush1.xpose.msra.mxu0 %v1014
    %1018 = vmatprep.subr.mxu0 0.0
    %1019 = vmatpush1.xpose.msra.mxu0 0.0
    %1020 = vmatprep.subr.mxu0 0.0
    %1021 = vmatpush1.xpose.msra.mxu0 0.0
    %1022 = vmatprep.subr.mxu0 0.0
    %1023 = vmatpush1.xpose.msra.mxu0 0.0
    %1024 = vmatprep.subr.mxu0 0.0
    %1025 = vmatpush1.xpose.msra.mxu0 0.0
    %1026 = vmatprep.subr.mxu0 0.0
    %1027 = vmatpush1.xpose.msra.mxu0 0.0
    %1028 = vmatprep.subr.mxu0 0.0
    %1029 = vmatpush1.xpose.msra.mxu0 0.0
    %1030 = vmatprep.subr.mxu0 0.0
    %1031 = vmatpush1.xpose.msra.mxu0 0.0
    %1032 = vmatprep.subr.mxu0 0.0
    %1033 = vmatpush1.xpose.msra.mxu0 0.0
    %1034 = vmatprep.subr.mxu0 0.0
    %1035 = vmatpush1.xpose.msra.mxu0 0.0
    %1036 = vmatprep.subr.mxu0 0.0
    %1037 = vmatpush1.xpose.msra.mxu0 0.0
    %1038 = vmatprep.subr.mxu0 0.0
    %1039 = vmatpush1.xpose.msra.mxu0 0.0
    %1040 = vmatprep.subr.mxu0 0.0
    %1041 = vmatpush1.xpose.msra.mxu0 0.0
    %1042 = vmatprep.subr.mxu0 0.0
    %1043 = vmatpush1.xpose.msra.mxu0 0.0
    %1044 = vmatprep.subr.mxu0 0.0
    %1045 = vmatpush1.xpose.msra.mxu0 0.0
    %1046 = vmatprep.subr.mxu0 0.0
    %1047 = vmatpush1.xpose.msra.mxu0 0.0
    %1048 = vmatprep.subr.mxu0 0.0
    %1049 = vmatpush1.xpose.msra.mxu0 0.0
    %1050 = vmatprep.subr.mxu0 0.0
    %1051 = vmatpush1.xpose.msra.mxu0 0.0
    %1052 = vmatprep.subr.mxu0 0.0
    %1053 = vmatpush1.xpose.msra.mxu0 0.0
    %1054 = vmatprep.subr.mxu0 0.0
    %1055 = vmatpush1.xpose.msra.mxu0 0.0
    %1056 = vmatprep.subr.mxu0 0.0
    %1057 = vmatpush1.xpose.msra.mxu0 0.0
    %1058 = vmatprep.subr.mxu0 0.0
    %1059 = vmatpush1.xpose.msra.mxu0 0.0
    %1060 = vmatprep.subr.mxu0 0.0
    %1061 = vmatpush1.xpose.msra.mxu0 0.0
    %1062 = vmatprep.subr.mxu0 0.0
    %1063 = vmatpush1.xpose.msra.mxu0 0.0
    %1064 = vmatprep.subr.mxu0 0.0
    %1065 = vmatpush1.xpose.msra.mxu0 0.0
    %1066 = vmatprep.subr.mxu0 0.0
    %1067 = vmatpush1.xpose.msra.mxu0 0.0
    %1068 = vmatprep.subr.mxu0 0.0
    %1069 = vmatpush1.xpose.msra.mxu0 0.0
    %1070 = vmatprep.subr.mxu0 0.0
    %1071 = vmatpush1.xpose.msra.mxu0 0.0
    %1072 = vmatprep.subr.mxu0 0.0
    %1073 = vmatpush1.xpose.msra.mxu0 0.0
    %1074 = vmatprep.subr.mxu0 0.0
    %1075 = vmatpush1.xpose.msra.mxu0 0.0
    %1076 = vmatprep.subr.mxu0 0.0
    %1077 = vmatpush1.xpose.msra.mxu0 0.0
    %1078 = vmatprep.subr.mxu0 0.0
    %1079 = vmatpush1.xpose.msra.mxu0 0.0
    %1080 = vmatprep.mubr.f32.mxu0 0.0
    %1081 = vmatmul.mubr.f32.gmra.mrb[0].mxu0 %v1012
    %v1082 = vpop.f32.mrb[0].mxu0
    %v1083 = vadd.f32 0.0, %v1082
    %v1084 = vpop.f32.mrb[0].mxu0
    %1085 = vdwg.mxu0
    %1086 = vrot.lane.b32.xlu0 %v180, 112
    %v1087 = vpop.permute.xlu0 %1086
    %1088 = vrot.lane.b32.xlu0 %v180, 80
    %v1089 = vpop.permute.xlu0 %1088
    %v1090 = vsel %vm186, %v1087, 0
    %v1092 = vsel %vm186, %v1089, 0
    %1094 = vmatprep.subr.mxu0 0.0
    %1095 = vmatpush1.xpose.msra.mxu0 %v1092
    %1096 = vmatprep.subr.mxu0 0.0
    %1097 = vmatpush1.xpose.msra.mxu0 0.0
    %1098 = vmatprep.subr.mxu0 0.0
    %1099 = vmatpush1.xpose.msra.mxu0 0.0
    %1100 = vmatprep.subr.mxu0 0.0
    %1101 = vmatpush1.xpose.msra.mxu0 0.0
    %1102 = vmatprep.subr.mxu0 0.0
    %1103 = vmatpush1.xpose.msra.mxu0 0.0
    %1104 = vmatprep.subr.mxu0 0.0
    %1105 = vmatpush1.xpose.msra.mxu0 0.0
    %1106 = vmatprep.subr.mxu0 0.0
    %1107 = vmatpush1.xpose.msra.mxu0 0.0
    %1108 = vmatprep.subr.mxu0 0.0
    %1109 = vmatpush1.xpose.msra.mxu0 0.0
    %1110 = vmatprep.subr.mxu0 0.0
    %1111 = vmatpush1.xpose.msra.mxu0 0.0
    %1112 = vmatprep.subr.mxu0 0.0
    %1113 = vmatpush1.xpose.msra.mxu0 0.0
    %1114 = vmatprep.subr.mxu0 0.0
    %1115 = vmatpush1.xpose.msra.mxu0 0.0
    %1116 = vmatprep.subr.mxu0 0.0
    %1117 = vmatpush1.xpose.msra.mxu0 0.0
    %1118 = vmatprep.subr.mxu0 0.0
    %1119 = vmatpush1.xpose.msra.mxu0 0.0
    %1120 = vmatprep.subr.mxu0 0.0
    %1121 = vmatpush1.xpose.msra.mxu0 0.0
    %1122 = vmatprep.subr.mxu0 0.0
    %1123 = vmatpush1.xpose.msra.mxu0 0.0
    %1124 = vmatprep.subr.mxu0 0.0
    %1125 = vmatpush1.xpose.msra.mxu0 0.0
    %1126 = vmatprep.subr.mxu0 0.0
    %1127 = vmatpush1.xpose.msra.mxu0 0.0
    %1128 = vmatprep.subr.mxu0 0.0
    %1129 = vmatpush1.xpose.msra.mxu0 0.0
    %1130 = vmatprep.subr.mxu0 0.0
    %1131 = vmatpush1.xpose.msra.mxu0 0.0
    %1132 = vmatprep.subr.mxu0 0.0
    %1133 = vmatpush1.xpose.msra.mxu0 0.0
    %1134 = vmatprep.subr.mxu0 0.0
    %1135 = vmatpush1.xpose.msra.mxu0 0.0
    %1136 = vmatprep.subr.mxu0 0.0
    %1137 = vmatpush1.xpose.msra.mxu0 0.0
    %1138 = vmatprep.subr.mxu0 0.0
    %1139 = vmatpush1.xpose.msra.mxu0 0.0
    %1140 = vmatprep.subr.mxu0 0.0
    %1141 = vmatpush1.xpose.msra.mxu0 0.0
    %1142 = vmatprep.subr.mxu0 0.0
    %1143 = vmatpush1.xpose.msra.mxu0 0.0
    %1144 = vmatprep.subr.mxu0 0.0
    %1145 = vmatpush1.xpose.msra.mxu0 0.0
    %1146 = vmatprep.subr.mxu0 0.0
    %1147 = vmatpush1.xpose.msra.mxu0 0.0
    %1148 = vmatprep.subr.mxu0 0.0
    %1149 = vmatpush1.xpose.msra.mxu0 0.0
    %1150 = vmatprep.subr.mxu0 0.0
    %1151 = vmatpush1.xpose.msra.mxu0 0.0
    %1152 = vmatprep.subr.mxu0 0.0
    %1153 = vmatpush1.xpose.msra.mxu0 0.0
    %1154 = vmatprep.subr.mxu0 0.0
    %1155 = vmatpush1.xpose.msra.mxu0 0.0
    %1156 = vmatprep.subr.mxu0 0.0
    %1157 = vmatpush1.xpose.msra.mxu0 0.0
    %1158 = vmatprep.mubr.f32.mxu0 0.0
    %1159 = vmatmul.mubr.f32.gmra.mrb[0].mxu0 %v1090
    %v1160 = vpop.f32.mrb[0].mxu0
    %v1161 = vadd.f32 0.0, %v1160
    %v1162 = vpop.f32.mrb[0].mxu0
    %1163 = vdwg.mxu0
    %v1164 = vmul.f32 %v1083, 0.35355338
    %v1165 = vmul.f32 %v1161, 0.35355338
    %v1166 = vsel %vm186, %v1164, -inf
    %1167 = vmax.xlane.f32.xlu0 %v1166
    %v1168 = vpop.xlane.xlu0 %1167
    %v1169 = vsel %vm186, %v1165, -inf
    %1170 = vmax.xlane.f32.xlu0 %v1169
    %v1171 = vpop.xlane.xlu0 %1170
    %v1172 = vsub.f32 %v1164, %v1168
    %v1173 = vsub.f32 %v1165, %v1171
    %v1174 = vmul.f32 %v1172, 1.442695
    %v1175 = vpow.pop %v1174
    %v1176 = vmul.f32 %v1173, 1.442695
    %v1177 = vpow.pop %v1176
    %v1178 = vsel %vm186, %v1175, 0.0
    %1179 = vadd.xlane.f32.xlu0 %v1178
    %v1180 = vpop.xlane.xlu0 %1179
    %v1181 = vsel %vm186, %v1177, 0.0
    %1182 = vadd.xlane.f32.xlu0 %v1181
    %v1183 = vpop.xlane.xlu0 %1182
    %v1184 = vrcp.pop %v1180
    %v1185 = vrcp.pop %v1183
    %v1186 = vmul.f32 %v1175, %v1184
    %v1187 = vmul.f32 %v1177, %v1185
    %1188 = vrot.lane.b32.xlu0 %v175, 48
    %v1189 = vpop.permute.xlu0 %1188
    %v1192 = vsel %vm186, %v1186, 0
    %1194 = vmatprep.subr.mxu0 0.0
    %1195 = vmatpush1.msra.mxu0 %v1189
    %1196 = vmatprep.subr.mxu0 0.0
    %1197 = vmatpush1.msra.mxu0 0.0
    %1198 = vmatprep.subr.mxu0 0.0
    %1199 = vmatpush1.msra.mxu0 0.0
    %1200 = vmatprep.subr.mxu0 0.0
    %1201 = vmatpush1.msra.mxu0 0.0
    %1202 = vmatprep.subr.mxu0 0.0
    %1203 = vmatpush1.msra.mxu0 0.0
    %1204 = vmatprep.subr.mxu0 0.0
    %1205 = vmatpush1.msra.mxu0 0.0
    %1206 = vmatprep.subr.mxu0 0.0
    %1207 = vmatpush1.msra.mxu0 0.0
    %1208 = vmatprep.subr.mxu0 0.0
    %1209 = vmatpush1.msra.mxu0 0.0
    %1210 = vmatprep.subr.mxu0 0.0
    %1211 = vmatpush1.msra.mxu0 0.0
    %1212 = vmatprep.subr.mxu0 0.0
    %1213 = vmatpush1.msra.mxu0 0.0
    %1214 = vmatprep.subr.mxu0 0.0
    %1215 = vmatpush1.msra.mxu0 0.0
    %1216 = vmatprep.subr.mxu0 0.0
    %1217 = vmatpush1.msra.mxu0 0.0
    %1218 = vmatprep.subr.mxu0 0.0
    %1219 = vmatpush1.msra.mxu0 0.0
    %1220 = vmatprep.subr.mxu0 0.0
    %1221 = vmatpush1.msra.mxu0 0.0
    %1222 = vmatprep.subr.mxu0 0.0
    %1223 = vmatpush1.msra.mxu0 0.0
    %1224 = vmatprep.subr.mxu0 0.0
    %1225 = vmatpush1.msra.mxu0 0.0
    %1226 = vmatprep.subr.mxu0 0.0
    %1227 = vmatpush1.msra.mxu0 0.0
    %1228 = vmatprep.subr.mxu0 0.0
    %1229 = vmatpush1.msra.mxu0 0.0
    %1230 = vmatprep.subr.mxu0 0.0
    %1231 = vmatpush1.msra.mxu0 0.0
    %1232 = vmatprep.subr.mxu0 0.0
    %1233 = vmatpush1.msra.mxu0 0.0
    %1234 = vmatprep.subr.mxu0 0.0
    %1235 = vmatpush1.msra.mxu0 0.0
    %1236 = vmatprep.subr.mxu0 0.0
    %1237 = vmatpush1.msra.mxu0 0.0
    %1238 = vmatprep.subr.mxu0 0.0
    %1239 = vmatpush1.msra.mxu0 0.0
    %1240 = vmatprep.subr.mxu0 0.0
    %1241 = vmatpush1.msra.mxu0 0.0
    %1242 = vmatprep.subr.mxu0 0.0
    %1243 = vmatpush1.msra.mxu0 0.0
    %1244 = vmatprep.subr.mxu0 0.0
    %1245 = vmatpush1.msra.mxu0 0.0
    %1246 = vmatprep.subr.mxu0 0.0
    %1247 = vmatpush1.msra.mxu0 0.0
    %1248 = vmatprep.subr.mxu0 0.0
    %1249 = vmatpush1.msra.mxu0 0.0
    %1250 = vmatprep.subr.mxu0 0.0
    %1251 = vmatpush1.msra.mxu0 0.0
    %1252 = vmatprep.subr.mxu0 0.0
    %1253 = vmatpush1.msra.mxu0 0.0
    %1254 = vmatprep.subr.mxu0 0.0
    %1255 = vmatpush1.msra.mxu0 0.0
    %1256 = vmatprep.subr.mxu0 0.0
    %1257 = vmatpush1.msra.mxu0 0.0
    %1258 = vmatprep.mubr.f32.mxu0 0.0
    %1259 = vmatmul.mubr.f32.gmra.mrb[0].mxu0 %v1192
    %v1260 = vpop.f32.mrb[0].mxu0
    %v1261 = vadd.f32 0.0, %v1260
    %v1262 = vpop.f32.mrb[0].mxu0
    %1263 = vdwg.mxu0
    %1264 = vrot.lane.b32.xlu0 %v180, 48
    %v1265 = vpop.permute.xlu0 %1264
    %v1268 = vsel %vm186, %v1187, 0
    %1270 = vmatprep.subr.mxu0 0.0
    %1271 = vmatpush1.msra.mxu0 %v1265
    %1272 = vmatprep.subr.mxu0 0.0
    %1273 = vmatpush1.msra.mxu0 0.0
    %1274 = vmatprep.subr.mxu0 0.0
    %1275 = vmatpush1.msra.mxu0 0.0
    %1276 = vmatprep.subr.mxu0 0.0
    %1277 = vmatpush1.msra.mxu0 0.0
    %1278 = vmatprep.subr.mxu0 0.0
    %1279 = vmatpush1.msra.mxu0 0.0
    %1280 = vmatprep.subr.mxu0 0.0
    %1281 = vmatpush1.msra.mxu0 0.0
    %1282 = vmatprep.subr.mxu0 0.0
    %1283 = vmatpush1.msra.mxu0 0.0
    %1284 = vmatprep.subr.mxu0 0.0
    %1285 = vmatpush1.msra.mxu0 0.0
    %1286 = vmatprep.subr.mxu0 0.0
    %1287 = vmatpush1.msra.mxu0 0.0
    %1288 = vmatprep.subr.mxu0 0.0
    %1289 = vmatpush1.msra.mxu0 0.0
    %1290 = vmatprep.subr.mxu0 0.0
    %1291 = vmatpush1.msra.mxu0 0.0
    %1292 = vmatprep.subr.mxu0 0.0
    %1293 = vmatpush1.msra.mxu0 0.0
    %1294 = vmatprep.subr.mxu0 0.0
    %1295 = vmatpush1.msra.mxu0 0.0
    %1296 = vmatprep.subr.mxu0 0.0
    %1297 = vmatpush1.msra.mxu0 0.0
    %1298 = vmatprep.subr.mxu0 0.0
    %1299 = vmatpush1.msra.mxu0 0.0
    %1300 = vmatprep.subr.mxu0 0.0
    %1301 = vmatpush1.msra.mxu0 0.0
    %1302 = vmatprep.subr.mxu0 0.0
    %1303 = vmatpush1.msra.mxu0 0.0
    %1304 = vmatprep.subr.mxu0 0.0
    %1305 = vmatpush1.msra.mxu0 0.0
    %1306 = vmatprep.subr.mxu0 0.0
    %1307 = vmatpush1.msra.mxu0 0.0
    %1308 = vmatprep.subr.mxu0 0.0
    %1309 = vmatpush1.msra.mxu0 0.0
    %1310 = vmatprep.subr.mxu0 0.0
    %1311 = vmatpush1.msra.mxu0 0.0
    %1312 = vmatprep.subr.mxu0 0.0
    %1313 = vmatpush1.msra.mxu0 0.0
    %1314 = vmatprep.subr.mxu0 0.0
    %1315 = vmatpush1.msra.mxu0 0.0
    %1316 = vmatprep.subr.mxu0 0.0
    %1317 = vmatpush1.msra.mxu0 0.0
    %1318 = vmatprep.subr.mxu0 0.0
    %1319 = vmatpush1.msra.mxu0 0.0
    %1320 = vmatprep.subr.mxu0 0.0
    %1321 = vmatpush1.msra.mxu0 0.0
    %1322 = vmatprep.subr.mxu0 0.0
    %1323 = vmatpush1.msra.mxu0 0.0
    %1324 = vmatprep.subr.mxu0 0.0
    %1325 = vmatpush1.msra.mxu0 0.0
    %1326 = vmatprep.subr.mxu0 0.0
    %1327 = vmatpush1.msra.mxu0 0.0
    %1328 = vmatprep.subr.mxu0 0.0
    %1329 = vmatpush1.msra.mxu0 0.0
    %1330 = vmatprep.subr.mxu0 0.0
    %1331 = vmatpush1.msra.mxu0 0.0
    %1332 = vmatprep.subr.mxu0 0.0
    %1333 = vmatpush1.msra.mxu0 0.0
    %1334 = vmatprep.mubr.f32.mxu0 0.0
    %1335 = vmatmul.mubr.f32.gmra.mrb[0].mxu0 %v1268
    %v1336 = vpop.f32.mrb[0].mxu0
    %v1337 = vadd.f32 0.0, %v1336
    %v1338 = vpop.f32.mrb[0].mxu0
    %1339 = vdwg.mxu0
    %v1341 = vsel %vm186, %v1261, 0
    %v1344 = vsel %vm186, %v1337, 0
    %1346 = vmatprep.subr.mxu0 0.0
    %1347 = vmatpush1.msra.mxu0 %v73
    %1348 = vmatprep.subr.mxu0 0.0
    %1349 = vmatpush1.msra.mxu0 0.0
    %1350 = vmatprep.subr.mxu0 0.0
    %1351 = vmatpush1.msra.mxu0 0.0
    %1352 = vmatprep.subr.mxu0 0.0
    %1353 = vmatpush1.msra.mxu0 0.0
    %1354 = vmatprep.subr.mxu0 0.0
    %1355 = vmatpush1.msra.mxu0 0.0
    %1356 = vmatprep.subr.mxu0 0.0
    %1357 = vmatpush1.msra.mxu0 0.0
    %1358 = vmatprep.subr.mxu0 0.0
    %1359 = vmatpush1.msra.mxu0 0.0
    %1360 = vmatprep.subr.mxu0 0.0
    %1361 = vmatpush1.msra.mxu0 0.0
    %1362 = vmatprep.subr.mxu0 0.0
    %1363 = vmatpush1.msra.mxu0 0.0
    %1364 = vmatprep.subr.mxu0 0.0
    %1365 = vmatpush1.msra.mxu0 0.0
    %1366 = vmatprep.subr.mxu0 0.0
    %1367 = vmatpush1.msra.mxu0 0.0
    %1368 = vmatprep.subr.mxu0 0.0
    %1369 = vmatpush1.msra.mxu0 0.0
    %1370 = vmatprep.subr.mxu0 0.0
    %1371 = vmatpush1.msra.mxu0 0.0
    %1372 = vmatprep.subr.mxu0 0.0
    %1373 = vmatpush1.msra.mxu0 0.0
    %1374 = vmatprep.subr.mxu0 0.0
    %1375 = vmatpush1.msra.mxu0 0.0
    %1376 = vmatprep.subr.mxu0 0.0
    %1377 = vmatpush1.msra.mxu0 0.0
    %1378 = vmatprep.subr.mxu0 0.0
    %1379 = vmatpush1.msra.mxu0 0.0
    %1380 = vmatprep.subr.mxu0 0.0
    %1381 = vmatpush1.msra.mxu0 0.0
    %1382 = vmatprep.subr.mxu0 0.0
    %1383 = vmatpush1.msra.mxu0 0.0
    %1384 = vmatprep.subr.mxu0 0.0
    %1385 = vmatpush1.msra.mxu0 0.0
    %1386 = vmatprep.subr.mxu0 0.0
    %1387 = vmatpush1.msra.mxu0 0.0
    %1388 = vmatprep.subr.mxu0 0.0
    %1389 = vmatpush1.msra.mxu0 0.0
    %1390 = vmatprep.subr.mxu0 0.0
    %1391 = vmatpush1.msra.mxu0 0.0
    %1392 = vmatprep.subr.mxu0 0.0
    %1393 = vmatpush1.msra.mxu0 0.0
    %1394 = vmatprep.subr.mxu0 0.0
    %1395 = vmatpush1.msra.mxu0 0.0
    %1396 = vmatprep.subr.mxu0 0.0
    %1397 = vmatpush1.msra.mxu0 0.0
    %1398 = vmatprep.subr.mxu0 0.0
    %1399 = vmatpush1.msra.mxu0 0.0
    %1400 = vmatprep.subr.mxu0 0.0
    %1401 = vmatpush1.msra.mxu0 0.0
    %1402 = vmatprep.subr.mxu0 0.0
    %1403 = vmatpush1.msra.mxu0 0.0
    %1404 = vmatprep.subr.mxu0 0.0
    %1405 = vmatpush1.msra.mxu0 0.0
    %1406 = vmatprep.subr.mxu0 0.0
    %1407 = vmatpush1.msra.mxu0 0.0
    %1408 = vmatprep.subr.mxu0 0.0
    %1409 = vmatpush1.msra.mxu0 0.0
    %1410 = vmatprep.mubr.f32.mxu0 0.0
    %1411 = vmatmul.mubr.f32.gmra.mrb[0].mxu0 %v1341
    %v1412 = vpop.f32.mrb[0].mxu0
    %v1413 = vadd.f32 0.0, %v1412
    %v1414 = vpop.f32.mrb[0].mxu0
    %1415 = vmatprep.mubr.f32.mxu0 0.0
    %1416 = vmatmul.mubr.f32.gmra.mrb[0].mxu0 %v1344
    %v1417 = vpop.f32.mrb[0].mxu0
    %v1418 = vadd.f32 0.0, %v1417
    %v1419 = vpop.f32.mrb[0].mxu0
    %1420 = vdwg.mxu0
    %v1421 = vadd.f32 %v1000, %v1413
    %v1422 = vadd.f32 %v1005, %v1418
    %1423 = vrot.lane.b32.xlu0 %v175, 104
    %v1424 = vpop.permute.xlu0 %1423
    %1425 = vrot.lane.b32.xlu0 %v175, 72
    %v1426 = vpop.permute.xlu0 %1425
    %v1427 = vsel %vm186, %v1424, 0
    %v1429 = vsel %vm186, %v1426, 0
    %1431 = vmatprep.subr.mxu0 0.0
    %1432 = vmatpush1.xpose.msra.mxu0 %v1429
    %1433 = vmatprep.subr.mxu0 0.0
    %1434 = vmatpush1.xpose.msra.mxu0 0.0
    %1435 = vmatprep.subr.mxu0 0.0
    %1436 = vmatpush1.xpose.msra.mxu0 0.0
    %1437 = vmatprep.subr.mxu0 0.0
    %1438 = vmatpush1.xpose.msra.mxu0 0.0
    %1439 = vmatprep.subr.mxu0 0.0
    %1440 = vmatpush1.xpose.msra.mxu0 0.0
    %1441 = vmatprep.subr.mxu0 0.0
    %1442 = vmatpush1.xpose.msra.mxu0 0.0
    %1443 = vmatprep.subr.mxu0 0.0
    %1444 = vmatpush1.xpose.msra.mxu0 0.0
    %1445 = vmatprep.subr.mxu0 0.0
    %1446 = vmatpush1.xpose.msra.mxu0 0.0
    %1447 = vmatprep.subr.mxu0 0.0
    %1448 = vmatpush1.xpose.msra.mxu0 0.0
    %1449 = vmatprep.subr.mxu0 0.0
    %1450 = vmatpush1.xpose.msra.mxu0 0.0
    %1451 = vmatprep.subr.mxu0 0.0
    %1452 = vmatpush1.xpose.msra.mxu0 0.0
    %1453 = vmatprep.subr.mxu0 0.0
    %1454 = vmatpush1.xpose.msra.mxu0 0.0
    %1455 = vmatprep.subr.mxu0 0.0
    %1456 = vmatpush1.xpose.msra.mxu0 0.0
    %1457 = vmatprep.subr.mxu0 0.0
    %1458 = vmatpush1.xpose.msra.mxu0 0.0
    %1459 = vmatprep.subr.mxu0 0.0
    %1460 = vmatpush1.xpose.msra.mxu0 0.0
    %1461 = vmatprep.subr.mxu0 0.0
    %1462 = vmatpush1.xpose.msra.mxu0 0.0
    %1463 = vmatprep.subr.mxu0 0.0
    %1464 = vmatpush1.xpose.msra.mxu0 0.0
    %1465 = vmatprep.subr.mxu0 0.0
    %1466 = vmatpush1.xpose.msra.mxu0 0.0
    %1467 = vmatprep.subr.mxu0 0.0
    %1468 = vmatpush1.xpose.msra.mxu0 0.0
    %1469 = vmatprep.subr.mxu0 0.0
    %1470 = vmatpush1.xpose.msra.mxu0 0.0
    %1471 = vmatprep.subr.mxu0 0.0
    %1472 = vmatpush1.xpose.msra.mxu0 0.0
    %1473 = vmatprep.subr.mxu0 0.0
    %1474 = vmatpush1.xpose.msra.mxu0 0.0
    %1475 = vmatprep.subr.mxu0 0.0
    %1476 = vmatpush1.xpose.msra.mxu0 0.0
    %1477 = vmatprep.subr.mxu0 0.0
    %1478 = vmatpush1.xpose.msra.mxu0 0.0
    %1479 = vmatprep.subr.mxu0 0.0
    %1480 = vmatpush1.xpose.msra.mxu0 0.0
    %1481 = vmatprep.subr.mxu0 0.0
    %1482 = vmatpush1.xpose.msra.mxu0 0.0
    %1483 = vmatprep.subr.mxu0 0.0
    %1484 = vmatpush1.xpose.msra.mxu0 0.0
    %1485 = vmatprep.subr.mxu0 0.0
    %1486 = vmatpush1.xpose.msra.mxu0 0.0
    %1487 = vmatprep.subr.mxu0 0.0
    %1488 = vmatpush1.xpose.msra.mxu0 0.0
    %1489 = vmatprep.subr.mxu0 0.0
    %1490 = vmatpush1.xpose.msra.mxu0 0.0
    %1491 = vmatprep.subr.mxu0 0.0
    %1492 = vmatpush1.xpose.msra.mxu0 0.0
    %1493 = vmatprep.subr.mxu0 0.0
    %1494 = vmatpush1.xpose.msra.mxu0 0.0
    %1495 = vmatprep.mubr.f32.mxu0 0.0
    %1496 = vmatmul.mubr.f32.gmra.mrb[0].mxu0 %v1427
    %v1497 = vpop.f32.mrb[0].mxu0
    %v1498 = vadd.f32 0.0, %v1497
    %v1499 = vpop.f32.mrb[0].mxu0
    %1500 = vdwg.mxu0
    %1501 = vrot.lane.b32.xlu0 %v180, 104
    %v1502 = vpop.permute.xlu0 %1501
    %1503 = vrot.lane.b32.xlu0 %v180, 72
    %v1504 = vpop.permute.xlu0 %1503
    %v1505 = vsel %vm186, %v1502, 0
    %v1507 = vsel %vm186, %v1504, 0
    %1509 = vmatprep.subr.mxu0 0.0
    %1510 = vmatpush1.xpose.msra.mxu0 %v1507
    %1511 = vmatprep.subr.mxu0 0.0
    %1512 = vmatpush1.xpose.msra.mxu0 0.0
    %1513 = vmatprep.subr.mxu0 0.0
    %1514 = vmatpush1.xpose.msra.mxu0 0.0
    %1515 = vmatprep.subr.mxu0 0.0
    %1516 = vmatpush1.xpose.msra.mxu0 0.0
    %1517 = vmatprep.subr.mxu0 0.0
    %1518 = vmatpush1.xpose.msra.mxu0 0.0
    %1519 = vmatprep.subr.mxu0 0.0
    %1520 = vmatpush1.xpose.msra.mxu0 0.0
    %1521 = vmatprep.subr.mxu0 0.0
    %1522 = vmatpush1.xpose.msra.mxu0 0.0
    %1523 = vmatprep.subr.mxu0 0.0
    %1524 = vmatpush1.xpose.msra.mxu0 0.0
    %1525 = vmatprep.subr.mxu0 0.0
    %1526 = vmatpush1.xpose.msra.mxu0 0.0
    %1527 = vmatprep.subr.mxu0 0.0
    %1528 = vmatpush1.xpose.msra.mxu0 0.0
    %1529 = vmatprep.subr.mxu0 0.0
    %1530 = vmatpush1.xpose.msra.mxu0 0.0
    %1531 = vmatprep.subr.mxu0 0.0
    %1532 = vmatpush1.xpose.msra.mxu0 0.0
    %1533 = vmatprep.subr.mxu0 0.0
    %1534 = vmatpush1.xpose.msra.mxu0 0.0
    %1535 = vmatprep.subr.mxu0 0.0
    %1536 = vmatpush1.xpose.msra.mxu0 0.0
    %1537 = vmatprep.subr.mxu0 0.0
    %1538 = vmatpush1.xpose.msra.mxu0 0.0
    %1539 = vmatprep.subr.mxu0 0.0
    %1540 = vmatpush1.xpose.msra.mxu0 0.0
    %1541 = vmatprep.subr.mxu0 0.0
    %1542 = vmatpush1.xpose.msra.mxu0 0.0
    %1543 = vmatprep.subr.mxu0 0.0
    %1544 = vmatpush1.xpose.msra.mxu0 0.0
    %1545 = vmatprep.subr.mxu0 0.0
    %1546 = vmatpush1.xpose.msra.mxu0 0.0
    %1547 = vmatprep.subr.mxu0 0.0
    %1548 = vmatpush1.xpose.msra.mxu0 0.0
    %1549 = vmatprep.subr.mxu0 0.0
    %1550 = vmatpush1.xpose.msra.mxu0 0.0
    %1551 = vmatprep.subr.mxu0 0.0
    %1552 = vmatpush1.xpose.msra.mxu0 0.0
    %1553 = vmatprep.subr.mxu0 0.0
    %1554 = vmatpush1.xpose.msra.mxu0 0.0
    %1555 = vmatprep.subr.mxu0 0.0
    %1556 = vmatpush1.xpose.msra.mxu0 0.0
    %1557 = vmatprep.subr.mxu0 0.0
    %1558 = vmatpush1.xpose.msra.mxu0 0.0
    %1559 = vmatprep.subr.mxu0 0.0
    %1560 = vmatpush1.xpose.msra.mxu0 0.0
    %1561 = vmatprep.subr.mxu0 0.0
    %1562 = vmatpush1.xpose.msra.mxu0 0.0
    %1563 = vmatprep.subr.mxu0 0.0
    %1564 = vmatpush1.xpose.msra.mxu0 0.0
    %1565 = vmatprep.subr.mxu0 0.0
    %1566 = vmatpush1.xpose.msra.mxu0 0.0
    %1567 = vmatprep.subr.mxu0 0.0
    %1568 = vmatpush1.xpose.msra.mxu0 0.0
    %1569 = vmatprep.subr.mxu0 0.0
    %1570 = vmatpush1.xpose.msra.mxu0 0.0
    %1571 = vmatprep.subr.mxu0 0.0
    %1572 = vmatpush1.xpose.msra.mxu0 0.0
    %1573 = vmatprep.mubr.f32.mxu0 0.0
    %1574 = vmatmul.mubr.f32.gmra.mrb[0].mxu0 %v1505
    %v1575 = vpop.f32.mrb[0].mxu0
    %v1576 = vadd.f32 0.0, %v1575
    %v1577 = vpop.f32.mrb[0].mxu0
    %1578 = vdwg.mxu0
    %v1579 = vmul.f32 %v1498, 0.35355338
    %v1580 = vmul.f32 %v1576, 0.35355338
    %v1581 = vsel %vm186, %v1579, -inf
    %1582 = vmax.xlane.f32.xlu0 %v1581
    %v1583 = vpop.xlane.xlu0 %1582
    %v1584 = vsel %vm186, %v1580, -inf
    %1585 = vmax.xlane.f32.xlu0 %v1584
    %v1586 = vpop.xlane.xlu0 %1585
    %v1587 = vsub.f32 %v1579, %v1583
    %v1588 = vsub.f32 %v1580, %v1586
    %v1589 = vmul.f32 %v1587, 1.442695
    %v1590 = vpow.pop %v1589
    %v1591 = vmul.f32 %v1588, 1.442695
    %v1592 = vpow.pop %v1591
    %v1593 = vsel %vm186, %v1590, 0.0
    %1594 = vadd.xlane.f32.xlu0 %v1593
    %v1595 = vpop.xlane.xlu0 %1594
    %v1596 = vsel %vm186, %v1592, 0.0
    %1597 = vadd.xlane.f32.xlu0 %v1596
    %v1598 = vpop.xlane.xlu0 %1597
    %v1599 = vrcp.pop %v1595
    %v1600 = vrcp.pop %v1598
    %v1601 = vmul.f32 %v1590, %v1599
    %v1602 = vmul.f32 %v1592, %v1600
    %1603 = vrot.lane.b32.xlu0 %v175, 40
    %v1604 = vpop.permute.xlu0 %1603
    %v1607 = vsel %vm186, %v1601, 0
    %1609 = vmatprep.subr.mxu0 0.0
    %1610 = vmatpush1.msra.mxu0 %v1604
    %1611 = vmatprep.subr.mxu0 0.0
    %1612 = vmatpush1.msra.mxu0 0.0
    %1613 = vmatprep.subr.mxu0 0.0
    %1614 = vmatpush1.msra.mxu0 0.0
    %1615 = vmatprep.subr.mxu0 0.0
    %1616 = vmatpush1.msra.mxu0 0.0
    %1617 = vmatprep.subr.mxu0 0.0
    %1618 = vmatpush1.msra.mxu0 0.0
    %1619 = vmatprep.subr.mxu0 0.0
    %1620 = vmatpush1.msra.mxu0 0.0
    %1621 = vmatprep.subr.mxu0 0.0
    %1622 = vmatpush1.msra.mxu0 0.0
    %1623 = vmatprep.subr.mxu0 0.0
    %1624 = vmatpush1.msra.mxu0 0.0
    %1625 = vmatprep.subr.mxu0 0.0
    %1626 = vmatpush1.msra.mxu0 0.0
    %1627 = vmatprep.subr.mxu0 0.0
    %1628 = vmatpush1.msra.mxu0 0.0
    %1629 = vmatprep.subr.mxu0 0.0
    %1630 = vmatpush1.msra.mxu0 0.0
    %1631 = vmatprep.subr.mxu0 0.0
    %1632 = vmatpush1.msra.mxu0 0.0
    %1633 = vmatprep.subr.mxu0 0.0
    %1634 = vmatpush1.msra.mxu0 0.0
    %1635 = vmatprep.subr.mxu0 0.0
    %1636 = vmatpush1.msra.mxu0 0.0
    %1637 = vmatprep.subr.mxu0 0.0
    %1638 = vmatpush1.msra.mxu0 0.0
    %1639 = vmatprep.subr.mxu0 0.0
    %1640 = vmatpush1.msra.mxu0 0.0
    %1641 = vmatprep.subr.mxu0 0.0
    %1642 = vmatpush1.msra.mxu0 0.0
    %1643 = vmatprep.subr.mxu0 0.0
    %1644 = vmatpush1.msra.mxu0 0.0
    %1645 = vmatprep.subr.mxu0 0.0
    %1646 = vmatpush1.msra.mxu0 0.0
    %1647 = vmatprep.subr.mxu0 0.0
    %1648 = vmatpush1.msra.mxu0 0.0
    %1649 = vmatprep.subr.mxu0 0.0
    %1650 = vmatpush1.msra.mxu0 0.0
    %1651 = vmatprep.subr.mxu0 0.0
    %1652 = vmatpush1.msra.mxu0 0.0
    %1653 = vmatprep.subr.mxu0 0.0
    %1654 = vmatpush1.msra.mxu0 0.0
    %1655 = vmatprep.subr.mxu0 0.0
    %1656 = vmatpush1.msra.mxu0 0.0
    %1657 = vmatprep.subr.mxu0 0.0
    %1658 = vmatpush1.msra.mxu0 0.0
    %1659 = vmatprep.subr.mxu0 0.0
    %1660 = vmatpush1.msra.mxu0 0.0
    %1661 = vmatprep.subr.mxu0 0.0
    %1662 = vmatpush1.msra.mxu0 0.0
    %1663 = vmatprep.subr.mxu0 0.0
    %1664 = vmatpush1.msra.mxu0 0.0
    %1665 = vmatprep.subr.mxu0 0.0
    %1666 = vmatpush1.msra.mxu0 0.0
    %1667 = vmatprep.subr.mxu0 0.0
    %1668 = vmatpush1.msra.mxu0 0.0
    %1669 = vmatprep.subr.mxu0 0.0
    %1670 = vmatpush1.msra.mxu0 0.0
    %1671 = vmatprep.subr.mxu0 0.0
    %1672 = vmatpush1.msra.mxu0 0.0
    %1673 = vmatprep.mubr.f32.mxu0 0.0
    %1674 = vmatmul.mubr.f32.gmra.mrb[0].mxu0 %v1607
    %v1675 = vpop.f32.mrb[0].mxu0
    %v1676 = vadd.f32 0.0, %v1675
    %v1677 = vpop.f32.mrb[0].mxu0
    %1678 = vdwg.mxu0
    %1679 = vrot.lane.b32.xlu0 %v180, 40
    %v1680 = vpop.permute.xlu0 %1679
    %v1683 = vsel %vm186, %v1602, 0
    %1685 = vmatprep.subr.mxu0 0.0
    %1686 = vmatpush1.msra.mxu0 %v1680
    %1687 = vmatprep.subr.mxu0 0.0
    %1688 = vmatpush1.msra.mxu0 0.0
    %1689 = vmatprep.subr.mxu0 0.0
    %1690 = vmatpush1.msra.mxu0 0.0
    %1691 = vmatprep.subr.mxu0 0.0
    %1692 = vmatpush1.msra.mxu0 0.0
    %1693 = vmatprep.subr.mxu0 0.0
    %1694 = vmatpush1.msra.mxu0 0.0
    %1695 = vmatprep.subr.mxu0 0.0
    %1696 = vmatpush1.msra.mxu0 0.0
    %1697 = vmatprep.subr.mxu0 0.0
    %1698 = vmatpush1.msra.mxu0 0.0
    %1699 = vmatprep.subr.mxu0 0.0
    %1700 = vmatpush1.msra.mxu0 0.0
    %1701 = vmatprep.subr.mxu0 0.0
    %1702 = vmatpush1.msra.mxu0 0.0
    %1703 = vmatprep.subr.mxu0 0.0
    %1704 = vmatpush1.msra.mxu0 0.0
    %1705 = vmatprep.subr.mxu0 0.0
    %1706 = vmatpush1.msra.mxu0 0.0
    %1707 = vmatprep.subr.mxu0 0.0
    %1708 = vmatpush1.msra.mxu0 0.0
    %1709 = vmatprep.subr.mxu0 0.0
    %1710 = vmatpush1.msra.mxu0 0.0
    %1711 = vmatprep.subr.mxu0 0.0
    %1712 = vmatpush1.msra.mxu0 0.0
    %1713 = vmatprep.subr.mxu0 0.0
    %1714 = vmatpush1.msra.mxu0 0.0
    %1715 = vmatprep.subr.mxu0 0.0
    %1716 = vmatpush1.msra.mxu0 0.0
    %1717 = vmatprep.subr.mxu0 0.0
    %1718 = vmatpush1.msra.mxu0 0.0
    %1719 = vmatprep.subr.mxu0 0.0
    %1720 = vmatpush1.msra.mxu0 0.0
    %1721 = vmatprep.subr.mxu0 0.0
    %1722 = vmatpush1.msra.mxu0 0.0
    %1723 = vmatprep.subr.mxu0 0.0
    %1724 = vmatpush1.msra.mxu0 0.0
    %1725 = vmatprep.subr.mxu0 0.0
    %1726 = vmatpush1.msra.mxu0 0.0
    %1727 = vmatprep.subr.mxu0 0.0
    %1728 = vmatpush1.msra.mxu0 0.0
    %1729 = vmatprep.subr.mxu0 0.0
    %1730 = vmatpush1.msra.mxu0 0.0
    %1731 = vmatprep.subr.mxu0 0.0
    %1732 = vmatpush1.msra.mxu0 0.0
    %1733 = vmatprep.subr.mxu0 0.0
    %1734 = vmatpush1.msra.mxu0 0.0
    %1735 = vmatprep.subr.mxu0 0.0
    %1736 = vmatpush1.msra.mxu0 0.0
    %1737 = vmatprep.subr.mxu0 0.0
    %1738 = vmatpush1.msra.mxu0 0.0
    %1739 = vmatprep.subr.mxu0 0.0
    %1740 = vmatpush1.msra.mxu0 0.0
    %1741 = vmatprep.subr.mxu0 0.0
    %1742 = vmatpush1.msra.mxu0 0.0
    %1743 = vmatprep.subr.mxu0 0.0
    %1744 = vmatpush1.msra.mxu0 0.0
    %1745 = vmatprep.subr.mxu0 0.0
    %1746 = vmatpush1.msra.mxu0 0.0
    %1747 = vmatprep.subr.mxu0 0.0
    %1748 = vmatpush1.msra.mxu0 0.0
    %1749 = vmatprep.mubr.f32.mxu0 0.0
    %1750 = vmatmul.mubr.f32.gmra.mrb[0].mxu0 %v1683
    %v1751 = vpop.f32.mrb[0].mxu0
    %v1752 = vadd.f32 0.0, %v1751
    %v1753 = vpop.f32.mrb[0].mxu0
    %1754 = vdwg.mxu0
    %v1756 = vsel %vm186, %v1676, 0
    %v1759 = vsel %vm186, %v1752, 0
    %1761 = vmatprep.subr.mxu0 0.0
    %1762 = vmatpush1.msra.mxu0 %v74
    %1763 = vmatprep.subr.mxu0 0.0
    %1764 = vmatpush1.msra.mxu0 0.0
    %1765 = vmatprep.subr.mxu0 0.0
    %1766 = vmatpush1.msra.mxu0 0.0
    %1767 = vmatprep.subr.mxu0 0.0
    %1768 = vmatpush1.msra.mxu0 0.0
    %1769 = vmatprep.subr.mxu0 0.0
    %1770 = vmatpush1.msra.mxu0 0.0
    %1771 = vmatprep.subr.mxu0 0.0
    %1772 = vmatpush1.msra.mxu0 0.0
    %1773 = vmatprep.subr.mxu0 0.0
    %1774 = vmatpush1.msra.mxu0 0.0
    %1775 = vmatprep.subr.mxu0 0.0
    %1776 = vmatpush1.msra.mxu0 0.0
    %1777 = vmatprep.subr.mxu0 0.0
    %1778 = vmatpush1.msra.mxu0 0.0
    %1779 = vmatprep.subr.mxu0 0.0
    %1780 = vmatpush1.msra.mxu0 0.0
    %1781 = vmatprep.subr.mxu0 0.0
    %1782 = vmatpush1.msra.mxu0 0.0
    %1783 = vmatprep.subr.mxu0 0.0
    %1784 = vmatpush1.msra.mxu0 0.0
    %1785 = vmatprep.subr.mxu0 0.0
    %1786 = vmatpush1.msra.mxu0 0.0
    %1787 = vmatprep.subr.mxu0 0.0
    %1788 = vmatpush1.msra.mxu0 0.0
    %1789 = vmatprep.subr.mxu0 0.0
    %1790 = vmatpush1.msra.mxu0 0.0
    %1791 = vmatprep.subr.mxu0 0.0
    %1792 = vmatpush1.msra.mxu0 0.0
    %1793 = vmatprep.subr.mxu0 0.0
    %1794 = vmatpush1.msra.mxu0 0.0
    %1795 = vmatprep.subr.mxu0 0.0
    %1796 = vmatpush1.msra.mxu0 0.0
    %1797 = vmatprep.subr.mxu0 0.0
    %1798 = vmatpush1.msra.mxu0 0.0
    %1799 = vmatprep.subr.mxu0 0.0
    %1800 = vmatpush1.msra.mxu0 0.0
    %1801 = vmatprep.subr.mxu0 0.0
    %1802 = vmatpush1.msra.mxu0 0.0
    %1803 = vmatprep.subr.mxu0 0.0
    %1804 = vmatpush1.msra.mxu0 0.0
    %1805 = vmatprep.subr.mxu0 0.0
    %1806 = vmatpush1.msra.mxu0 0.0
    %1807 = vmatprep.subr.mxu0 0.0
    %1808 = vmatpush1.msra.mxu0 0.0
    %1809 = vmatprep.subr.mxu0 0.0
    %1810 = vmatpush1.msra.mxu0 0.0
    %1811 = vmatprep.subr.mxu0 0.0
    %1812 = vmatpush1.msra.mxu0 0.0
    %1813 = vmatprep.subr.mxu0 0.0
    %1814 = vmatpush1.msra.mxu0 0.0
    %1815 = vmatprep.subr.mxu0 0.0
    %1816 = vmatpush1.msra.mxu0 0.0
    %1817 = vmatprep.subr.mxu0 0.0
    %1818 = vmatpush1.msra.mxu0 0.0
    %1819 = vmatprep.subr.mxu0 0.0
    %1820 = vmatpush1.msra.mxu0 0.0
    %1821 = vmatprep.subr.mxu0 0.0
    %1822 = vmatpush1.msra.mxu0 0.0
    %1823 = vmatprep.subr.mxu0 0.0
    %1824 = vmatpush1.msra.mxu0 0.0
    %1825 = vmatprep.mubr.f32.mxu0 0.0
    %1826 = vmatmul.mubr.f32.gmra.mrb[0].mxu0 %v1756
    %v1827 = vpop.f32.mrb[0].mxu0
    %v1828 = vadd.f32 0.0, %v1827
    %v1829 = vpop.f32.mrb[0].mxu0
    %1830 = vmatprep.mubr.f32.mxu0 0.0
    %1831 = vmatmul.mubr.f32.gmra.mrb[0].mxu0 %v1759
    %v1832 = vpop.f32.mrb[0].mxu0
    %v1833 = vadd.f32 0.0, %v1832
    %v1834 = vpop.f32.mrb[0].mxu0
    %1835 = vdwg.mxu0
    %v1836 = vadd.f32 %v1421, %v1828
    %v1837 = vadd.f32 %v1422, %v1833
    %v1839 = vlaneseq
    %v1840 = vshrl.u32 %v1839, 7
    %v1841 = vsub.s32 0, %v1840
    %v1842 = vrot.slane %v88, %v1841
    %v1844 = vadd.f32 %v1836, %v1842
    %v1845 = vadd.f32 %v1837, %v1842
    %v1846 = vadd.f32 %v65, %v1844
    %v1847 = vadd.f32 %v66, %v1845
    %v1848 = vsel %vm101, %v1846, 0.0
    %1849 = vadd.xlane.f32.xlu0 %v1848
    %v1850 = vpop.xlane.xlu0 %1849
    %v1851 = vsel %vm101, %v1847, 0.0
    %1852 = vadd.xlane.f32.xlu0 %v1851
    %v1853 = vpop.xlane.xlu0 %1852
    %v1854 = vrcp.pop 32.0
    %v1855 = vmul.f32 %v1850, %v1854
    %v1856 = vmul.f32 %v1853, %v1854
    %v1857 = vsub.f32 %v1846, %v1855
    %v1858 = vsub.f32 %v1847, %v1856
    %v1859 = vmul.f32 %v1857, %v1857
    %v1860 = vmul.f32 %v1858, %v1858
    %v1861 = vsel %vm101, %v1859, 0.0
    %1862 = vadd.xlane.f32.xlu0 %v1861
    %v1863 = vpop.xlane.xlu0 %1862
    %v1864 = vsel %vm101, %v1860, 0.0
    %1865 = vadd.xlane.f32.xlu0 %v1864
    %v1866 = vpop.xlane.xlu0 %1865
    %v1867 = vmul.f32 %v1863, %v1854
    %v1868 = vmul.f32 %v1866, %v1854
    %v1869 = vadd.f32 %v1867, 1e-05
    %v1870 = vadd.f32 %v1868, 1e-05
    %v1871 = vrsqrt.pop %v1869
    %v1872 = vrsqrt.pop %v1870
    %v1873 = vmul.f32 %v1857, %v1871
    %v1874 = vmul.f32 %v1858, %v1872
    %v1876 = vlaneseq
    %v1877 = vshrl.u32 %v1876, 7
    %v1878 = vsub.s32 0, %v1877
    %v1879 = vrot.slane %v91, %v1878
    %v1881 = vmul.f32 %v1873, %v1879
    %v1882 = vmul.f32 %v1874, %v1879
    %v1884 = vlaneseq
    %v1885 = vshrl.u32 %v1884, 7
    %v1886 = vsub.s32 0, %v1885
    %v1887 = vrot.slane %v92, %v1886
    %v1889 = vadd.f32 %v1881, %v1887
    %v1890 = vadd.f32 %v1882, %v1887
    %v1892 = vlaneseq
    %v1893 = vshrl.u32 %v1892, 7
    %v1894 = vsub.s32 0, %v1893
    %v1895 = vrot.slane %v89, %v1894
    %v1898 = vsel %vm101, %v1889, 0
    %v1901 = vsel %vm101, %v1890, 0
    %1903 = vmatprep.subr.mxu0 0.0
    %1904 = vmatpush1.msra.mxu0 %v75
    %1905 = vmatprep.subr.mxu0 0.0
    %1906 = vmatpush1.msra.mxu0 %v76
    %1907 = vmatprep.subr.mxu0 0.0
    %1908 = vmatpush1.msra.mxu0 %v77
    %1909 = vmatprep.subr.mxu0 0.0
    %1910 = vmatpush1.msra.mxu0 %v78
    %1911 = vmatprep.subr.mxu0 0.0
    %1912 = vmatpush1.msra.mxu0 0.0
    %1913 = vmatprep.subr.mxu0 0.0
    %1914 = vmatpush1.msra.mxu0 0.0
    %1915 = vmatprep.subr.mxu0 0.0
    %1916 = vmatpush1.msra.mxu0 0.0
    %1917 = vmatprep.subr.mxu0 0.0
    %1918 = vmatpush1.msra.mxu0 0.0
    %1919 = vmatprep.subr.mxu0 0.0
    %1920 = vmatpush1.msra.mxu0 0.0
    %1921 = vmatprep.subr.mxu0 0.0
    %1922 = vmatpush1.msra.mxu0 0.0
    %1923 = vmatprep.subr.mxu0 0.0
    %1924 = vmatpush1.msra.mxu0 0.0
    %1925 = vmatprep.subr.mxu0 0.0
    %1926 = vmatpush1.msra.mxu0 0.0
    %1927 = vmatprep.subr.mxu0 0.0
    %1928 = vmatpush1.msra.mxu0 0.0
    %1929 = vmatprep.subr.mxu0 0.0
    %1930 = vmatpush1.msra.mxu0 0.0
    %1931 = vmatprep.subr.mxu0 0.0
    %1932 = vmatpush1.msra.mxu0 0.0
    %1933 = vmatprep.subr.mxu0 0.0
    %1934 = vmatpush1.msra.mxu0 0.0
    %1935 = vmatprep.subr.mxu0 0.0
    %1936 = vmatpush1.msra.mxu0 0.0
    %1937 = vmatprep.subr.mxu0 0.0
    %1938 = vmatpush1.msra.mxu0 0.0
    %1939 = vmatprep.subr.mxu0 0.0
    %1940 = vmatpush1.msra.mxu0 0.0
    %1941 = vmatprep.subr.mxu0 0.0
    %1942 = vmatpush1.msra.mxu0 0.0
    %1943 = vmatprep.subr.mxu0 0.0
    %1944 = vmatpush1.msra.mxu0 0.0
    %1945 = vmatprep.subr.mxu0 0.0
    %1946 = vmatpush1.msra.mxu0 0.0
    %1947 = vmatprep.subr.mxu0 0.0
    %1948 = vmatpush1.msra.mxu0 0.0
    %1949 = vmatprep.subr.mxu0 0.0
    %1950 = vmatpush1.msra.mxu0 0.0
    %1951 = vmatprep.subr.mxu0 0.0
    %1952 = vmatpush1.msra.mxu0 0.0
    %1953 = vmatprep.subr.mxu0 0.0
    %1954 = vmatpush1.msra.mxu0 0.0
    %1955 = vmatprep.subr.mxu0 0.0
    %1956 = vmatpush1.msra.mxu0 0.0
    %1957 = vmatprep.subr.mxu0 0.0
    %1958 = vmatpush1.msra.mxu0 0.0
    %1959 = vmatprep.subr.mxu0 0.0
    %1960 = vmatpush1.msra.mxu0 0.0
    %1961 = vmatprep.subr.mxu0 0.0
    %1962 = vmatpush1.msra.mxu0 0.0
    %1963 = vmatprep.subr.mxu0 0.0
    %1964 = vmatpush1.msra.mxu0 0.0
    %1965 = vmatprep.subr.mxu0 0.0
    %1966 = vmatpush1.msra.mxu0 0.0
    %1967 = vmatprep.mubr.f32.mxu0 0.0
    %1968 = vmatmul.mubr.f32.gmra.mrb[0].mxu0 %v1898
    %v1969 = vpop.f32.mrb[0].mxu0
    %v1970 = vadd.f32 %v1895, %v1969
    %v1971 = vpop.f32.mrb[0].mxu0
    %1972 = vmatprep.mubr.f32.mxu0 0.0
    %1973 = vmatmul.mubr.f32.gmra.mrb[0].mxu0 %v1901
    %v1974 = vpop.f32.mrb[0].mxu0
    %v1975 = vadd.f32 %v1895, %v1974
    %v1976 = vpop.f32.mrb[0].mxu0
    %1977 = vdwg.mxu0
    %v1978 = vmax.f32 %v1970, 0.0
    %v1979 = vmax.f32 %v1975, 0.0
    %v1981 = vlaneseq
    %v1982 = vshrl.u32 %v1981, 7
    %v1983 = vsub.s32 0, %v1982
    %v1984 = vrot.slane %v90, %v1983
    %vm1986 = vcmask 523264
    %v1988 = vsel %vm1986, %v1978, 0
    %v1991 = vsel %vm1986, %v1979, 0
    %1993 = vmatprep.subr.mxu0 0.0
    %1994 = vmatpush1.msra.mxu0 %v79
    %1995 = vmatprep.subr.mxu0 0.0
    %1996 = vmatpush1.msra.mxu0 %v80
    %1997 = vmatprep.subr.mxu0 0.0
    %1998 = vmatpush1.msra.mxu0 %v81
    %1999 = vmatprep.subr.mxu0 0.0
    %2000 = vmatpush1.msra.mxu0 %v82
    %2001 = vmatprep.subr.mxu0 0.0
    %2002 = vmatpush1.msra.mxu0 %v83
    %2003 = vmatprep.subr.mxu0 0.0
    %2004 = vmatpush1.msra.mxu0 %v84
    %2005 = vmatprep.subr.mxu0 0.0
    %2006 = vmatpush1.msra.mxu0 %v85
    %2007 = vmatprep.subr.mxu0 0.0
    %2008 = vmatpush1.msra.mxu0 %v86
    %2009 = vmatprep.subr.mxu0 0.0
    %2010 = vmatpush1.msra.mxu0 0.0
    %2011 = vmatprep.subr.mxu0 0.0
    %2012 = vmatpush1.msra.mxu0 0.0
    %2013 = vmatprep.subr.mxu0 0.0
    %2014 = vmatpush1.msra.mxu0 0.0
    %2015 = vmatprep.subr.mxu0 0.0
    %2016 = vmatpush1.msra.mxu0 0.0
    %2017 = vmatprep.subr.mxu0 0.0
    %2018 = vmatpush1.msra.mxu0 0.0
    %2019 = vmatprep.subr.mxu0 0.0
    %2020 = vmatpush1.msra.mxu0 0.0
    %2021 = vmatprep.subr.mxu0 0.0
    %2022 = vmatpush1.msra.mxu0 0.0
    %2023 = vmatprep.subr.mxu0 0.0
    %2024 = vmatpush1.msra.mxu0 0.0
    %2025 = vmatprep.subr.mxu0 0.0
    %2026 = vmatpush1.msra.mxu0 0.0
    %2027 = vmatprep.subr.mxu0 0.0
    %2028 = vmatpush1.msra.mxu0 0.0
    %2029 = vmatprep.subr.mxu0 0.0
    %2030 = vmatpush1.msra.mxu0 0.0
    %2031 = vmatprep.subr.mxu0 0.0
    %2032 = vmatpush1.msra.mxu0 0.0
    %2033 = vmatprep.subr.mxu0 0.0
    %2034 = vmatpush1.msra.mxu0 0.0
    %2035 = vmatprep.subr.mxu0 0.0
    %2036 = vmatpush1.msra.mxu0 0.0
    %2037 = vmatprep.subr.mxu0 0.0
    %2038 = vmatpush1.msra.mxu0 0.0
    %2039 = vmatprep.subr.mxu0 0.0
    %2040 = vmatpush1.msra.mxu0 0.0
    %2041 = vmatprep.subr.mxu0 0.0
    %2042 = vmatpush1.msra.mxu0 0.0
    %2043 = vmatprep.subr.mxu0 0.0
    %2044 = vmatpush1.msra.mxu0 0.0
    %2045 = vmatprep.subr.mxu0 0.0
    %2046 = vmatpush1.msra.mxu0 0.0
    %2047 = vmatprep.subr.mxu0 0.0
    %2048 = vmatpush1.msra.mxu0 0.0
    %2049 = vmatprep.subr.mxu0 0.0
    %2050 = vmatpush1.msra.mxu0 0.0
    %2051 = vmatprep.subr.mxu0 0.0
    %2052 = vmatpush1.msra.mxu0 0.0
    %2053 = vmatprep.subr.mxu0 0.0
    %2054 = vmatpush1.msra.mxu0 0.0
    %2055 = vmatprep.subr.mxu0 0.0
    %2056 = vmatpush1.msra.mxu0 0.0
    %2057 = vmatprep.mubr.f32.mxu0 0.0
    %2058 = vmatmul.mubr.f32.gmra.mrb[0].mxu0 %v1988
    %v2059 = vpop.f32.mrb[0].mxu0
    %v2060 = vadd.f32 %v1984, %v2059
    %v2061 = vpop.f32.mrb[0].mxu0
    %2062 = vmatprep.mubr.f32.mxu0 0.0
    %2063 = vmatmul.mubr.f32.gmra.mrb[0].mxu0 %v1991
    %v2064 = vpop.f32.mrb[0].mxu0
    %v2065 = vadd.f32 %v1984, %v2064
    %v2066 = vpop.f32.mrb[0].mxu0
    %2067 = vdwg.mxu0
    %v2068 = vadd.f32 %v1889, %v2060
    %v2069 = vadd.f32 %v1890, %v2065
    %v2070 = vsel %vm101, %v2068, 0.0
    %2071 = vadd.xlane.f32.xlu0 %v2070
    %v2072 = vpop.xlane.xlu0 %2071
    %v2073 = vsel %vm101, %v2069, 0.0
    %2074 = vadd.xlane.f32.xlu0 %v2073
    %v2075 = vpop.xlane.xlu0 %2074
    %v2076 = vmul.f32 %v2072, %v1854
    %v2077 = vmul.f32 %v2075, %v1854
    %v2078 = vsub.f32 %v2068, %v2076
    %v2079 = vsub.f32 %v2069, %v2077
    %v2080 = vmul.f32 %v2078, %v2078
    %v2081 = vmul.f32 %v2079, %v2079
    %v2082 = vsel %vm101, %v2080, 0.0
    %2083 = vadd.xlane.f32.xlu0 %v2082
    %v2084 = vpop.xlane.xlu0 %2083
    %v2085 = vsel %vm101, %v2081, 0.0
    %2086 = vadd.xlane.f32.xlu0 %v2085
    %v2087 = vpop.xlane.xlu0 %2086
    %v2088 = vmul.f32 %v2084, %v1854
    %v2089 = vmul.f32 %v2087, %v1854
    %v2090 = vadd.f32 %v2088, 1e-05
    %v2091 = vadd.f32 %v2089, 1e-05
    %v2092 = vrsqrt.pop %v2090
    %v2093 = vrsqrt.pop %v2091
    %v2094 = vmul.f32 %v2078, %v2092
    %v2095 = vmul.f32 %v2079, %v2093
    %v2097 = vlaneseq
    %v2098 = vshrl.u32 %v2097, 7
    %v2099 = vsub.s32 0, %v2098
    %v2100 = vrot.slane %v93, %v2099
    %v2102 = vmul.f32 %v2094, %v2100
    %v2103 = vmul.f32 %v2095, %v2100
    %v2105 = vlaneseq
    %v2106 = vshrl.u32 %v2105, 7
    %v2107 = vsub.s32 0, %v2106
    %v2108 = vrot.slane %v94, %v2107
    %v2110 = vadd.f32 %v2102, %v2108
    %v2111 = vadd.f32 %v2103, %v2108
    %s2112 = scalar_lea.vmem %s1, 32
    %v2113 = vld [vmem:[%s2112] sm:$0xff]
    %v2114 = vld [vmem:[%s2112 + $0x8] sm:$0xff]
    %v2115 = vld [vmem:[%s2112 + $0x10] sm:$0xff]
    %v2116 = vld [vmem:[%s2112 + $0x18] sm:$0xff]
    %s2117 = scalar_lea.vmem %s3, 32
    %v2118 = vld [vmem:[%s2117] sm:$0xff]
    %v2119 = vld [vmem:[%s2117 + $0x8] sm:$0xff]
    %v2120 = vld [vmem:[%s2117 + $0x10] sm:$0xff]
    %v2121 = vld [vmem:[%s2117 + $0x18] sm:$0xff]
    %s2122 = scalar_lea.vmem %s5, 32
    %v2123 = vld [vmem:[%s2122] sm:$0xff]
    %v2124 = vld [vmem:[%s2122 + $0x8] sm:$0xff]
    %v2125 = vld [vmem:[%s2122 + $0x10] sm:$0xff]
    %v2126 = vld [vmem:[%s2122 + $0x18] sm:$0xff]
    %s2127 = scalar_lea.vmem %s7, 64
    %v2128 = vld [vmem:[%s2127] sm:$0xff]
    %v2129 = vld [vmem:[%s2127 + $0x8] sm:$0xff]
    %v2130 = vld [vmem:[%s2127 + $0x10] sm:$0xff]
    %v2131 = vld [vmem:[%s2127 + $0x18] sm:$0xff]
    %v2132 = vld [vmem:[%s2127 + $0x20] sm:$0xff]
    %v2133 = vld [vmem:[%s2127 + $0x28] sm:$0xff]
    %v2134 = vld [vmem:[%s2127 + $0x30] sm:$0xff]
    %v2135 = vld [vmem:[%s2127 + $0x38] sm:$0xff]
    %s2136 = scalar_lea.vmem %s2, 1
    %v2137 = vld [vmem:[%s2136] sm:$0x1]
    %s2138 = scalar_lea.vmem %s4, 1
    %v2139 = vld [vmem:[%s2138] sm:$0x1]
    %s2140 = scalar_lea.vmem %s6, 1
    %v2141 = vld [vmem:[%s2140] sm:$0x1]
    %s2142 = scalar_lea.vmem %s8, 1
    %v2143 = vld [vmem:[%s2142] sm:$0x1]
    %s2144 = scalar_lea.vmem %s9, 1
    %v2145 = vld [vmem:[%s2144] sm:$0x1]
    %s2146 = scalar_lea.vmem %s10, 1
    %v2147 = vld [vmem:[%s2146] sm:$0x1]
    %s2148 = scalar_lea.vmem %s11, 1
    %v2149 = vld [vmem:[%s2148] sm:$0x1]
    %s2150 = scalar_lea.vmem %s12, 1
    %v2151 = vld [vmem:[%s2150] sm:$0x1]
    %v2153 = vlaneseq
    %v2154 = vshrl.u32 %v2153, 7
    %v2155 = vsub.s32 0, %v2154
    %v2156 = vrot.slane %v2137, %v2155
    %v2159 = vsel %vm101, %v2110, 0
    %v2162 = vsel %vm101, %v2111, 0
    %2164 = vmatprep.subr.mxu0 0.0
    %2165 = vmatpush1.msra.mxu0 %v2113
    %2166 = vmatprep.subr.mxu0 0.0
    %2167 = vmatpush1.msra.mxu0 %v2114
    %2168 = vmatprep.subr.mxu0 0.0
    %2169 = vmatpush1.msra.mxu0 %v2115
    %2170 = vmatprep.subr.mxu0 0.0
    %2171 = vmatpush1.msra.mxu0 %v2116
    %2172 = vmatprep.subr.mxu0 0.0
    %2173 = vmatpush1.msra.mxu0 0.0
    %2174 = vmatprep.subr.mxu0 0.0
    %2175 = vmatpush1.msra.mxu0 0.0
    %2176 = vmatprep.subr.mxu0 0.0
    %2177 = vmatpush1.msra.mxu0 0.0
    %2178 = vmatprep.subr.mxu0 0.0
    %2179 = vmatpush1.msra.mxu0 0.0
    %2180 = vmatprep.subr.mxu0 0.0
    %2181 = vmatpush1.msra.mxu0 0.0
    %2182 = vmatprep.subr.mxu0 0.0
    %2183 = vmatpush1.msra.mxu0 0.0
    %2184 = vmatprep.subr.mxu0 0.0
    %2185 = vmatpush1.msra.mxu0 0.0
    %2186 = vmatprep.subr.mxu0 0.0
    %2187 = vmatpush1.msra.mxu0 0.0
    %2188 = vmatprep.subr.mxu0 0.0
    %2189 = vmatpush1.msra.mxu0 0.0
    %2190 = vmatprep.subr.mxu0 0.0
    %2191 = vmatpush1.msra.mxu0 0.0
    %2192 = vmatprep.subr.mxu0 0.0
    %2193 = vmatpush1.msra.mxu0 0.0
    %2194 = vmatprep.subr.mxu0 0.0
    %2195 = vmatpush1.msra.mxu0 0.0
    %2196 = vmatprep.subr.mxu0 0.0
    %2197 = vmatpush1.msra.mxu0 0.0
    %2198 = vmatprep.subr.mxu0 0.0
    %2199 = vmatpush1.msra.mxu0 0.0
    %2200 = vmatprep.subr.mxu0 0.0
    %2201 = vmatpush1.msra.mxu0 0.0
    %2202 = vmatprep.subr.mxu0 0.0
    %2203 = vmatpush1.msra.mxu0 0.0
    %2204 = vmatprep.subr.mxu0 0.0
    %2205 = vmatpush1.msra.mxu0 0.0
    %2206 = vmatprep.subr.mxu0 0.0
    %2207 = vmatpush1.msra.mxu0 0.0
    %2208 = vmatprep.subr.mxu0 0.0
    %2209 = vmatpush1.msra.mxu0 0.0
    %2210 = vmatprep.subr.mxu0 0.0
    %2211 = vmatpush1.msra.mxu0 0.0
    %2212 = vmatprep.subr.mxu0 0.0
    %2213 = vmatpush1.msra.mxu0 0.0
    %2214 = vmatprep.subr.mxu0 0.0
    %2215 = vmatpush1.msra.mxu0 0.0
    %2216 = vmatprep.subr.mxu0 0.0
    %2217 = vmatpush1.msra.mxu0 0.0
    %2218 = vmatprep.subr.mxu0 0.0
    %2219 = vmatpush1.msra.mxu0 0.0
    %2220 = vmatprep.subr.mxu0 0.0
    %2221 = vmatpush1.msra.mxu0 0.0
    %2222 = vmatprep.subr.mxu0 0.0
    %2223 = vmatpush1.msra.mxu0 0.0
    %2224 = vmatprep.subr.mxu0 0.0
    %2225 = vmatpush1.msra.mxu0 0.0
    %2226 = vmatprep.subr.mxu0 0.0
    %2227 = vmatpush1.msra.mxu0 0.0
    %2228 = vmatprep.mubr.f32.mxu0 0.0
    %2229 = vmatmul.mubr.f32.gmra.mrb[0].mxu0 %v2159
    %v2230 = vpop.f32.mrb[0].mxu0
    %v2231 = vadd.f32 %v2156, %v2230
    %v2232 = vpop.f32.mrb[0].mxu0
    %2233 = vmatprep.mubr.f32.mxu0 0.0
    %2234 = vmatmul.mubr.f32.gmra.mrb[0].mxu0 %v2162
    %v2235 = vpop.f32.mrb[0].mxu0
    %v2236 = vadd.f32 %v2156, %v2235
    %v2237 = vpop.f32.mrb[0].mxu0
    %2238 = vdwg.mxu0
    %2240 = vrot.lane.b32.xlu0 %v2231, 96
    %v2241 = vpop.permute.xlu0 %2240
    %v2242 = vsel %vm186, %v2231, 0
    %v2244 = vsel %vm186, %v2241, 0
    %2246 = vmatprep.subr.mxu0 0.0
    %2247 = vmatpush1.xpose.msra.mxu0 %v2244
    %2248 = vmatprep.subr.mxu0 0.0
    %2249 = vmatpush1.xpose.msra.mxu0 0.0
    %2250 = vmatprep.subr.mxu0 0.0
    %2251 = vmatpush1.xpose.msra.mxu0 0.0
    %2252 = vmatprep.subr.mxu0 0.0
    %2253 = vmatpush1.xpose.msra.mxu0 0.0
    %2254 = vmatprep.subr.mxu0 0.0
    %2255 = vmatpush1.xpose.msra.mxu0 0.0
    %2256 = vmatprep.subr.mxu0 0.0
    %2257 = vmatpush1.xpose.msra.mxu0 0.0
    %2258 = vmatprep.subr.mxu0 0.0
    %2259 = vmatpush1.xpose.msra.mxu0 0.0
    %2260 = vmatprep.subr.mxu0 0.0
    %2261 = vmatpush1.xpose.msra.mxu0 0.0
    %2262 = vmatprep.subr.mxu0 0.0
    %2263 = vmatpush1.xpose.msra.mxu0 0.0
    %2264 = vmatprep.subr.mxu0 0.0
    %2265 = vmatpush1.xpose.msra.mxu0 0.0
    %2266 = vmatprep.subr.mxu0 0.0
    %2267 = vmatpush1.xpose.msra.mxu0 0.0
    %2268 = vmatprep.subr.mxu0 0.0
    %2269 = vmatpush1.xpose.msra.mxu0 0.0
    %2270 = vmatprep.subr.mxu0 0.0
    %2271 = vmatpush1.xpose.msra.mxu0 0.0
    %2272 = vmatprep.subr.mxu0 0.0
    %2273 = vmatpush1.xpose.msra.mxu0 0.0
    %2274 = vmatprep.subr.mxu0 0.0
    %2275 = vmatpush1.xpose.msra.mxu0 0.0
    %2276 = vmatprep.subr.mxu0 0.0
    %2277 = vmatpush1.xpose.msra.mxu0 0.0
    %2278 = vmatprep.subr.mxu0 0.0
    %2279 = vmatpush1.xpose.msra.mxu0 0.0
    %2280 = vmatprep.subr.mxu0 0.0
    %2281 = vmatpush1.xpose.msra.mxu0 0.0
    %2282 = vmatprep.subr.mxu0 0.0
    %2283 = vmatpush1.xpose.msra.mxu0 0.0
    %2284 = vmatprep.subr.mxu0 0.0
    %2285 = vmatpush1.xpose.msra.mxu0 0.0
    %2286 = vmatprep.subr.mxu0 0.0
    %2287 = vmatpush1.xpose.msra.mxu0 0.0
    %2288 = vmatprep.subr.mxu0 0.0
    %2289 = vmatpush1.xpose.msra.mxu0 0.0
    %2290 = vmatprep.subr.mxu0 0.0
    %2291 = vmatpush1.xpose.msra.mxu0 0.0
    %2292 = vmatprep.subr.mxu0 0.0
    %2293 = vmatpush1.xpose.msra.mxu0 0.0
    %2294 = vmatprep.subr.mxu0 0.0
    %2295 = vmatpush1.xpose.msra.mxu0 0.0
    %2296 = vmatprep.subr.mxu0 0.0
    %2297 = vmatpush1.xpose.msra.mxu0 0.0
    %2298 = vmatprep.subr.mxu0 0.0
    %2299 = vmatpush1.xpose.msra.mxu0 0.0
    %2300 = vmatprep.subr.mxu0 0.0
    %2301 = vmatpush1.xpose.msra.mxu0 0.0
    %2302 = vmatprep.subr.mxu0 0.0
    %2303 = vmatpush1.xpose.msra.mxu0 0.0
    %2304 = vmatprep.subr.mxu0 0.0
    %2305 = vmatpush1.xpose.msra.mxu0 0.0
    %2306 = vmatprep.subr.mxu0 0.0
    %2307 = vmatpush1.xpose.msra.mxu0 0.0
    %2308 = vmatprep.subr.mxu0 0.0
    %2309 = vmatpush1.xpose.msra.mxu0 0.0
    %2310 = vmatprep.mubr.f32.mxu0 0.0
    %2311 = vmatmul.mubr.f32.gmra.mrb[0].mxu0 %v2242
    %v2312 = vpop.f32.mrb[0].mxu0
    %v2313 = vadd.f32 0.0, %v2312
    %v2314 = vpop.f32.mrb[0].mxu0
    %2315 = vdwg.mxu0
    %2317 = vrot.lane.b32.xlu0 %v2236, 96
    %v2318 = vpop.permute.xlu0 %2317
    %v2319 = vsel %vm186, %v2236, 0
    %v2321 = vsel %vm186, %v2318, 0
    %2323 = vmatprep.subr.mxu0 0.0
    %2324 = vmatpush1.xpose.msra.mxu0 %v2321
    %2325 = vmatprep.subr.mxu0 0.0
    %2326 = vmatpush1.xpose.msra.mxu0 0.0
    %2327 = vmatprep.subr.mxu0 0.0
    %2328 = vmatpush1.xpose.msra.mxu0 0.0
    %2329 = vmatprep.subr.mxu0 0.0
    %2330 = vmatpush1.xpose.msra.mxu0 0.0
    %2331 = vmatprep.subr.mxu0 0.0
    %2332 = vmatpush1.xpose.msra.mxu0 0.0
    %2333 = vmatprep.subr.mxu0 0.0
    %2334 = vmatpush1.xpose.msra.mxu0 0.0
    %2335 = vmatprep.subr.mxu0 0.0
    %2336 = vmatpush1.xpose.msra.mxu0 0.0
    %2337 = vmatprep.subr.mxu0 0.0
    %2338 = vmatpush1.xpose.msra.mxu0 0.0
    %2339 = vmatprep.subr.mxu0 0.0
    %2340 = vmatpush1.xpose.msra.mxu0 0.0
    %2341 = vmatprep.subr.mxu0 0.0
    %2342 = vmatpush1.xpose.msra.mxu0 0.0
    %2343 = vmatprep.subr.mxu0 0.0
    %2344 = vmatpush1.xpose.msra.mxu0 0.0
    %2345 = vmatprep.subr.mxu0 0.0
    %2346 = vmatpush1.xpose.msra.mxu0 0.0
    %2347 = vmatprep.subr.mxu0 0.0
    %2348 = vmatpush1.xpose.msra.mxu0 0.0
    %2349 = vmatprep.subr.mxu0 0.0
    %2350 = vmatpush1.xpose.msra.mxu0 0.0
    %2351 = vmatprep.subr.mxu0 0.0
    %2352 = vmatpush1.xpose.msra.mxu0 0.0
    %2353 = vmatprep.subr.mxu0 0.0
    %2354 = vmatpush1.xpose.msra.mxu0 0.0
    %2355 = vmatprep.subr.mxu0 0.0
    %2356 = vmatpush1.xpose.msra.mxu0 0.0
    %2357 = vmatprep.subr.mxu0 0.0
    %2358 = vmatpush1.xpose.msra.mxu0 0.0
    %2359 = vmatprep.subr.mxu0 0.0
    %2360 = vmatpush1.xpose.msra.mxu0 0.0
    %2361 = vmatprep.subr.mxu0 0.0
    %2362 = vmatpush1.xpose.msra.mxu0 0.0
    %2363 = vmatprep.subr.mxu0 0.0
    %2364 = vmatpush1.xpose.msra.mxu0 0.0
    %2365 = vmatprep.subr.mxu0 0.0
    %2366 = vmatpush1.xpose.msra.mxu0 0.0
    %2367 = vmatprep.subr.mxu0 0.0
    %2368 = vmatpush1.xpose.msra.mxu0 0.0
    %2369 = vmatprep.subr.mxu0 0.0
    %2370 = vmatpush1.xpose.msra.mxu0 0.0
    %2371 = vmatprep.subr.mxu0 0.0
    %2372 = vmatpush1.xpose.msra.mxu0 0.0
    %2373 = vmatprep.subr.mxu0 0.0
    %2374 = vmatpush1.xpose.msra.mxu0 0.0
    %2375 = vmatprep.subr.mxu0 0.0
    %2376 = vmatpush1.xpose.msra.mxu0 0.0
    %2377 = vmatprep.subr.mxu0 0.0
    %2378 = vmatpush1.xpose.msra.mxu0 0.0
    %2379 = vmatprep.subr.mxu0 0.0
    %2380 = vmatpush1.xpose.msra.mxu0 0.0
    %2381 = vmatprep.subr.mxu0 0.0
    %2382 = vmatpush1.xpose.msra.mxu0 0.0
    %2383 = vmatprep.subr.mxu0 0.0
    %2384 = vmatpush1.xpose.msra.mxu0 0.0
    %2385 = vmatprep.subr.mxu0 0.0
    %2386 = vmatpush1.xpose.msra.mxu0 0.0
    %2387 = vmatprep.mubr.f32.mxu0 0.0
    %2388 = vmatmul.mubr.f32.gmra.mrb[0].mxu0 %v2319
    %v2389 = vpop.f32.mrb[0].mxu0
    %v2390 = vadd.f32 0.0, %v2389
    %v2391 = vpop.f32.mrb[0].mxu0
    %2392 = vdwg.mxu0
    %v2393 = vmul.f32 %v2313, 0.35355338
    %v2394 = vmul.f32 %v2390, 0.35355338
    %v2395 = vsel %vm186, %v2393, -inf
    %2396 = vmax.xlane.f32.xlu0 %v2395
    %v2397 = vpop.xlane.xlu0 %2396
    %v2398 = vsel %vm186, %v2394, -inf
    %2399 = vmax.xlane.f32.xlu0 %v2398
    %v2400 = vpop.xlane.xlu0 %2399
    %v2401 = vsub.f32 %v2393, %v2397
    %v2402 = vsub.f32 %v2394, %v2400
    %v2403 = vmul.f32 %v2401, 1.442695
    %v2404 = vpow.pop %v2403
    %v2405 = vmul.f32 %v2402, 1.442695
    %v2406 = vpow.pop %v2405
    %v2407 = vsel %vm186, %v2404, 0.0
    %2408 = vadd.xlane.f32.xlu0 %v2407
    %v2409 = vpop.xlane.xlu0 %2408
    %v2410 = vsel %vm186, %v2406, 0.0
    %2411 = vadd.xlane.f32.xlu0 %v2410
    %v2412 = vpop.xlane.xlu0 %2411
    %v2413 = vrcp.pop %v2409
    %v2414 = vrcp.pop %v2412
    %v2415 = vmul.f32 %v2404, %v2413
    %v2416 = vmul.f32 %v2406, %v2414
    %2417 = vrot.lane.b32.xlu0 %v2231, 64
    %v2418 = vpop.permute.xlu0 %2417
    %v2421 = vsel %vm186, %v2415, 0
    %2423 = vmatprep.subr.mxu0 0.0
    %2424 = vmatpush1.msra.mxu0 %v2418
    %2425 = vmatprep.subr.mxu0 0.0
    %2426 = vmatpush1.msra.mxu0 0.0
    %2427 = vmatprep.subr.mxu0 0.0
    %2428 = vmatpush1.msra.mxu0 0.0
    %2429 = vmatprep.subr.mxu0 0.0
    %2430 = vmatpush1.msra.mxu0 0.0
    %2431 = vmatprep.subr.mxu0 0.0
    %2432 = vmatpush1.msra.mxu0 0.0
    %2433 = vmatprep.subr.mxu0 0.0
    %2434 = vmatpush1.msra.mxu0 0.0
    %2435 = vmatprep.subr.mxu0 0.0
    %2436 = vmatpush1.msra.mxu0 0.0
    %2437 = vmatprep.subr.mxu0 0.0
    %2438 = vmatpush1.msra.mxu0 0.0
    %2439 = vmatprep.subr.mxu0 0.0
    %2440 = vmatpush1.msra.mxu0 0.0
    %2441 = vmatprep.subr.mxu0 0.0
    %2442 = vmatpush1.msra.mxu0 0.0
    %2443 = vmatprep.subr.mxu0 0.0
    %2444 = vmatpush1.msra.mxu0 0.0
    %2445 = vmatprep.subr.mxu0 0.0
    %2446 = vmatpush1.msra.mxu0 0.0
    %2447 = vmatprep.subr.mxu0 0.0
    %2448 = vmatpush1.msra.mxu0 0.0
    %2449 = vmatprep.subr.mxu0 0.0
    %2450 = vmatpush1.msra.mxu0 0.0
    %2451 = vmatprep.subr.mxu0 0.0
    %2452 = vmatpush1.msra.mxu0 0.0
    %2453 = vmatprep.subr.mxu0 0.0
    %2454 = vmatpush1.msra.mxu0 0.0
    %2455 = vmatprep.subr.mxu0 0.0
    %2456 = vmatpush1.msra.mxu0 0.0
    %2457 = vmatprep.subr.mxu0 0.0
    %2458 = vmatpush1.msra.mxu0 0.0
    %2459 = vmatprep.subr.mxu0 0.0
    %2460 = vmatpush1.msra.mxu0 0.0
    %2461 = vmatprep.subr.mxu0 0.0
    %2462 = vmatpush1.msra.mxu0 0.0
    %2463 = vmatprep.subr.mxu0 0.0
    %2464 = vmatpush1.msra.mxu0 0.0
    %2465 = vmatprep.subr.mxu0 0.0
    %2466 = vmatpush1.msra.mxu0 0.0
    %2467 = vmatprep.subr.mxu0 0.0
    %2468 = vmatpush1.msra.mxu0 0.0
    %2469 = vmatprep.subr.mxu0 0.0
    %2470 = vmatpush1.msra.mxu0 0.0
    %2471 = vmatprep.subr.mxu0 0.0
    %2472 = vmatpush1.msra.mxu0 0.0
    %2473 = vmatprep.subr.mxu0 0.0
    %2474 = vmatpush1.msra.mxu0 0.0
    %2475 = vmatprep.subr.mxu0 0.0
    %2476 = vmatpush1.msra.mxu0 0.0
    %2477 = vmatprep.subr.mxu0 0.0
    %2478 = vmatpush1.msra.mxu0 0.0
    %2479 = vmatprep.subr.mxu0 0.0
    %2480 = vmatpush1.msra.mxu0 0.0
    %2481 = vmatprep.subr.mxu0 0.0
    %2482 = vmatpush1.msra.mxu0 0.0
    %2483 = vmatprep.subr.mxu0 0.0
    %2484 = vmatpush1.msra.mxu0 0.0
    %2485 = vmatprep.subr.mxu0 0.0
    %2486 = vmatpush1.msra.mxu0 0.0
    %2487 = vmatprep.mubr.f32.mxu0 0.0
    %2488 = vmatmul.mubr.f32.gmra.mrb[0].mxu0 %v2421
    %v2489 = vpop.f32.mrb[0].mxu0
    %v2490 = vadd.f32 0.0, %v2489
    %v2491 = vpop.f32.mrb[0].mxu0
    %2492 = vdwg.mxu0
    %2493 = vrot.lane.b32.xlu0 %v2236, 64
    %v2494 = vpop.permute.xlu0 %2493
    %v2497 = vsel %vm186, %v2416, 0
    %2499 = vmatprep.subr.mxu0 0.0
    %2500 = vmatpush1.msra.mxu0 %v2494
    %2501 = vmatprep.subr.mxu0 0.0
    %2502 = vmatpush1.msra.mxu0 0.0
    %2503 = vmatprep.subr.mxu0 0.0
    %2504 = vmatpush1.msra.mxu0 0.0
    %2505 = vmatprep.subr.mxu0 0.0
    %2506 = vmatpush1.msra.mxu0 0.0
    %2507 = vmatprep.subr.mxu0 0.0
    %2508 = vmatpush1.msra.mxu0 0.0
    %2509 = vmatprep.subr.mxu0 0.0
    %2510 = vmatpush1.msra.mxu0 0.0
    %2511 = vmatprep.subr.mxu0 0.0
    %2512 = vmatpush1.msra.mxu0 0.0
    %2513 = vmatprep.subr.mxu0 0.0
    %2514 = vmatpush1.msra.mxu0 0.0
    %2515 = vmatprep.subr.mxu0 0.0
    %2516 = vmatpush1.msra.mxu0 0.0
    %2517 = vmatprep.subr.mxu0 0.0
    %2518 = vmatpush1.msra.mxu0 0.0
    %2519 = vmatprep.subr.mxu0 0.0
    %2520 = vmatpush1.msra.mxu0 0.0
    %2521 = vmatprep.subr.mxu0 0.0
    %2522 = vmatpush1.msra.mxu0 0.0
    %2523 = vmatprep.subr.mxu0 0.0
    %2524 = vmatpush1.msra.mxu0 0.0
    %2525 = vmatprep.subr.mxu0 0.0
    %2526 = vmatpush1.msra.mxu0 0.0
    %2527 = vmatprep.subr.mxu0 0.0
    %2528 = vmatpush1.msra.mxu0 0.0
    %2529 = vmatprep.subr.mxu0 0.0
    %2530 = vmatpush1.msra.mxu0 0.0
    %2531 = vmatprep.subr.mxu0 0.0
    %2532 = vmatpush1.msra.mxu0 0.0
    %2533 = vmatprep.subr.mxu0 0.0
    %2534 = vmatpush1.msra.mxu0 0.0
    %2535 = vmatprep.subr.mxu0 0.0
    %2536 = vmatpush1.msra.mxu0 0.0
    %2537 = vmatprep.subr.mxu0 0.0
    %2538 = vmatpush1.msra.mxu0 0.0
    %2539 = vmatprep.subr.mxu0 0.0
    %2540 = vmatpush1.msra.mxu0 0.0
    %2541 = vmatprep.subr.mxu0 0.0
    %2542 = vmatpush1.msra.mxu0 0.0
    %2543 = vmatprep.subr.mxu0 0.0
    %2544 = vmatpush1.msra.mxu0 0.0
    %2545 = vmatprep.subr.mxu0 0.0
    %2546 = vmatpush1.msra.mxu0 0.0
    %2547 = vmatprep.subr.mxu0 0.0
    %2548 = vmatpush1.msra.mxu0 0.0
    %2549 = vmatprep.subr.mxu0 0.0
    %2550 = vmatpush1.msra.mxu0 0.0
    %2551 = vmatprep.subr.mxu0 0.0
    %2552 = vmatpush1.msra.mxu0 0.0
    %2553 = vmatprep.subr.mxu0 0.0
    %2554 = vmatpush1.msra.mxu0 0.0
    %2555 = vmatprep.subr.mxu0 0.0
    %2556 = vmatpush1.msra.mxu0 0.0
    %2557 = vmatprep.subr.mxu0 0.0
    %2558 = vmatpush1.msra.mxu0 0.0
    %2559 = vmatprep.subr.mxu0 0.0
    %2560 = vmatpush1.msra.mxu0 0.0
    %2561 = vmatprep.subr.mxu0 0.0
    %2562 = vmatpush1.msra.mxu0 0.0
    %2563 = vmatprep.mubr.f32.mxu0 0.0
    %2564 = vmatmul.mubr.f32.gmra.mrb[0].mxu0 %v2497
    %v2565 = vpop.f32.mrb[0].mxu0
    %v2566 = vadd.f32 0.0, %v2565
    %v2567 = vpop.f32.mrb[0].mxu0
    %2568 = vdwg.mxu0
    %2569 = vrot.lane.b32.xlu0 %v2231, 120
    %v2570 = vpop.permute.xlu0 %2569
    %2571 = vrot.lane.b32.xlu0 %v2231, 88
    %v2572 = vpop.permute.xlu0 %2571
    %v2573 = vsel %vm186, %v2570, 0
    %v2575 = vsel %vm186, %v2572, 0
    %2577 = vmatprep.subr.mxu0 0.0
    %2578 = vmatpush1.xpose.msra.mxu0 %v2575
    %2579 = vmatprep.subr.mxu0 0.0
    %2580 = vmatpush1.xpose.msra.mxu0 0.0
    %2581 = vmatprep.subr.mxu0 0.0
    %2582 = vmatpush1.xpose.msra.mxu0 0.0
    %2583 = vmatprep.subr.mxu0 0.0
    %2584 = vmatpush1.xpose.msra.mxu0 0.0
    %2585 = vmatprep.subr.mxu0 0.0
    %2586 = vmatpush1.xpose.msra.mxu0 0.0
    %2587 = vmatprep.subr.mxu0 0.0
    %2588 = vmatpush1.xpose.msra.mxu0 0.0
    %2589 = vmatprep.subr.mxu0 0.0
    %2590 = vmatpush1.xpose.msra.mxu0 0.0
    %2591 = vmatprep.subr.mxu0 0.0
    %2592 = vmatpush1.xpose.msra.mxu0 0.0
    %2593 = vmatprep.subr.mxu0 0.0
    %2594 = vmatpush1.xpose.msra.mxu0 0.0
    %2595 = vmatprep.subr.mxu0 0.0
    %2596 = vmatpush1.xpose.msra.mxu0 0.0
    %2597 = vmatprep.subr.mxu0 0.0
    %2598 = vmatpush1.xpose.msra.mxu0 0.0
    %2599 = vmatprep.subr.mxu0 0.0
    %2600 = vmatpush1.xpose.msra.mxu0 0.0
    %2601 = vmatprep.subr.mxu0 0.0
    %2602 = vmatpush1.xpose.msra.mxu0 0.0
    %2603 = vmatprep.subr.mxu0 0.0
    %2604 = vmatpush1.xpose.msra.mxu0 0.0
    %2605 = vmatprep.subr.mxu0 0.0
    %2606 = vmatpush1.xpose.msra.mxu0 0.0
    %2607 = vmatprep.subr.mxu0 0.0
    %2608 = vmatpush1.xpose.msra.mxu0 0.0
    %2609 = vmatprep.subr.mxu0 0.0
    %2610 = vmatpush1.xpose.msra.mxu0 0.0
    %2611 = vmatprep.subr.mxu0 0.0
    %2612 = vmatpush1.xpose.msra.mxu0 0.0
    %2613 = vmatprep.subr.mxu0 0.0
    %2614 = vmatpush1.xpose.msra.mxu0 0.0
    %2615 = vmatprep.subr.mxu0 0.0
    %2616 = vmatpush1.xpose.msra.mxu0 0.0
    %2617 = vmatprep.subr.mxu0 0.0
    %2618 = vmatpush1.xpose.msra.mxu0 0.0
    %2619 = vmatprep.subr.mxu0 0.0
    %2620 = vmatpush1.xpose.msra.mxu0 0.0
    %2621 = vmatprep.subr.mxu0 0.0
    %2622 = vmatpush1.xpose.msra.mxu0 0.0
    %2623 = vmatprep.subr.mxu0 0.0
    %2624 = vmatpush1.xpose.msra.mxu0 0.0
    %2625 = vmatprep.subr.mxu0 0.0
    %2626 = vmatpush1.xpose.msra.mxu0 0.0
    %2627 = vmatprep.subr.mxu0 0.0
    %2628 = vmatpush1.xpose.msra.mxu0 0.0
    %2629 = vmatprep.subr.mxu0 0.0
    %2630 = vmatpush1.xpose.msra.mxu0 0.0
    %2631 = vmatprep.subr.mxu0 0.0
    %2632 = vmatpush1.xpose.msra.mxu0 0.0
    %2633 = vmatprep.subr.mxu0 0.0
    %2634 = vmatpush1.xpose.msra.mxu0 0.0
    %2635 = vmatprep.subr.mxu0 0.0
    %2636 = vmatpush1.xpose.msra.mxu0 0.0
    %2637 = vmatprep.subr.mxu0 0.0
    %2638 = vmatpush1.xpose.msra.mxu0 0.0
    %2639 = vmatprep.subr.mxu0 0.0
    %2640 = vmatpush1.xpose.msra.mxu0 0.0
    %2641 = vmatprep.mubr.f32.mxu0 0.0
    %2642 = vmatmul.mubr.f32.gmra.mrb[0].mxu0 %v2573
    %v2643 = vpop.f32.mrb[0].mxu0
    %v2644 = vadd.f32 0.0, %v2643
    %v2645 = vpop.f32.mrb[0].mxu0
    %2646 = vdwg.mxu0
    %2647 = vrot.lane.b32.xlu0 %v2236, 120
    %v2648 = vpop.permute.xlu0 %2647
    %2649 = vrot.lane.b32.xlu0 %v2236, 88
    %v2650 = vpop.permute.xlu0 %2649
    %v2651 = vsel %vm186, %v2648, 0
    %v2653 = vsel %vm186, %v2650, 0
    %2655 = vmatprep.subr.mxu0 0.0
    %2656 = vmatpush1.xpose.msra.mxu0 %v2653
    %2657 = vmatprep.subr.mxu0 0.0
    %2658 = vmatpush1.xpose.msra.mxu0 0.0
    %2659 = vmatprep.subr.mxu0 0.0
    %2660 = vmatpush1.xpose.msra.mxu0 0.0
    %2661 = vmatprep.subr.mxu0 0.0
    %2662 = vmatpush1.xpose.msra.mxu0 0.0
    %2663 = vmatprep.subr.mxu0 0.0
    %2664 = vmatpush1.xpose.msra.mxu0 0.0
    %2665 = vmatprep.subr.mxu0 0.0
    %2666 = vmatpush1.xpose.msra.mxu0 0.0
    %2667 = vmatprep.subr.mxu0 0.0
    %2668 = vmatpush1.xpose.msra.mxu0 0.0
    %2669 = vmatprep.subr.mxu0 0.0
    %2670 = vmatpush1.xpose.msra.mxu0 0.0
    %2671 = vmatprep.subr.mxu0 0.0
    %2672 = vmatpush1.xpose.msra.mxu0 0.0
    %2673 = vmatprep.subr.mxu0 0.0
    %2674 = vmatpush1.xpose.msra.mxu0 0.0
    %2675 = vmatprep.subr.mxu0 0.0
    %2676 = vmatpush1.xpose.msra.mxu0 0.0
    %2677 = vmatprep.subr.mxu0 0.0
    %2678 = vmatpush1.xpose.msra.mxu0 0.0
    %2679 = vmatprep.subr.mxu0 0.0
    %2680 = vmatpush1.xpose.msra.mxu0 0.0
    %2681 = vmatprep.subr.mxu0 0.0
    %2682 = vmatpush1.xpose.msra.mxu0 0.0
    %2683 = vmatprep.subr.mxu0 0.0
    %2684 = vmatpush1.xpose.msra.mxu0 0.0
    %2685 = vmatprep.subr.mxu0 0.0
    %2686 = vmatpush1.xpose.msra.mxu0 0.0
    %2687 = vmatprep.subr.mxu0 0.0
    %2688 = vmatpush1.xpose.msra.mxu0 0.0
    %2689 = vmatprep.subr.mxu0 0.0
    %2690 = vmatpush1.xpose.msra.mxu0 0.0
    %2691 = vmatprep.subr.mxu0 0.0
    %2692 = vmatpush1.xpose.msra.mxu0 0.0
    %2693 = vmatprep.subr.mxu0 0.0
    %2694 = vmatpush1.xpose.msra.mxu0 0.0
    %2695 = vmatprep.subr.mxu0 0.0
    %2696 = vmatpush1.xpose.msra.mxu0 0.0
    %2697 = vmatprep.subr.mxu0 0.0
    %2698 = vmatpush1.xpose.msra.mxu0 0.0
    %2699 = vmatprep.subr.mxu0 0.0
    %2700 = vmatpush1.xpose.msra.mxu0 0.0
    %2701 = vmatprep.subr.mxu0 0.0
    %2702 = vmatpush1.xpose.msra.mxu0 0.0
    %2703 = vmatprep.subr.mxu0 0.0
    %2704 = vmatpush1.xpose.msra.mxu0 0.0
    %2705 = vmatprep.subr.mxu0 0.0
    %2706 = vmatpush1.xpose.msra.mxu0 0.0
    %2707 = vmatprep.subr.mxu0 0.0
    %2708 = vmatpush1.xpose.msra.mxu0 0.0
    %2709 = vmatprep.subr.mxu0 0.0
    %2710 = vmatpush1.xpose.msra.mxu0 0.0
    %2711 = vmatprep.subr.mxu0 0.0
    %2712 = vmatpush1.xpose.msra.mxu0 0.0
    %2713 = vmatprep.subr.mxu0 0.0
    %2714 = vmatpush1.xpose.msra.mxu0 0.0
    %2715 = vmatprep.subr.mxu0 0.0
    %2716 = vmatpush1.xpose.msra.mxu0 0.0
    %2717 = vmatprep.subr.mxu0 0.0
    %2718 = vmatpush1.xpose.msra.mxu0 0.0
    %2719 = vmatprep.mubr.f32.mxu0 0.0
    %2720 = vmatmul.mubr.f32.gmra.mrb[0].mxu0 %v2651
    %v2721 = vpop.f32.mrb[0].mxu0
    %v2722 = vadd.f32 0.0, %v2721
    %v2723 = vpop.f32.mrb[0].mxu0
    %2724 = vdwg.mxu0
    %v2725 = vmul.f32 %v2644, 0.35355338
    %v2726 = vmul.f32 %v2722, 0.35355338
    %v2727 = vsel %vm186, %v2725, -inf
    %2728 = vmax.xlane.f32.xlu0 %v2727
    %v2729 = vpop.xlane.xlu0 %2728
    %v2730 = vsel %vm186, %v2726, -inf
    %2731 = vmax.xlane.f32.xlu0 %v2730
    %v2732 = vpop.xlane.xlu0 %2731
    %v2733 = vsub.f32 %v2725, %v2729
    %v2734 = vsub.f32 %v2726, %v2732
    %v2735 = vmul.f32 %v2733, 1.442695
    %v2736 = vpow.pop %v2735
    %v2737 = vmul.f32 %v2734, 1.442695
    %v2738 = vpow.pop %v2737
    %v2739 = vsel %vm186, %v2736, 0.0
    %2740 = vadd.xlane.f32.xlu0 %v2739
    %v2741 = vpop.xlane.xlu0 %2740
    %v2742 = vsel %vm186, %v2738, 0.0
    %2743 = vadd.xlane.f32.xlu0 %v2742
    %v2744 = vpop.xlane.xlu0 %2743
    %v2745 = vrcp.pop %v2741
    %v2746 = vrcp.pop %v2744
    %v2747 = vmul.f32 %v2736, %v2745
    %v2748 = vmul.f32 %v2738, %v2746
    %2749 = vrot.lane.b32.xlu0 %v2231, 56
    %v2750 = vpop.permute.xlu0 %2749
    %v2753 = vsel %vm186, %v2747, 0
    %2755 = vmatprep.subr.mxu0 0.0
    %2756 = vmatpush1.msra.mxu0 %v2750
    %2757 = vmatprep.subr.mxu0 0.0
    %2758 = vmatpush1.msra.mxu0 0.0
    %2759 = vmatprep.subr.mxu0 0.0
    %2760 = vmatpush1.msra.mxu0 0.0
    %2761 = vmatprep.subr.mxu0 0.0
    %2762 = vmatpush1.msra.mxu0 0.0
    %2763 = vmatprep.subr.mxu0 0.0
    %2764 = vmatpush1.msra.mxu0 0.0
    %2765 = vmatprep.subr.mxu0 0.0
    %2766 = vmatpush1.msra.mxu0 0.0
    %2767 = vmatprep.subr.mxu0 0.0
    %2768 = vmatpush1.msra.mxu0 0.0
    %2769 = vmatprep.subr.mxu0 0.0
    %2770 = vmatpush1.msra.mxu0 0.0
    %2771 = vmatprep.subr.mxu0 0.0
    %2772 = vmatpush1.msra.mxu0 0.0
    %2773 = vmatprep.subr.mxu0 0.0
    %2774 = vmatpush1.msra.mxu0 0.0
    %2775 = vmatprep.subr.mxu0 0.0
    %2776 = vmatpush1.msra.mxu0 0.0
    %2777 = vmatprep.subr.mxu0 0.0
    %2778 = vmatpush1.msra.mxu0 0.0
    %2779 = vmatprep.subr.mxu0 0.0
    %2780 = vmatpush1.msra.mxu0 0.0
    %2781 = vmatprep.subr.mxu0 0.0
    %2782 = vmatpush1.msra.mxu0 0.0
    %2783 = vmatprep.subr.mxu0 0.0
    %2784 = vmatpush1.msra.mxu0 0.0
    %2785 = vmatprep.subr.mxu0 0.0
    %2786 = vmatpush1.msra.mxu0 0.0
    %2787 = vmatprep.subr.mxu0 0.0
    %2788 = vmatpush1.msra.mxu0 0.0
    %2789 = vmatprep.subr.mxu0 0.0
    %2790 = vmatpush1.msra.mxu0 0.0
    %2791 = vmatprep.subr.mxu0 0.0
    %2792 = vmatpush1.msra.mxu0 0.0
    %2793 = vmatprep.subr.mxu0 0.0
    %2794 = vmatpush1.msra.mxu0 0.0
    %2795 = vmatprep.subr.mxu0 0.0
    %2796 = vmatpush1.msra.mxu0 0.0
    %2797 = vmatprep.subr.mxu0 0.0
    %2798 = vmatpush1.msra.mxu0 0.0
    %2799 = vmatprep.subr.mxu0 0.0
    %2800 = vmatpush1.msra.mxu0 0.0
    %2801 = vmatprep.subr.mxu0 0.0
    %2802 = vmatpush1.msra.mxu0 0.0
    %2803 = vmatprep.subr.mxu0 0.0
    %2804 = vmatpush1.msra.mxu0 0.0
    %2805 = vmatprep.subr.mxu0 0.0
    %2806 = vmatpush1.msra.mxu0 0.0
    %2807 = vmatprep.subr.mxu0 0.0
    %2808 = vmatpush1.msra.mxu0 0.0
    %2809 = vmatprep.subr.mxu0 0.0
    %2810 = vmatpush1.msra.mxu0 0.0
    %2811 = vmatprep.subr.mxu0 0.0
    %2812 = vmatpush1.msra.mxu0 0.0
    %2813 = vmatprep.subr.mxu0 0.0
    %2814 = vmatpush1.msra.mxu0 0.0
    %2815 = vmatprep.subr.mxu0 0.0
    %2816 = vmatpush1.msra.mxu0 0.0
    %2817 = vmatprep.subr.mxu0 0.0
    %2818 = vmatpush1.msra.mxu0 0.0
    %2819 = vmatprep.mubr.f32.mxu0 0.0
    %2820 = vmatmul.mubr.f32.gmra.mrb[0].mxu0 %v2753
    %v2821 = vpop.f32.mrb[0].mxu0
    %v2822 = vadd.f32 0.0, %v2821
    %v2823 = vpop.f32.mrb[0].mxu0
    %2824 = vdwg.mxu0
    %2825 = vrot.lane.b32.xlu0 %v2236, 56
    %v2826 = vpop.permute.xlu0 %2825
    %v2829 = vsel %vm186, %v2748, 0
    %2831 = vmatprep.subr.mxu0 0.0
    %2832 = vmatpush1.msra.mxu0 %v2826
    %2833 = vmatprep.subr.mxu0 0.0
    %2834 = vmatpush1.msra.mxu0 0.0
    %2835 = vmatprep.subr.mxu0 0.0
    %2836 = vmatpush1.msra.mxu0 0.0
    %2837 = vmatprep.subr.mxu0 0.0
    %2838 = vmatpush1.msra.mxu0 0.0
    %2839 = vmatprep.subr.mxu0 0.0
    %2840 = vmatpush1.msra.mxu0 0.0
    %2841 = vmatprep.subr.mxu0 0.0
    %2842 = vmatpush1.msra.mxu0 0.0
    %2843 = vmatprep.subr.mxu0 0.0
    %2844 = vmatpush1.msra.mxu0 0.0
    %2845 = vmatprep.subr.mxu0 0.0
    %2846 = vmatpush1.msra.mxu0 0.0
    %2847 = vmatprep.subr.mxu0 0.0
    %2848 = vmatpush1.msra.mxu0 0.0
    %2849 = vmatprep.subr.mxu0 0.0
    %2850 = vmatpush1.msra.mxu0 0.0
    %2851 = vmatprep.subr.mxu0 0.0
    %2852 = vmatpush1.msra.mxu0 0.0
    %2853 = vmatprep.subr.mxu0 0.0
    %2854 = vmatpush1.msra.mxu0 0.0
    %2855 = vmatprep.subr.mxu0 0.0
    %2856 = vmatpush1.msra.mxu0 0.0
    %2857 = vmatprep.subr.mxu0 0.0
    %2858 = vmatpush1.msra.mxu0 0.0
    %2859 = vmatprep.subr.mxu0 0.0
    %2860 = vmatpush1.msra.mxu0 0.0
    %2861 = vmatprep.subr.mxu0 0.0
    %2862 = vmatpush1.msra.mxu0 0.0
    %2863 = vmatprep.subr.mxu0 0.0
    %2864 = vmatpush1.msra.mxu0 0.0
    %2865 = vmatprep.subr.mxu0 0.0
    %2866 = vmatpush1.msra.mxu0 0.0
    %2867 = vmatprep.subr.mxu0 0.0
    %2868 = vmatpush1.msra.mxu0 0.0
    %2869 = vmatprep.subr.mxu0 0.0
    %2870 = vmatpush1.msra.mxu0 0.0
    %2871 = vmatprep.subr.mxu0 0.0
    %2872 = vmatpush1.msra.mxu0 0.0
    %2873 = vmatprep.subr.mxu0 0.0
    %2874 = vmatpush1.msra.mxu0 0.0
    %2875 = vmatprep.subr.mxu0 0.0
    %2876 = vmatpush1.msra.mxu0 0.0
    %2877 = vmatprep.subr.mxu0 0.0
    %2878 = vmatpush1.msra.mxu0 0.0
    %2879 = vmatprep.subr.mxu0 0.0
    %2880 = vmatpush1.msra.mxu0 0.0
    %2881 = vmatprep.subr.mxu0 0.0
    %2882 = vmatpush1.msra.mxu0 0.0
    %2883 = vmatprep.subr.mxu0 0.0
    %2884 = vmatpush1.msra.mxu0 0.0
    %2885 = vmatprep.subr.mxu0 0.0
    %2886 = vmatpush1.msra.mxu0 0.0
    %2887 = vmatprep.subr.mxu0 0.0
    %2888 = vmatpush1.msra.mxu0 0.0
    %2889 = vmatprep.subr.mxu0 0.0
    %2890 = vmatpush1.msra.mxu0 0.0
    %2891 = vmatprep.subr.mxu0 0.0
    %2892 = vmatpush1.msra.mxu0 0.0
    %2893 = vmatprep.subr.mxu0 0.0
    %2894 = vmatpush1.msra.mxu0 0.0
    %2895 = vmatprep.mubr.f32.mxu0 0.0
    %2896 = vmatmul.mubr.f32.gmra.mrb[0].mxu0 %v2829
    %v2897 = vpop.f32.mrb[0].mxu0
    %v2898 = vadd.f32 0.0, %v2897
    %v2899 = vpop.f32.mrb[0].mxu0
    %2900 = vdwg.mxu0
    %v2902 = vsel %vm186, %v2822, 0
    %v2905 = vsel %vm186, %v2898, 0
    %2907 = vmatprep.subr.mxu0 0.0
    %2908 = vmatpush1.msra.mxu0 %v2119
    %2909 = vmatprep.subr.mxu0 0.0
    %2910 = vmatpush1.msra.mxu0 0.0
    %2911 = vmatprep.subr.mxu0 0.0
    %2912 = vmatpush1.msra.mxu0 0.0
    %2913 = vmatprep.subr.mxu0 0.0
    %2914 = vmatpush1.msra.mxu0 0.0
    %2915 = vmatprep.subr.mxu0 0.0
    %2916 = vmatpush1.msra.mxu0 0.0
    %2917 = vmatprep.subr.mxu0 0.0
    %2918 = vmatpush1.msra.mxu0 0.0
    %2919 = vmatprep.subr.mxu0 0.0
    %2920 = vmatpush1.msra.mxu0 0.0
    %2921 = vmatprep.subr.mxu0 0.0
    %2922 = vmatpush1.msra.mxu0 0.0
    %2923 = vmatprep.subr.mxu0 0.0
    %2924 = vmatpush1.msra.mxu0 0.0
    %2925 = vmatprep.subr.mxu0 0.0
    %2926 = vmatpush1.msra.mxu0 0.0
    %2927 = vmatprep.subr.mxu0 0.0
    %2928 = vmatpush1.msra.mxu0 0.0
    %2929 = vmatprep.subr.mxu0 0.0
    %2930 = vmatpush1.msra.mxu0 0.0
    %2931 = vmatprep.subr.mxu0 0.0
    %2932 = vmatpush1.msra.mxu0 0.0
    %2933 = vmatprep.subr.mxu0 0.0
    %2934 = vmatpush1.msra.mxu0 0.0
    %2935 = vmatprep.subr.mxu0 0.0
    %2936 = vmatpush1.msra.mxu0 0.0
    %2937 = vmatprep.subr.mxu0 0.0
    %2938 = vmatpush1.msra.mxu0 0.0
    %2939 = vmatprep.subr.mxu0 0.0
    %2940 = vmatpush1.msra.mxu0 0.0
    %2941 = vmatprep.subr.mxu0 0.0
    %2942 = vmatpush1.msra.mxu0 0.0
    %2943 = vmatprep.subr.mxu0 0.0
    %2944 = vmatpush1.msra.mxu0 0.0
    %2945 = vmatprep.subr.mxu0 0.0
    %2946 = vmatpush1.msra.mxu0 0.0
    %2947 = vmatprep.subr.mxu0 0.0
    %2948 = vmatpush1.msra.mxu0 0.0
    %2949 = vmatprep.subr.mxu0 0.0
    %2950 = vmatpush1.msra.mxu0 0.0
    %2951 = vmatprep.subr.mxu0 0.0
    %2952 = vmatpush1.msra.mxu0 0.0
    %2953 = vmatprep.subr.mxu0 0.0
    %2954 = vmatpush1.msra.mxu0 0.0
    %2955 = vmatprep.subr.mxu0 0.0
    %2956 = vmatpush1.msra.mxu0 0.0
    %2957 = vmatprep.subr.mxu0 0.0
    %2958 = vmatpush1.msra.mxu0 0.0
    %2959 = vmatprep.subr.mxu0 0.0
    %2960 = vmatpush1.msra.mxu0 0.0
    %2961 = vmatprep.subr.mxu0 0.0
    %2962 = vmatpush1.msra.mxu0 0.0
    %2963 = vmatprep.subr.mxu0 0.0
    %2964 = vmatpush1.msra.mxu0 0.0
    %2965 = vmatprep.subr.mxu0 0.0
    %2966 = vmatpush1.msra.mxu0 0.0
    %2967 = vmatprep.subr.mxu0 0.0
    %2968 = vmatpush1.msra.mxu0 0.0
    %2969 = vmatprep.subr.mxu0 0.0
    %2970 = vmatpush1.msra.mxu0 0.0
    %2971 = vmatprep.mubr.f32.mxu0 0.0
    %2972 = vmatmul.mubr.f32.gmra.mrb[0].mxu0 %v2902
    %v2973 = vpop.f32.mrb[0].mxu0
    %v2974 = vadd.f32 0.0, %v2973
    %v2975 = vpop.f32.mrb[0].mxu0
    %2976 = vmatprep.mubr.f32.mxu0 0.0
    %2977 = vmatmul.mubr.f32.gmra.mrb[0].mxu0 %v2905
    %v2978 = vpop.f32.mrb[0].mxu0
    %v2979 = vadd.f32 0.0, %v2978
    %v2980 = vpop.f32.mrb[0].mxu0
    %2981 = vdwg.mxu0
    %v2983 = vsel %vm186, %v2490, 0
    %v2986 = vsel %vm186, %v2566, 0
    %2988 = vmatprep.subr.mxu0 0.0
    %2989 = vmatpush1.msra.mxu0 %v2118
    %2990 = vmatprep.subr.mxu0 0.0
    %2991 = vmatpush1.msra.mxu0 0.0
    %2992 = vmatprep.subr.mxu0 0.0
    %2993 = vmatpush1.msra.mxu0 0.0
    %2994 = vmatprep.subr.mxu0 0.0
    %2995 = vmatpush1.msra.mxu0 0.0
    %2996 = vmatprep.subr.mxu0 0.0
    %2997 = vmatpush1.msra.mxu0 0.0
    %2998 = vmatprep.subr.mxu0 0.0
    %2999 = vmatpush1.msra.mxu0 0.0
    %3000 = vmatprep.subr.mxu0 0.0
    %3001 = vmatpush1.msra.mxu0 0.0
    %3002 = vmatprep.subr.mxu0 0.0
    %3003 = vmatpush1.msra.mxu0 0.0
    %3004 = vmatprep.subr.mxu0 0.0
    %3005 = vmatpush1.msra.mxu0 0.0
    %3006 = vmatprep.subr.mxu0 0.0
    %3007 = vmatpush1.msra.mxu0 0.0
    %3008 = vmatprep.subr.mxu0 0.0
    %3009 = vmatpush1.msra.mxu0 0.0
    %3010 = vmatprep.subr.mxu0 0.0
    %3011 = vmatpush1.msra.mxu0 0.0
    %3012 = vmatprep.subr.mxu0 0.0
    %3013 = vmatpush1.msra.mxu0 0.0
    %3014 = vmatprep.subr.mxu0 0.0
    %3015 = vmatpush1.msra.mxu0 0.0
    %3016 = vmatprep.subr.mxu0 0.0
    %3017 = vmatpush1.msra.mxu0 0.0
    %3018 = vmatprep.subr.mxu0 0.0
    %3019 = vmatpush1.msra.mxu0 0.0
    %3020 = vmatprep.subr.mxu0 0.0
    %3021 = vmatpush1.msra.mxu0 0.0
    %3022 = vmatprep.subr.mxu0 0.0
    %3023 = vmatpush1.msra.mxu0 0.0
    %3024 = vmatprep.subr.mxu0 0.0
    %3025 = vmatpush1.msra.mxu0 0.0
    %3026 = vmatprep.subr.mxu0 0.0
    %3027 = vmatpush1.msra.mxu0 0.0
    %3028 = vmatprep.subr.mxu0 0.0
    %3029 = vmatpush1.msra.mxu0 0.0
    %3030 = vmatprep.subr.mxu0 0.0
    %3031 = vmatpush1.msra.mxu0 0.0
    %3032 = vmatprep.subr.mxu0 0.0
    %3033 = vmatpush1.msra.mxu0 0.0
    %3034 = vmatprep.subr.mxu0 0.0
    %3035 = vmatpush1.msra.mxu0 0.0
    %3036 = vmatprep.subr.mxu0 0.0
    %3037 = vmatpush1.msra.mxu0 0.0
    %3038 = vmatprep.subr.mxu0 0.0
    %3039 = vmatpush1.msra.mxu0 0.0
    %3040 = vmatprep.subr.mxu0 0.0
    %3041 = vmatpush1.msra.mxu0 0.0
    %3042 = vmatprep.subr.mxu0 0.0
    %3043 = vmatpush1.msra.mxu0 0.0
    %3044 = vmatprep.subr.mxu0 0.0
    %3045 = vmatpush1.msra.mxu0 0.0
    %3046 = vmatprep.subr.mxu0 0.0
    %3047 = vmatpush1.msra.mxu0 0.0
    %3048 = vmatprep.subr.mxu0 0.0
    %3049 = vmatpush1.msra.mxu0 0.0
    %3050 = vmatprep.subr.mxu0 0.0
    %3051 = vmatpush1.msra.mxu0 0.0
    %3052 = vmatprep.mubr.f32.mxu0 0.0
    %3053 = vmatmul.mubr.f32.gmra.mrb[0].mxu0 %v2983
    %v3054 = vpop.f32.mrb[0].mxu0
    %v3055 = vadd.f32 %v2974, %v3054
    %v3056 = vpop.f32.mrb[0].mxu0
    %3057 = vmatprep.mubr.f32.mxu0 0.0
    %3058 = vmatmul.mubr.f32.gmra.mrb[0].mxu0 %v2986
    %v3059 = vpop.f32.mrb[0].mxu0
    %v3060 = vadd.f32 %v2979, %v3059
    %v3061 = vpop.f32.mrb[0].mxu0
    %3062 = vdwg.mxu0
    %3063 = vrot.lane.b32.xlu0 %v2231, 112
    %v3064 = vpop.permute.xlu0 %3063
    %3065 = vrot.lane.b32.xlu0 %v2231, 80
    %v3066 = vpop.permute.xlu0 %3065
    %v3067 = vsel %vm186, %v3064, 0
    %v3069 = vsel %vm186, %v3066, 0
    %3071 = vmatprep.subr.mxu0 0.0
    %3072 = vmatpush1.xpose.msra.mxu0 %v3069
    %3073 = vmatprep.subr.mxu0 0.0
    %3074 = vmatpush1.xpose.msra.mxu0 0.0
    %3075 = vmatprep.subr.mxu0 0.0
    %3076 = vmatpush1.xpose.msra.mxu0 0.0
    %3077 = vmatprep.subr.mxu0 0.0
    %3078 = vmatpush1.xpose.msra.mxu0 0.0
    %3079 = vmatprep.subr.mxu0 0.0
    %3080 = vmatpush1.xpose.msra.mxu0 0.0
    %3081 = vmatprep.subr.mxu0 0.0
    %3082 = vmatpush1.xpose.msra.mxu0 0.0
    %3083 = vmatprep.subr.mxu0 0.0
    %3084 = vmatpush1.xpose.msra.mxu0 0.0
    %3085 = vmatprep.subr.mxu0 0.0
    %3086 = vmatpush1.xpose.msra.mxu0 0.0
    %3087 = vmatprep.subr.mxu0 0.0
    %3088 = vmatpush1.xpose.msra.mxu0 0.0
    %3089 = vmatprep.subr.mxu0 0.0
    %3090 = vmatpush1.xpose.msra.mxu0 0.0
    %3091 = vmatprep.subr.mxu0 0.0
    %3092 = vmatpush1.xpose.msra.mxu0 0.0
    %3093 = vmatprep.subr.mxu0 0.0
    %3094 = vmatpush1.xpose.msra.mxu0 0.0
    %3095 = vmatprep.subr.mxu0 0.0
    %3096 = vmatpush1.xpose.msra.mxu0 0.0
    %3097 = vmatprep.subr.mxu0 0.0
    %3098 = vmatpush1.xpose.msra.mxu0 0.0
    %3099 = vmatprep.subr.mxu0 0.0
    %3100 = vmatpush1.xpose.msra.mxu0 0.0
    %3101 = vmatprep.subr.mxu0 0.0
    %3102 = vmatpush1.xpose.msra.mxu0 0.0
    %3103 = vmatprep.subr.mxu0 0.0
    %3104 = vmatpush1.xpose.msra.mxu0 0.0
    %3105 = vmatprep.subr.mxu0 0.0
    %3106 = vmatpush1.xpose.msra.mxu0 0.0
    %3107 = vmatprep.subr.mxu0 0.0
    %3108 = vmatpush1.xpose.msra.mxu0 0.0
    %3109 = vmatprep.subr.mxu0 0.0
    %3110 = vmatpush1.xpose.msra.mxu0 0.0
    %3111 = vmatprep.subr.mxu0 0.0
    %3112 = vmatpush1.xpose.msra.mxu0 0.0
    %3113 = vmatprep.subr.mxu0 0.0
    %3114 = vmatpush1.xpose.msra.mxu0 0.0
    %3115 = vmatprep.subr.mxu0 0.0
    %3116 = vmatpush1.xpose.msra.mxu0 0.0
    %3117 = vmatprep.subr.mxu0 0.0
    %3118 = vmatpush1.xpose.msra.mxu0 0.0
    %3119 = vmatprep.subr.mxu0 0.0
    %3120 = vmatpush1.xpose.msra.mxu0 0.0
    %3121 = vmatprep.subr.mxu0 0.0
    %3122 = vmatpush1.xpose.msra.mxu0 0.0
    %3123 = vmatprep.subr.mxu0 0.0
    %3124 = vmatpush1.xpose.msra.mxu0 0.0
    %3125 = vmatprep.subr.mxu0 0.0
    %3126 = vmatpush1.xpose.msra.mxu0 0.0
    %3127 = vmatprep.subr.mxu0 0.0
    %3128 = vmatpush1.xpose.msra.mxu0 0.0
    %3129 = vmatprep.subr.mxu0 0.0
    %3130 = vmatpush1.xpose.msra.mxu0 0.0
    %3131 = vmatprep.subr.mxu0 0.0
    %3132 = vmatpush1.xpose.msra.mxu0 0.0
    %3133 = vmatprep.subr.mxu0 0.0
    %3134 = vmatpush1.xpose.msra.mxu0 0.0
    %3135 = vmatprep.mubr.f32.mxu0 0.0
    %3136 = vmatmul.mubr.f32.gmra.mrb[0].mxu0 %v3067
    %v3137 = vpop.f32.mrb[0].mxu0
    %v3138 = vadd.f32 0.0, %v3137
    %v3139 = vpop.f32.mrb[0].mxu0
    %3140 = vdwg.mxu0
    %3141 = vrot.lane.b32.xlu0 %v2236, 112
    %v3142 = vpop.permute.xlu0 %3141
    %3143 = vrot.lane.b32.xlu0 %v2236, 80
    %v3144 = vpop.permute.xlu0 %3143
    %v3145 = vsel %vm186, %v3142, 0
    %v3147 = vsel %vm186, %v3144, 0
    %3149 = vmatprep.subr.mxu0 0.0
    %3150 = vmatpush1.xpose.msra.mxu0 %v3147
    %3151 = vmatprep.subr.mxu0 0.0
    %3152 = vmatpush1.xpose.msra.mxu0 0.0
    %3153 = vmatprep.subr.mxu0 0.0
    %3154 = vmatpush1.xpose.msra.mxu0 0.0
    %3155 = vmatprep.subr.mxu0 0.0
    %3156 = vmatpush1.xpose.msra.mxu0 0.0
    %3157 = vmatprep.subr.mxu0 0.0
    %3158 = vmatpush1.xpose.msra.mxu0 0.0
    %3159 = vmatprep.subr.mxu0 0.0
    %3160 = vmatpush1.xpose.msra.mxu0 0.0
    %3161 = vmatprep.subr.mxu0 0.0
    %3162 = vmatpush1.xpose.msra.mxu0 0.0
    %3163 = vmatprep.subr.mxu0 0.0
    %3164 = vmatpush1.xpose.msra.mxu0 0.0
    %3165 = vmatprep.subr.mxu0 0.0
    %3166 = vmatpush1.xpose.msra.mxu0 0.0
    %3167 = vmatprep.subr.mxu0 0.0
    %3168 = vmatpush1.xpose.msra.mxu0 0.0
    %3169 = vmatprep.subr.mxu0 0.0
    %3170 = vmatpush1.xpose.msra.mxu0 0.0
    %3171 = vmatprep.subr.mxu0 0.0
    %3172 = vmatpush1.xpose.msra.mxu0 0.0
    %3173 = vmatprep.subr.mxu0 0.0
    %3174 = vmatpush1.xpose.msra.mxu0 0.0
    %3175 = vmatprep.subr.mxu0 0.0
    %3176 = vmatpush1.xpose.msra.mxu0 0.0
    %3177 = vmatprep.subr.mxu0 0.0
    %3178 = vmatpush1.xpose.msra.mxu0 0.0
    %3179 = vmatprep.subr.mxu0 0.0
    %3180 = vmatpush1.xpose.msra.mxu0 0.0
    %3181 = vmatprep.subr.mxu0 0.0
    %3182 = vmatpush1.xpose.msra.mxu0 0.0
    %3183 = vmatprep.subr.mxu0 0.0
    %3184 = vmatpush1.xpose.msra.mxu0 0.0
    %3185 = vmatprep.subr.mxu0 0.0
    %3186 = vmatpush1.xpose.msra.mxu0 0.0
    %3187 = vmatprep.subr.mxu0 0.0
    %3188 = vmatpush1.xpose.msra.mxu0 0.0
    %3189 = vmatprep.subr.mxu0 0.0
    %3190 = vmatpush1.xpose.msra.mxu0 0.0
    %3191 = vmatprep.subr.mxu0 0.0
    %3192 = vmatpush1.xpose.msra.mxu0 0.0
    %3193 = vmatprep.subr.mxu0 0.0
    %3194 = vmatpush1.xpose.msra.mxu0 0.0
    %3195 = vmatprep.subr.mxu0 0.0
    %3196 = vmatpush1.xpose.msra.mxu0 0.0
    %3197 = vmatprep.subr.mxu0 0.0
    %3198 = vmatpush1.xpose.msra.mxu0 0.0
    %3199 = vmatprep.subr.mxu0 0.0
    %3200 = vmatpush1.xpose.msra.mxu0 0.0
    %3201 = vmatprep.subr.mxu0 0.0
    %3202 = vmatpush1.xpose.msra.mxu0 0.0
    %3203 = vmatprep.subr.mxu0 0.0
    %3204 = vmatpush1.xpose.msra.mxu0 0.0
    %3205 = vmatprep.subr.mxu0 0.0
    %3206 = vmatpush1.xpose.msra.mxu0 0.0
    %3207 = vmatprep.subr.mxu0 0.0
    %3208 = vmatpush1.xpose.msra.mxu0 0.0
    %3209 = vmatprep.subr.mxu0 0.0
    %3210 = vmatpush1.xpose.msra.mxu0 0.0
    %3211 = vmatprep.subr.mxu0 0.0
    %3212 = vmatpush1.xpose.msra.mxu0 0.0
    %3213 = vmatprep.mubr.f32.mxu0 0.0
    %3214 = vmatmul.mubr.f32.gmra.mrb[0].mxu0 %v3145
    %v3215 = vpop.f32.mrb[0].mxu0
    %v3216 = vadd.f32 0.0, %v3215
    %v3217 = vpop.f32.mrb[0].mxu0
    %3218 = vdwg.mxu0
    %v3219 = vmul.f32 %v3138, 0.35355338
    %v3220 = vmul.f32 %v3216, 0.35355338
    %v3221 = vsel %vm186, %v3219, -inf
    %3222 = vmax.xlane.f32.xlu0 %v3221
    %v3223 = vpop.xlane.xlu0 %3222
    %v3224 = vsel %vm186, %v3220, -inf
    %3225 = vmax.xlane.f32.xlu0 %v3224
    %v3226 = vpop.xlane.xlu0 %3225
    %v3227 = vsub.f32 %v3219, %v3223
    %v3228 = vsub.f32 %v3220, %v3226
    %v3229 = vmul.f32 %v3227, 1.442695
    %v3230 = vpow.pop %v3229
    %v3231 = vmul.f32 %v3228, 1.442695
    %v3232 = vpow.pop %v3231
    %v3233 = vsel %vm186, %v3230, 0.0
    %3234 = vadd.xlane.f32.xlu0 %v3233
    %v3235 = vpop.xlane.xlu0 %3234
    %v3236 = vsel %vm186, %v3232, 0.0
    %3237 = vadd.xlane.f32.xlu0 %v3236
    %v3238 = vpop.xlane.xlu0 %3237
    %v3239 = vrcp.pop %v3235
    %v3240 = vrcp.pop %v3238
    %v3241 = vmul.f32 %v3230, %v3239
    %v3242 = vmul.f32 %v3232, %v3240
    %3243 = vrot.lane.b32.xlu0 %v2231, 48
    %v3244 = vpop.permute.xlu0 %3243
    %v3247 = vsel %vm186, %v3241, 0
    %3249 = vmatprep.subr.mxu0 0.0
    %3250 = vmatpush1.msra.mxu0 %v3244
    %3251 = vmatprep.subr.mxu0 0.0
    %3252 = vmatpush1.msra.mxu0 0.0
    %3253 = vmatprep.subr.mxu0 0.0
    %3254 = vmatpush1.msra.mxu0 0.0
    %3255 = vmatprep.subr.mxu0 0.0
    %3256 = vmatpush1.msra.mxu0 0.0
    %3257 = vmatprep.subr.mxu0 0.0
    %3258 = vmatpush1.msra.mxu0 0.0
    %3259 = vmatprep.subr.mxu0 0.0
    %3260 = vmatpush1.msra.mxu0 0.0
    %3261 = vmatprep.subr.mxu0 0.0
    %3262 = vmatpush1.msra.mxu0 0.0
    %3263 = vmatprep.subr.mxu0 0.0
    %3264 = vmatpush1.msra.mxu0 0.0
    %3265 = vmatprep.subr.mxu0 0.0
    %3266 = vmatpush1.msra.mxu0 0.0
    %3267 = vmatprep.subr.mxu0 0.0
    %3268 = vmatpush1.msra.mxu0 0.0
    %3269 = vmatprep.subr.mxu0 0.0
    %3270 = vmatpush1.msra.mxu0 0.0
    %3271 = vmatprep.subr.mxu0 0.0
    %3272 = vmatpush1.msra.mxu0 0.0
    %3273 = vmatprep.subr.mxu0 0.0
    %3274 = vmatpush1.msra.mxu0 0.0
    %3275 = vmatprep.subr.mxu0 0.0
    %3276 = vmatpush1.msra.mxu0 0.0
    %3277 = vmatprep.subr.mxu0 0.0
    %3278 = vmatpush1.msra.mxu0 0.0
    %3279 = vmatprep.subr.mxu0 0.0
    %3280 = vmatpush1.msra.mxu0 0.0
    %3281 = vmatprep.subr.mxu0 0.0
    %3282 = vmatpush1.msra.mxu0 0.0
    %3283 = vmatprep.subr.mxu0 0.0
    %3284 = vmatpush1.msra.mxu0 0.0
    %3285 = vmatprep.subr.mxu0 0.0
    %3286 = vmatpush1.msra.mxu0 0.0
    %3287 = vmatprep.subr.mxu0 0.0
    %3288 = vmatpush1.msra.mxu0 0.0
    %3289 = vmatprep.subr.mxu0 0.0
    %3290 = vmatpush1.msra.mxu0 0.0
    %3291 = vmatprep.subr.mxu0 0.0
    %3292 = vmatpush1.msra.mxu0 0.0
    %3293 = vmatprep.subr.mxu0 0.0
    %3294 = vmatpush1.msra.mxu0 0.0
    %3295 = vmatprep.subr.mxu0 0.0
    %3296 = vmatpush1.msra.mxu0 0.0
    %3297 = vmatprep.subr.mxu0 0.0
    %3298 = vmatpush1.msra.mxu0 0.0
    %3299 = vmatprep.subr.mxu0 0.0
    %3300 = vmatpush1.msra.mxu0 0.0
    %3301 = vmatprep.subr.mxu0 0.0
    %3302 = vmatpush1.msra.mxu0 0.0
    %3303 = vmatprep.subr.mxu0 0.0
    %3304 = vmatpush1.msra.mxu0 0.0
    %3305 = vmatprep.subr.mxu0 0.0
    %3306 = vmatpush1.msra.mxu0 0.0
    %3307 = vmatprep.subr.mxu0 0.0
    %3308 = vmatpush1.msra.mxu0 0.0
    %3309 = vmatprep.subr.mxu0 0.0
    %3310 = vmatpush1.msra.mxu0 0.0
    %3311 = vmatprep.subr.mxu0 0.0
    %3312 = vmatpush1.msra.mxu0 0.0
    %3313 = vmatprep.mubr.f32.mxu0 0.0
    %3314 = vmatmul.mubr.f32.gmra.mrb[0].mxu0 %v3247
    %v3315 = vpop.f32.mrb[0].mxu0
    %v3316 = vadd.f32 0.0, %v3315
    %v3317 = vpop.f32.mrb[0].mxu0
    %3318 = vdwg.mxu0
    %3319 = vrot.lane.b32.xlu0 %v2236, 48
    %v3320 = vpop.permute.xlu0 %3319
    %v3323 = vsel %vm186, %v3242, 0
    %3325 = vmatprep.subr.mxu0 0.0
    %3326 = vmatpush1.msra.mxu0 %v3320
    %3327 = vmatprep.subr.mxu0 0.0
    %3328 = vmatpush1.msra.mxu0 0.0
    %3329 = vmatprep.subr.mxu0 0.0
    %3330 = vmatpush1.msra.mxu0 0.0
    %3331 = vmatprep.subr.mxu0 0.0
    %3332 = vmatpush1.msra.mxu0 0.0
    %3333 = vmatprep.subr.mxu0 0.0
    %3334 = vmatpush1.msra.mxu0 0.0
    %3335 = vmatprep.subr.mxu0 0.0
    %3336 = vmatpush1.msra.mxu0 0.0
    %3337 = vmatprep.subr.mxu0 0.0
    %3338 = vmatpush1.msra.mxu0 0.0
    %3339 = vmatprep.subr.mxu0 0.0
    %3340 = vmatpush1.msra.mxu0 0.0
    %3341 = vmatprep.subr.mxu0 0.0
    %3342 = vmatpush1.msra.mxu0 0.0
    %3343 = vmatprep.subr.mxu0 0.0
    %3344 = vmatpush1.msra.mxu0 0.0
    %3345 = vmatprep.subr.mxu0 0.0
    %3346 = vmatpush1.msra.mxu0 0.0
    %3347 = vmatprep.subr.mxu0 0.0
    %3348 = vmatpush1.msra.mxu0 0.0
    %3349 = vmatprep.subr.mxu0 0.0
    %3350 = vmatpush1.msra.mxu0 0.0
    %3351 = vmatprep.subr.mxu0 0.0
    %3352 = vmatpush1.msra.mxu0 0.0
    %3353 = vmatprep.subr.mxu0 0.0
    %3354 = vmatpush1.msra.mxu0 0.0
    %3355 = vmatprep.subr.mxu0 0.0
    %3356 = vmatpush1.msra.mxu0 0.0
    %3357 = vmatprep.subr.mxu0 0.0
    %3358 = vmatpush1.msra.mxu0 0.0
    %3359 = vmatprep.subr.mxu0 0.0
    %3360 = vmatpush1.msra.mxu0 0.0
    %3361 = vmatprep.subr.mxu0 0.0
    %3362 = vmatpush1.msra.mxu0 0.0
    %3363 = vmatprep.subr.mxu0 0.0
    %3364 = vmatpush1.msra.mxu0 0.0
    %3365 = vmatprep.subr.mxu0 0.0
    %3366 = vmatpush1.msra.mxu0 0.0
    %3367 = vmatprep.subr.mxu0 0.0
    %3368 = vmatpush1.msra.mxu0 0.0
    %3369 = vmatprep.subr.mxu0 0.0
    %3370 = vmatpush1.msra.mxu0 0.0
    %3371 = vmatprep.subr.mxu0 0.0
    %3372 = vmatpush1.msra.mxu0 0.0
    %3373 = vmatprep.subr.mxu0 0.0
    %3374 = vmatpush1.msra.mxu0 0.0
    %3375 = vmatprep.subr.mxu0 0.0
    %3376 = vmatpush1.msra.mxu0 0.0
    %3377 = vmatprep.subr.mxu0 0.0
    %3378 = vmatpush1.msra.mxu0 0.0
    %3379 = vmatprep.subr.mxu0 0.0
    %3380 = vmatpush1.msra.mxu0 0.0
    %3381 = vmatprep.subr.mxu0 0.0
    %3382 = vmatpush1.msra.mxu0 0.0
    %3383 = vmatprep.subr.mxu0 0.0
    %3384 = vmatpush1.msra.mxu0 0.0
    %3385 = vmatprep.subr.mxu0 0.0
    %3386 = vmatpush1.msra.mxu0 0.0
    %3387 = vmatprep.subr.mxu0 0.0
    %3388 = vmatpush1.msra.mxu0 0.0
    %3389 = vmatprep.mubr.f32.mxu0 0.0
    %3390 = vmatmul.mubr.f32.gmra.mrb[0].mxu0 %v3323
    %v3391 = vpop.f32.mrb[0].mxu0
    %v3392 = vadd.f32 0.0, %v3391
    %v3393 = vpop.f32.mrb[0].mxu0
    %3394 = vdwg.mxu0
    %v3396 = vsel %vm186, %v3316, 0
    %v3399 = vsel %vm186, %v3392, 0
    %3401 = vmatprep.subr.mxu0 0.0
    %3402 = vmatpush1.msra.mxu0 %v2120
    %3403 = vmatprep.subr.mxu0 0.0
    %3404 = vmatpush1.msra.mxu0 0.0
    %3405 = vmatprep.subr.mxu0 0.0
    %3406 = vmatpush1.msra.mxu0 0.0
    %3407 = vmatprep.subr.mxu0 0.0
    %3408 = vmatpush1.msra.mxu0 0.0
    %3409 = vmatprep.subr.mxu0 0.0
    %3410 = vmatpush1.msra.mxu0 0.0
    %3411 = vmatprep.subr.mxu0 0.0
    %3412 = vmatpush1.msra.mxu0 0.0
    %3413 = vmatprep.subr.mxu0 0.0
    %3414 = vmatpush1.msra.mxu0 0.0
    %3415 = vmatprep.subr.mxu0 0.0
    %3416 = vmatpush1.msra.mxu0 0.0
    %3417 = vmatprep.subr.mxu0 0.0
    %3418 = vmatpush1.msra.mxu0 0.0
    %3419 = vmatprep.subr.mxu0 0.0
    %3420 = vmatpush1.msra.mxu0 0.0
    %3421 = vmatprep.subr.mxu0 0.0
    %3422 = vmatpush1.msra.mxu0 0.0
    %3423 = vmatprep.subr.mxu0 0.0
    %3424 = vmatpush1.msra.mxu0 0.0
    %3425 = vmatprep.subr.mxu0 0.0
    %3426 = vmatpush1.msra.mxu0 0.0
    %3427 = vmatprep.subr.mxu0 0.0
    %3428 = vmatpush1.msra.mxu0 0.0
    %3429 = vmatprep.subr.mxu0 0.0
    %3430 = vmatpush1.msra.mxu0 0.0
    %3431 = vmatprep.subr.mxu0 0.0
    %3432 = vmatpush1.msra.mxu0 0.0
    %3433 = vmatprep.subr.mxu0 0.0
    %3434 = vmatpush1.msra.mxu0 0.0
    %3435 = vmatprep.subr.mxu0 0.0
    %3436 = vmatpush1.msra.mxu0 0.0
    %3437 = vmatprep.subr.mxu0 0.0
    %3438 = vmatpush1.msra.mxu0 0.0
    %3439 = vmatprep.subr.mxu0 0.0
    %3440 = vmatpush1.msra.mxu0 0.0
    %3441 = vmatprep.subr.mxu0 0.0
    %3442 = vmatpush1.msra.mxu0 0.0
    %3443 = vmatprep.subr.mxu0 0.0
    %3444 = vmatpush1.msra.mxu0 0.0
    %3445 = vmatprep.subr.mxu0 0.0
    %3446 = vmatpush1.msra.mxu0 0.0
    %3447 = vmatprep.subr.mxu0 0.0
    %3448 = vmatpush1.msra.mxu0 0.0
    %3449 = vmatprep.subr.mxu0 0.0
    %3450 = vmatpush1.msra.mxu0 0.0
    %3451 = vmatprep.subr.mxu0 0.0
    %3452 = vmatpush1.msra.mxu0 0.0
    %3453 = vmatprep.subr.mxu0 0.0
    %3454 = vmatpush1.msra.mxu0 0.0
    %3455 = vmatprep.subr.mxu0 0.0
    %3456 = vmatpush1.msra.mxu0 0.0
    %3457 = vmatprep.subr.mxu0 0.0
    %3458 = vmatpush1.msra.mxu0 0.0
    %3459 = vmatprep.subr.mxu0 0.0
    %3460 = vmatpush1.msra.mxu0 0.0
    %3461 = vmatprep.subr.mxu0 0.0
    %3462 = vmatpush1.msra.mxu0 0.0
    %3463 = vmatprep.subr.mxu0 0.0
    %3464 = vmatpush1.msra.mxu0 0.0
    %3465 = vmatprep.mubr.f32.mxu0 0.0
    %3466 = vmatmul.mubr.f32.gmra.mrb[0].mxu0 %v3396
    %v3467 = vpop.f32.mrb[0].mxu0
    %v3468 = vadd.f32 0.0, %v3467
    %v3469 = vpop.f32.mrb[0].mxu0
    %3470 = vmatprep.mubr.f32.mxu0 0.0
    %3471 = vmatmul.mubr.f32.gmra.mrb[0].mxu0 %v3399
    %v3472 = vpop.f32.mrb[0].mxu0
    %v3473 = vadd.f32 0.0, %v3472
    %v3474 = vpop.f32.mrb[0].mxu0
    %3475 = vdwg.mxu0
    %v3476 = vadd.f32 %v3055, %v3468
    %v3477 = vadd.f32 %v3060, %v3473
    %3478 = vrot.lane.b32.xlu0 %v2231, 104
    %v3479 = vpop.permute.xlu0 %3478
    %3480 = vrot.lane.b32.xlu0 %v2231, 72
    %v3481 = vpop.permute.xlu0 %3480
    %v3482 = vsel %vm186, %v3479, 0
    %v3484 = vsel %vm186, %v3481, 0
    %3486 = vmatprep.subr.mxu0 0.0
    %3487 = vmatpush1.xpose.msra.mxu0 %v3484
    %3488 = vmatprep.subr.mxu0 0.0
    %3489 = vmatpush1.xpose.msra.mxu0 0.0
    %3490 = vmatprep.subr.mxu0 0.0
    %3491 = vmatpush1.xpose.msra.mxu0 0.0
    %3492 = vmatprep.subr.mxu0 0.0
    %3493 = vmatpush1.xpose.msra.mxu0 0.0
    %3494 = vmatprep.subr.mxu0 0.0
    %3495 = vmatpush1.xpose.msra.mxu0 0.0
    %3496 = vmatprep.subr.mxu0 0.0
    %3497 = vmatpush1.xpose.msra.mxu0 0.0
    %3498 = vmatprep.subr.mxu0 0.0
    %3499 = vmatpush1.xpose.msra.mxu0 0.0
    %3500 = vmatprep.subr.mxu0 0.0
    %3501 = vmatpush1.xpose.msra.mxu0 0.0
    %3502 = vmatprep.subr.mxu0 0.0
    %3503 = vmatpush1.xpose.msra.mxu0 0.0
    %3504 = vmatprep.subr.mxu0 0.0
    %3505 = vmatpush1.xpose.msra.mxu0 0.0
    %3506 = vmatprep.subr.mxu0 0.0
    %3507 = vmatpush1.xpose.msra.mxu0 0.0
    %3508 = vmatprep.subr.mxu0 0.0
    %3509 = vmatpush1.xpose.msra.mxu0 0.0
    %3510 = vmatprep.subr.mxu0 0.0
    %3511 = vmatpush1.xpose.msra.mxu0 0.0
    %3512 = vmatprep.subr.mxu0 0.0
    %3513 = vmatpush1.xpose.msra.mxu0 0.0
    %3514 = vmatprep.subr.mxu0 0.0
    %3515 = vmatpush1.xpose.msra.mxu0 0.0
    %3516 = vmatprep.subr.mxu0 0.0
    %3517 = vmatpush1.xpose.msra.mxu0 0.0
    %3518 = vmatprep.subr.mxu0 0.0
    %3519 = vmatpush1.xpose.msra.mxu0 0.0
    %3520 = vmatprep.subr.mxu0 0.0
    %3521 = vmatpush1.xpose.msra.mxu0 0.0
    %3522 = vmatprep.subr.mxu0 0.0
    %3523 = vmatpush1.xpose.msra.mxu0 0.0
    %3524 = vmatprep.subr.mxu0 0.0
    %3525 = vmatpush1.xpose.msra.mxu0 0.0
    %3526 = vmatprep.subr.mxu0 0.0
    %3527 = vmatpush1.xpose.msra.mxu0 0.0
    %3528 = vmatprep.subr.mxu0 0.0
    %3529 = vmatpush1.xpose.msra.mxu0 0.0
    %3530 = vmatprep.subr.mxu0 0.0
    %3531 = vmatpush1.xpose.msra.mxu0 0.0
    %3532 = vmatprep.subr.mxu0 0.0
    %3533 = vmatpush1.xpose.msra.mxu0 0.0
    %3534 = vmatprep.subr.mxu0 0.0
    %3535 = vmatpush1.xpose.msra.mxu0 0.0
    %3536 = vmatprep.subr.mxu0 0.0
    %3537 = vmatpush1.xpose.msra.mxu0 0.0
    %3538 = vmatprep.subr.mxu0 0.0
    %3539 = vmatpush1.xpose.msra.mxu0 0.0
    %3540 = vmatprep.subr.mxu0 0.0
    %3541 = vmatpush1.xpose.msra.mxu0 0.0
    %3542 = vmatprep.subr.mxu0 0.0
    %3543 = vmatpush1.xpose.msra.mxu0 0.0
    %3544 = vmatprep.subr.mxu0 0.0
    %3545 = vmatpush1.xpose.msra.mxu0 0.0
    %3546 = vmatprep.subr.mxu0 0.0
    %3547 = vmatpush1.xpose.msra.mxu0 0.0
    %3548 = vmatprep.subr.mxu0 0.0
    %3549 = vmatpush1.xpose.msra.mxu0 0.0
    %3550 = vmatprep.mubr.f32.mxu0 0.0
    %3551 = vmatmul.mubr.f32.gmra.mrb[0].mxu0 %v3482
    %v3552 = vpop.f32.mrb[0].mxu0
    %v3553 = vadd.f32 0.0, %v3552
    %v3554 = vpop.f32.mrb[0].mxu0
    %3555 = vdwg.mxu0
    %3556 = vrot.lane.b32.xlu0 %v2236, 104
    %v3557 = vpop.permute.xlu0 %3556
    %3558 = vrot.lane.b32.xlu0 %v2236, 72
    %v3559 = vpop.permute.xlu0 %3558
    %v3560 = vsel %vm186, %v3557, 0
    %v3562 = vsel %vm186, %v3559, 0
    %3564 = vmatprep.subr.mxu0 0.0
    %3565 = vmatpush1.xpose.msra.mxu0 %v3562
    %3566 = vmatprep.subr.mxu0 0.0
    %3567 = vmatpush1.xpose.msra.mxu0 0.0
    %3568 = vmatprep.subr.mxu0 0.0
    %3569 = vmatpush1.xpose.msra.mxu0 0.0
    %3570 = vmatprep.subr.mxu0 0.0
    %3571 = vmatpush1.xpose.msra.mxu0 0.0
    %3572 = vmatprep.subr.mxu0 0.0
    %3573 = vmatpush1.xpose.msra.mxu0 0.0
    %3574 = vmatprep.subr.mxu0 0.0
    %3575 = vmatpush1.xpose.msra.mxu0 0.0
    %3576 = vmatprep.subr.mxu0 0.0
    %3577 = vmatpush1.xpose.msra.mxu0 0.0
    %3578 = vmatprep.subr.mxu0 0.0
    %3579 = vmatpush1.xpose.msra.mxu0 0.0
    %3580 = vmatprep.subr.mxu0 0.0
    %3581 = vmatpush1.xpose.msra.mxu0 0.0
    %3582 = vmatprep.subr.mxu0 0.0
    %3583 = vmatpush1.xpose.msra.mxu0 0.0
    %3584 = vmatprep.subr.mxu0 0.0
    %3585 = vmatpush1.xpose.msra.mxu0 0.0
    %3586 = vmatprep.subr.mxu0 0.0
    %3587 = vmatpush1.xpose.msra.mxu0 0.0
    %3588 = vmatprep.subr.mxu0 0.0
    %3589 = vmatpush1.xpose.msra.mxu0 0.0
    %3590 = vmatprep.subr.mxu0 0.0
    %3591 = vmatpush1.xpose.msra.mxu0 0.0
    %3592 = vmatprep.subr.mxu0 0.0
    %3593 = vmatpush1.xpose.msra.mxu0 0.0
    %3594 = vmatprep.subr.mxu0 0.0
    %3595 = vmatpush1.xpose.msra.mxu0 0.0
    %3596 = vmatprep.subr.mxu0 0.0
    %3597 = vmatpush1.xpose.msra.mxu0 0.0
    %3598 = vmatprep.subr.mxu0 0.0
    %3599 = vmatpush1.xpose.msra.mxu0 0.0
    %3600 = vmatprep.subr.mxu0 0.0
    %3601 = vmatpush1.xpose.msra.mxu0 0.0
    %3602 = vmatprep.subr.mxu0 0.0
    %3603 = vmatpush1.xpose.msra.mxu0 0.0
    %3604 = vmatprep.subr.mxu0 0.0
    %3605 = vmatpush1.xpose.msra.mxu0 0.0
    %3606 = vmatprep.subr.mxu0 0.0
    %3607 = vmatpush1.xpose.msra.mxu0 0.0
    %3608 = vmatprep.subr.mxu0 0.0
    %3609 = vmatpush1.xpose.msra.mxu0 0.0
    %3610 = vmatprep.subr.mxu0 0.0
    %3611 = vmatpush1.xpose.msra.mxu0 0.0
    %3612 = vmatprep.subr.mxu0 0.0
    %3613 = vmatpush1.xpose.msra.mxu0 0.0
    %3614 = vmatprep.subr.mxu0 0.0
    %3615 = vmatpush1.xpose.msra.mxu0 0.0
    %3616 = vmatprep.subr.mxu0 0.0
    %3617 = vmatpush1.xpose.msra.mxu0 0.0
    %3618 = vmatprep.subr.mxu0 0.0
    %3619 = vmatpush1.xpose.msra.mxu0 0.0
    %3620 = vmatprep.subr.mxu0 0.0
    %3621 = vmatpush1.xpose.msra.mxu0 0.0
    %3622 = vmatprep.subr.mxu0 0.0
    %3623 = vmatpush1.xpose.msra.mxu0 0.0
    %3624 = vmatprep.subr.mxu0 0.0
    %3625 = vmatpush1.xpose.msra.mxu0 0.0
    %3626 = vmatprep.subr.mxu0 0.0
    %3627 = vmatpush1.xpose.msra.mxu0 0.0
    %3628 = vmatprep.mubr.f32.mxu0 0.0
    %3629 = vmatmul.mubr.f32.gmra.mrb[0].mxu0 %v3560
    %v3630 = vpop.f32.mrb[0].mxu0
    %v3631 = vadd.f32 0.0, %v3630
    %v3632 = vpop.f32.mrb[0].mxu0
    %3633 = vdwg.mxu0
    %v3634 = vmul.f32 %v3553, 0.35355338
    %v3635 = vmul.f32 %v3631, 0.35355338
    %v3636 = vsel %vm186, %v3634, -inf
    %3637 = vmax.xlane.f32.xlu0 %v3636
    %v3638 = vpop.xlane.xlu0 %3637
    %v3639 = vsel %vm186, %v3635, -inf
    %3640 = vmax.xlane.f32.xlu0 %v3639
    %v3641 = vpop.xlane.xlu0 %3640
    %v3642 = vsub.f32 %v3634, %v3638
    %v3643 = vsub.f32 %v3635, %v3641
    %v3644 = vmul.f32 %v3642, 1.442695
    %v3645 = vpow.pop %v3644
    %v3646 = vmul.f32 %v3643, 1.442695
    %v3647 = vpow.pop %v3646
    %v3648 = vsel %vm186, %v3645, 0.0
    %3649 = vadd.xlane.f32.xlu0 %v3648
    %v3650 = vpop.xlane.xlu0 %3649
    %v3651 = vsel %vm186, %v3647, 0.0
    %3652 = vadd.xlane.f32.xlu0 %v3651
    %v3653 = vpop.xlane.xlu0 %3652
    %v3654 = vrcp.pop %v3650
    %v3655 = vrcp.pop %v3653
    %v3656 = vmul.f32 %v3645, %v3654
    %v3657 = vmul.f32 %v3647, %v3655
    %3658 = vrot.lane.b32.xlu0 %v2231, 40
    %v3659 = vpop.permute.xlu0 %3658
    %v3662 = vsel %vm186, %v3656, 0
    %3664 = vmatprep.subr.mxu0 0.0
    %3665 = vmatpush1.msra.mxu0 %v3659
    %3666 = vmatprep.subr.mxu0 0.0
    %3667 = vmatpush1.msra.mxu0 0.0
    %3668 = vmatprep.subr.mxu0 0.0
    %3669 = vmatpush1.msra.mxu0 0.0
    %3670 = vmatprep.subr.mxu0 0.0
    %3671 = vmatpush1.msra.mxu0 0.0
    %3672 = vmatprep.subr.mxu0 0.0
    %3673 = vmatpush1.msra.mxu0 0.0
    %3674 = vmatprep.subr.mxu0 0.0
    %3675 = vmatpush1.msra.mxu0 0.0
    %3676 = vmatprep.subr.mxu0 0.0
    %3677 = vmatpush1.msra.mxu0 0.0
    %3678 = vmatprep.subr.mxu0 0.0
    %3679 = vmatpush1.msra.mxu0 0.0
    %3680 = vmatprep.subr.mxu0 0.0
    %3681 = vmatpush1.msra.mxu0 0.0
    %3682 = vmatprep.subr.mxu0 0.0
    %3683 = vmatpush1.msra.mxu0 0.0
    %3684 = vmatprep.subr.mxu0 0.0
    %3685 = vmatpush1.msra.mxu0 0.0
    %3686 = vmatprep.subr.mxu0 0.0
    %3687 = vmatpush1.msra.mxu0 0.0
    %3688 = vmatprep.subr.mxu0 0.0
    %3689 = vmatpush1.msra.mxu0 0.0
    %3690 = vmatprep.subr.mxu0 0.0
    %3691 = vmatpush1.msra.mxu0 0.0
    %3692 = vmatprep.subr.mxu0 0.0
    %3693 = vmatpush1.msra.mxu0 0.0
    %3694 = vmatprep.subr.mxu0 0.0
    %3695 = vmatpush1.msra.mxu0 0.0
    %3696 = vmatprep.subr.mxu0 0.0
    %3697 = vmatpush1.msra.mxu0 0.0
    %3698 = vmatprep.subr.mxu0 0.0
    %3699 = vmatpush1.msra.mxu0 0.0
    %3700 = vmatprep.subr.mxu0 0.0
    %3701 = vmatpush1.msra.mxu0 0.0
    %3702 = vmatprep.subr.mxu0 0.0
    %3703 = vmatpush1.msra.mxu0 0.0
    %3704 = vmatprep.subr.mxu0 0.0
    %3705 = vmatpush1.msra.mxu0 0.0
    %3706 = vmatprep.subr.mxu0 0.0
    %3707 = vmatpush1.msra.mxu0 0.0
    %3708 = vmatprep.subr.mxu0 0.0
    %3709 = vmatpush1.msra.mxu0 0.0
    %3710 = vmatprep.subr.mxu0 0.0
    %3711 = vmatpush1.msra.mxu0 0.0
    %3712 = vmatprep.subr.mxu0 0.0
    %3713 = vmatpush1.msra.mxu0 0.0
    %3714 = vmatprep.subr.mxu0 0.0
    %3715 = vmatpush1.msra.mxu0 0.0
    %3716 = vmatprep.subr.mxu0 0.0
    %3717 = vmatpush1.msra.mxu0 0.0
    %3718 = vmatprep.subr.mxu0 0.0
    %3719 = vmatpush1.msra.mxu0 0.0
    %3720 = vmatprep.subr.mxu0 0.0
    %3721 = vmatpush1.msra.mxu0 0.0
    %3722 = vmatprep.subr.mxu0 0.0
    %3723 = vmatpush1.msra.mxu0 0.0
    %3724 = vmatprep.subr.mxu0 0.0
    %3725 = vmatpush1.msra.mxu0 0.0
    %3726 = vmatprep.subr.mxu0 0.0
    %3727 = vmatpush1.msra.mxu0 0.0
    %3728 = vmatprep.mubr.f32.mxu0 0.0
    %3729 = vmatmul.mubr.f32.gmra.mrb[0].mxu0 %v3662
    %v3730 = vpop.f32.mrb[0].mxu0
    %v3731 = vadd.f32 0.0, %v3730
    %v3732 = vpop.f32.mrb[0].mxu0
    %3733 = vdwg.mxu0
    %3734 = vrot.lane.b32.xlu0 %v2236, 40
    %v3735 = vpop.permute.xlu0 %3734
    %v3738 = vsel %vm186, %v3657, 0
    %3740 = vmatprep.subr.mxu0 0.0
    %3741 = vmatpush1.msra.mxu0 %v3735
    %3742 = vmatprep.subr.mxu0 0.0
    %3743 = vmatpush1.msra.mxu0 0.0
    %3744 = vmatprep.subr.mxu0 0.0
    %3745 = vmatpush1.msra.mxu0 0.0
    %3746 = vmatprep.subr.mxu0 0.0
    %3747 = vmatpush1.msra.mxu0 0.0
    %3748 = vmatprep.subr.mxu0 0.0
    %3749 = vmatpush1.msra.mxu0 0.0
    %3750 = vmatprep.subr.mxu0 0.0
    %3751 = vmatpush1.msra.mxu0 0.0
    %3752 = vmatprep.subr.mxu0 0.0
    %3753 = vmatpush1.msra.mxu0 0.0
    %3754 = vmatprep.subr.mxu0 0.0
    %3755 = vmatpush1.msra.mxu0 0.0
    %3756 = vmatprep.subr.mxu0 0.0
    %3757 = vmatpush1.msra.mxu0 0.0
    %3758 = vmatprep.subr.mxu0 0.0
    %3759 = vmatpush1.msra.mxu0 0.0
    %3760 = vmatprep.subr.mxu0 0.0
    %3761 = vmatpush1.msra.mxu0 0.0
    %3762 = vmatprep.subr.mxu0 0.0
    %3763 = vmatpush1.msra.mxu0 0.0
    %3764 = vmatprep.subr.mxu0 0.0
    %3765 = vmatpush1.msra.mxu0 0.0
    %3766 = vmatprep.subr.mxu0 0.0
    %3767 = vmatpush1.msra.mxu0 0.0
    %3768 = vmatprep.subr.mxu0 0.0
    %3769 = vmatpush1.msra.mxu0 0.0
    %3770 = vmatprep.subr.mxu0 0.0
    %3771 = vmatpush1.msra.mxu0 0.0
    %3772 = vmatprep.subr.mxu0 0.0
    %3773 = vmatpush1.msra.mxu0 0.0
    %3774 = vmatprep.subr.mxu0 0.0
    %3775 = vmatpush1.msra.mxu0 0.0
    %3776 = vmatprep.subr.mxu0 0.0
    %3777 = vmatpush1.msra.mxu0 0.0
    %3778 = vmatprep.subr.mxu0 0.0
    %3779 = vmatpush1.msra.mxu0 0.0
    %3780 = vmatprep.subr.mxu0 0.0
    %3781 = vmatpush1.msra.mxu0 0.0
    %3782 = vmatprep.subr.mxu0 0.0
    %3783 = vmatpush1.msra.mxu0 0.0
    %3784 = vmatprep.subr.mxu0 0.0
    %3785 = vmatpush1.msra.mxu0 0.0
    %3786 = vmatprep.subr.mxu0 0.0
    %3787 = vmatpush1.msra.mxu0 0.0
    %3788 = vmatprep.subr.mxu0 0.0
    %3789 = vmatpush1.msra.mxu0 0.0
    %3790 = vmatprep.subr.mxu0 0.0
    %3791 = vmatpush1.msra.mxu0 0.0
    %3792 = vmatprep.subr.mxu0 0.0
    %3793 = vmatpush1.msra.mxu0 0.0
    %3794 = vmatprep.subr.mxu0 0.0
    %3795 = vmatpush1.msra.mxu0 0.0
    %3796 = vmatprep.subr.mxu0 0.0
    %3797 = vmatpush1.msra.mxu0 0.0
    %3798 = vmatprep.subr.mxu0 0.0
    %3799 = vmatpush1.msra.mxu0 0.0
    %3800 = vmatprep.subr.mxu0 0.0
    %3801 = vmatpush1.msra.mxu0 0.0
    %3802 = vmatprep.subr.mxu0 0.0
    %3803 = vmatpush1.msra.mxu0 0.0
    %3804 = vmatprep.mubr.f32.mxu0 0.0
    %3805 = vmatmul.mubr.f32.gmra.mrb[0].mxu0 %v3738
    %v3806 = vpop.f32.mrb[0].mxu0
    %v3807 = vadd.f32 0.0, %v3806
    %v3808 = vpop.f32.mrb[0].mxu0
    %3809 = vdwg.mxu0
    %v3811 = vsel %vm186, %v3731, 0
    %v3814 = vsel %vm186, %v3807, 0
    %3816 = vmatprep.subr.mxu0 0.0
    %3817 = vmatpush1.msra.mxu0 %v2121
    %3818 = vmatprep.subr.mxu0 0.0
    %3819 = vmatpush1.msra.mxu0 0.0
    %3820 = vmatprep.subr.mxu0 0.0
    %3821 = vmatpush1.msra.mxu0 0.0
    %3822 = vmatprep.subr.mxu0 0.0
    %3823 = vmatpush1.msra.mxu0 0.0
    %3824 = vmatprep.subr.mxu0 0.0
    %3825 = vmatpush1.msra.mxu0 0.0
    %3826 = vmatprep.subr.mxu0 0.0
    %3827 = vmatpush1.msra.mxu0 0.0
    %3828 = vmatprep.subr.mxu0 0.0
    %3829 = vmatpush1.msra.mxu0 0.0
    %3830 = vmatprep.subr.mxu0 0.0
    %3831 = vmatpush1.msra.mxu0 0.0
    %3832 = vmatprep.subr.mxu0 0.0
    %3833 = vmatpush1.msra.mxu0 0.0
    %3834 = vmatprep.subr.mxu0 0.0
    %3835 = vmatpush1.msra.mxu0 0.0
    %3836 = vmatprep.subr.mxu0 0.0
    %3837 = vmatpush1.msra.mxu0 0.0
    %3838 = vmatprep.subr.mxu0 0.0
    %3839 = vmatpush1.msra.mxu0 0.0
    %3840 = vmatprep.subr.mxu0 0.0
    %3841 = vmatpush1.msra.mxu0 0.0
    %3842 = vmatprep.subr.mxu0 0.0
    %3843 = vmatpush1.msra.mxu0 0.0
    %3844 = vmatprep.subr.mxu0 0.0
    %3845 = vmatpush1.msra.mxu0 0.0
    %3846 = vmatprep.subr.mxu0 0.0
    %3847 = vmatpush1.msra.mxu0 0.0
    %3848 = vmatprep.subr.mxu0 0.0
    %3849 = vmatpush1.msra.mxu0 0.0
    %3850 = vmatprep.subr.mxu0 0.0
    %3851 = vmatpush1.msra.mxu0 0.0
    %3852 = vmatprep.subr.mxu0 0.0
    %3853 = vmatpush1.msra.mxu0 0.0
    %3854 = vmatprep.subr.mxu0 0.0
    %3855 = vmatpush1.msra.mxu0 0.0
    %3856 = vmatprep.subr.mxu0 0.0
    %3857 = vmatpush1.msra.mxu0 0.0
    %3858 = vmatprep.subr.mxu0 0.0
    %3859 = vmatpush1.msra.mxu0 0.0
    %3860 = vmatprep.subr.mxu0 0.0
    %3861 = vmatpush1.msra.mxu0 0.0
    %3862 = vmatprep.subr.mxu0 0.0
    %3863 = vmatpush1.msra.mxu0 0.0
    %3864 = vmatprep.subr.mxu0 0.0
    %3865 = vmatpush1.msra.mxu0 0.0
    %3866 = vmatprep.subr.mxu0 0.0
    %3867 = vmatpush1.msra.mxu0 0.0
    %3868 = vmatprep.subr.mxu0 0.0
    %3869 = vmatpush1.msra.mxu0 0.0
    %3870 = vmatprep.subr.mxu0 0.0
    %3871 = vmatpush1.msra.mxu0 0.0
    %3872 = vmatprep.subr.mxu0 0.0
    %3873 = vmatpush1.msra.mxu0 0.0
    %3874 = vmatprep.subr.mxu0 0.0
    %3875 = vmatpush1.msra.mxu0 0.0
    %3876 = vmatprep.subr.mxu0 0.0
    %3877 = vmatpush1.msra.mxu0 0.0
    %3878 = vmatprep.subr.mxu0 0.0
    %3879 = vmatpush1.msra.mxu0 0.0
    %3880 = vmatprep.mubr.f32.mxu0 0.0
    %3881 = vmatmul.mubr.f32.gmra.mrb[0].mxu0 %v3811
    %v3882 = vpop.f32.mrb[0].mxu0
    %v3883 = vadd.f32 0.0, %v3882
    %v3884 = vpop.f32.mrb[0].mxu0
    %3885 = vmatprep.mubr.f32.mxu0 0.0
    %3886 = vmatmul.mubr.f32.gmra.mrb[0].mxu0 %v3814
    %v3887 = vpop.f32.mrb[0].mxu0
    %v3888 = vadd.f32 0.0, %v3887
    %v3889 = vpop.f32.mrb[0].mxu0
    %3890 = vdwg.mxu0
    %v3891 = vadd.f32 %v3476, %v3883
    %v3892 = vadd.f32 %v3477, %v3888
    %v3894 = vlaneseq
    %v3895 = vshrl.u32 %v3894, 7
    %v3896 = vsub.s32 0, %v3895
    %v3897 = vrot.slane %v2139, %v3896
    %v3899 = vadd.f32 %v3891, %v3897
    %v3900 = vadd.f32 %v3892, %v3897
    %v3901 = vadd.f32 %v2110, %v3899
    %v3902 = vadd.f32 %v2111, %v3900
    %v3903 = vsel %vm101, %v3901, 0.0
    %3904 = vadd.xlane.f32.xlu0 %v3903
    %v3905 = vpop.xlane.xlu0 %3904
    %v3906 = vsel %vm101, %v3902, 0.0
    %3907 = vadd.xlane.f32.xlu0 %v3906
    %v3908 = vpop.xlane.xlu0 %3907
    %v3909 = vmul.f32 %v3905, %v1854
    %v3910 = vmul.f32 %v3908, %v1854
    %v3911 = vsub.f32 %v3901, %v3909
    %v3912 = vsub.f32 %v3902, %v3910
    %v3913 = vmul.f32 %v3911, %v3911
    %v3914 = vmul.f32 %v3912, %v3912
    %v3915 = vsel %vm101, %v3913, 0.0
    %3916 = vadd.xlane.f32.xlu0 %v3915
    %v3917 = vpop.xlane.xlu0 %3916
    %v3918 = vsel %vm101, %v3914, 0.0
    %3919 = vadd.xlane.f32.xlu0 %v3918
    %v3920 = vpop.xlane.xlu0 %3919
    %v3921 = vmul.f32 %v3917, %v1854
    %v3922 = vmul.f32 %v3920, %v1854
    %v3923 = vadd.f32 %v3921, 1e-05
    %v3924 = vadd.f32 %v3922, 1e-05
    %v3925 = vrsqrt.pop %v3923
    %v3926 = vrsqrt.pop %v3924
    %v3927 = vmul.f32 %v3911, %v3925
    %v3928 = vmul.f32 %v3912, %v3926
    %v3930 = vlaneseq
    %v3931 = vshrl.u32 %v3930, 7
    %v3932 = vsub.s32 0, %v3931
    %v3933 = vrot.slane %v2145, %v3932
    %v3935 = vmul.f32 %v3927, %v3933
    %v3936 = vmul.f32 %v3928, %v3933
    %v3938 = vlaneseq
    %v3939 = vshrl.u32 %v3938, 7
    %v3940 = vsub.s32 0, %v3939
    %v3941 = vrot.slane %v2147, %v3940
    %v3943 = vadd.f32 %v3935, %v3941
    %v3944 = vadd.f32 %v3936, %v3941
    %v3946 = vlaneseq
    %v3947 = vshrl.u32 %v3946, 7
    %v3948 = vsub.s32 0, %v3947
    %v3949 = vrot.slane %v2141, %v3948
    %v3952 = vsel %vm101, %v3943, 0
    %v3955 = vsel %vm101, %v3944, 0
    %3957 = vmatprep.subr.mxu0 0.0
    %3958 = vmatpush1.msra.mxu0 %v2123
    %3959 = vmatprep.subr.mxu0 0.0
    %3960 = vmatpush1.msra.mxu0 %v2124
    %3961 = vmatprep.subr.mxu0 0.0
    %3962 = vmatpush1.msra.mxu0 %v2125
    %3963 = vmatprep.subr.mxu0 0.0
    %3964 = vmatpush1.msra.mxu0 %v2126
    %3965 = vmatprep.subr.mxu0 0.0
    %3966 = vmatpush1.msra.mxu0 0.0
    %3967 = vmatprep.subr.mxu0 0.0
    %3968 = vmatpush1.msra.mxu0 0.0
    %3969 = vmatprep.subr.mxu0 0.0
    %3970 = vmatpush1.msra.mxu0 0.0
    %3971 = vmatprep.subr.mxu0 0.0
    %3972 = vmatpush1.msra.mxu0 0.0
    %3973 = vmatprep.subr.mxu0 0.0
    %3974 = vmatpush1.msra.mxu0 0.0
    %3975 = vmatprep.subr.mxu0 0.0
    %3976 = vmatpush1.msra.mxu0 0.0
    %3977 = vmatprep.subr.mxu0 0.0
    %3978 = vmatpush1.msra.mxu0 0.0
    %3979 = vmatprep.subr.mxu0 0.0
    %3980 = vmatpush1.msra.mxu0 0.0
    %3981 = vmatprep.subr.mxu0 0.0
    %3982 = vmatpush1.msra.mxu0 0.0
    %3983 = vmatprep.subr.mxu0 0.0
    %3984 = vmatpush1.msra.mxu0 0.0
    %3985 = vmatprep.subr.mxu0 0.0
    %3986 = vmatpush1.msra.mxu0 0.0
    %3987 = vmatprep.subr.mxu0 0.0
    %3988 = vmatpush1.msra.mxu0 0.0
    %3989 = vmatprep.subr.mxu0 0.0
    %3990 = vmatpush1.msra.mxu0 0.0
    %3991 = vmatprep.subr.mxu0 0.0
    %3992 = vmatpush1.msra.mxu0 0.0
    %3993 = vmatprep.subr.mxu0 0.0
    %3994 = vmatpush1.msra.mxu0 0.0
    %3995 = vmatprep.subr.mxu0 0.0
    %3996 = vmatpush1.msra.mxu0 0.0
    %3997 = vmatprep.subr.mxu0 0.0
    %3998 = vmatpush1.msra.mxu0 0.0
    %3999 = vmatprep.subr.mxu0 0.0
    %4000 = vmatpush1.msra.mxu0 0.0
    %4001 = vmatprep.subr.mxu0 0.0
    %4002 = vmatpush1.msra.mxu0 0.0
    %4003 = vmatprep.subr.mxu0 0.0
    %4004 = vmatpush1.msra.mxu0 0.0
    %4005 = vmatprep.subr.mxu0 0.0
    %4006 = vmatpush1.msra.mxu0 0.0
    %4007 = vmatprep.subr.mxu0 0.0
    %4008 = vmatpush1.msra.mxu0 0.0
    %4009 = vmatprep.subr.mxu0 0.0
    %4010 = vmatpush1.msra.mxu0 0.0
    %4011 = vmatprep.subr.mxu0 0.0
    %4012 = vmatpush1.msra.mxu0 0.0
    %4013 = vmatprep.subr.mxu0 0.0
    %4014 = vmatpush1.msra.mxu0 0.0
    %4015 = vmatprep.subr.mxu0 0.0
    %4016 = vmatpush1.msra.mxu0 0.0
    %4017 = vmatprep.subr.mxu0 0.0
    %4018 = vmatpush1.msra.mxu0 0.0
    %4019 = vmatprep.subr.mxu0 0.0
    %4020 = vmatpush1.msra.mxu0 0.0
    %4021 = vmatprep.mubr.f32.mxu0 0.0
    %4022 = vmatmul.mubr.f32.gmra.mrb[0].mxu0 %v3952
    %v4023 = vpop.f32.mrb[0].mxu0
    %v4024 = vadd.f32 %v3949, %v4023
    %v4025 = vpop.f32.mrb[0].mxu0
    %4026 = vmatprep.mubr.f32.mxu0 0.0
    %4027 = vmatmul.mubr.f32.gmra.mrb[0].mxu0 %v3955
    %v4028 = vpop.f32.mrb[0].mxu0
    %v4029 = vadd.f32 %v3949, %v4028
    %v4030 = vpop.f32.mrb[0].mxu0
    %4031 = vdwg.mxu0
    %v4032 = vmax.f32 %v4024, 0.0
    %v4033 = vmax.f32 %v4029, 0.0
    %v4035 = vlaneseq
    %v4036 = vshrl.u32 %v4035, 7
    %v4037 = vsub.s32 0, %v4036
    %v4038 = vrot.slane %v2143, %v4037
    %v4041 = vsel %vm1986, %v4032, 0
    %v4044 = vsel %vm1986, %v4033, 0
    %4046 = vmatprep.subr.mxu0 0.0
    %4047 = vmatpush1.msra.mxu0 %v2128
    %4048 = vmatprep.subr.mxu0 0.0
    %4049 = vmatpush1.msra.mxu0 %v2129
    %4050 = vmatprep.subr.mxu0 0.0
    %4051 = vmatpush1.msra.mxu0 %v2130
    %4052 = vmatprep.subr.mxu0 0.0
    %4053 = vmatpush1.msra.mxu0 %v2131
    %4054 = vmatprep.subr.mxu0 0.0
    %4055 = vmatpush1.msra.mxu0 %v2132
    %4056 = vmatprep.subr.mxu0 0.0
    %4057 = vmatpush1.msra.mxu0 %v2133
    %4058 = vmatprep.subr.mxu0 0.0
    %4059 = vmatpush1.msra.mxu0 %v2134
    %4060 = vmatprep.subr.mxu0 0.0
    %4061 = vmatpush1.msra.mxu0 %v2135
    %4062 = vmatprep.subr.mxu0 0.0
    %4063 = vmatpush1.msra.mxu0 0.0
    %4064 = vmatprep.subr.mxu0 0.0
    %4065 = vmatpush1.msra.mxu0 0.0
    %4066 = vmatprep.subr.mxu0 0.0
    %4067 = vmatpush1.msra.mxu0 0.0
    %4068 = vmatprep.subr.mxu0 0.0
    %4069 = vmatpush1.msra.mxu0 0.0
    %4070 = vmatprep.subr.mxu0 0.0
    %4071 = vmatpush1.msra.mxu0 0.0
    %4072 = vmatprep.subr.mxu0 0.0
    %4073 = vmatpush1.msra.mxu0 0.0
    %4074 = vmatprep.subr.mxu0 0.0
    %4075 = vmatpush1.msra.mxu0 0.0
    %4076 = vmatprep.subr.mxu0 0.0
    %4077 = vmatpush1.msra.mxu0 0.0
    %4078 = vmatprep.subr.mxu0 0.0
    %4079 = vmatpush1.msra.mxu0 0.0
    %4080 = vmatprep.subr.mxu0 0.0
    %4081 = vmatpush1.msra.mxu0 0.0
    %4082 = vmatprep.subr.mxu0 0.0
    %4083 = vmatpush1.msra.mxu0 0.0
    %4084 = vmatprep.subr.mxu0 0.0
    %4085 = vmatpush1.msra.mxu0 0.0
    %4086 = vmatprep.subr.mxu0 0.0
    %4087 = vmatpush1.msra.mxu0 0.0
    %4088 = vmatprep.subr.mxu0 0.0
    %4089 = vmatpush1.msra.mxu0 0.0
    %4090 = vmatprep.subr.mxu0 0.0
    %4091 = vmatpush1.msra.mxu0 0.0
    %4092 = vmatprep.subr.mxu0 0.0
    %4093 = vmatpush1.msra.mxu0 0.0
    %4094 = vmatprep.subr.mxu0 0.0
    %4095 = vmatpush1.msra.mxu0 0.0
    %4096 = vmatprep.subr.mxu0 0.0
    %4097 = vmatpush1.msra.mxu0 0.0
    %4098 = vmatprep.subr.mxu0 0.0
    %4099 = vmatpush1.msra.mxu0 0.0
    %4100 = vmatprep.subr.mxu0 0.0
    %4101 = vmatpush1.msra.mxu0 0.0
    %4102 = vmatprep.subr.mxu0 0.0
    %4103 = vmatpush1.msra.mxu0 0.0
    %4104 = vmatprep.subr.mxu0 0.0
    %4105 = vmatpush1.msra.mxu0 0.0
    %4106 = vmatprep.subr.mxu0 0.0
    %4107 = vmatpush1.msra.mxu0 0.0
    %4108 = vmatprep.subr.mxu0 0.0
    %4109 = vmatpush1.msra.mxu0 0.0
    %4110 = vmatprep.mubr.f32.mxu0 0.0
    %4111 = vmatmul.mubr.f32.gmra.mrb[0].mxu0 %v4041
    %v4112 = vpop.f32.mrb[0].mxu0
    %v4113 = vadd.f32 %v4038, %v4112
    %v4114 = vpop.f32.mrb[0].mxu0
    %4115 = vmatprep.mubr.f32.mxu0 0.0
    %4116 = vmatmul.mubr.f32.gmra.mrb[0].mxu0 %v4044
    %v4117 = vpop.f32.mrb[0].mxu0
    %v4118 = vadd.f32 %v4038, %v4117
    %v4119 = vpop.f32.mrb[0].mxu0
    %4120 = vdwg.mxu0
    %v4121 = vadd.f32 %v3943, %v4113
    %v4122 = vadd.f32 %v3944, %v4118
    %v4123 = vsel %vm101, %v4121, 0.0
    %4124 = vadd.xlane.f32.xlu0 %v4123
    %v4125 = vpop.xlane.xlu0 %4124
    %v4126 = vsel %vm101, %v4122, 0.0
    %4127 = vadd.xlane.f32.xlu0 %v4126
    %v4128 = vpop.xlane.xlu0 %4127
    %v4129 = vmul.f32 %v4125, %v1854
    %v4130 = vmul.f32 %v4128, %v1854
    %v4131 = vsub.f32 %v4121, %v4129
    %v4132 = vsub.f32 %v4122, %v4130
    %v4133 = vmul.f32 %v4131, %v4131
    %v4134 = vmul.f32 %v4132, %v4132
    %v4135 = vsel %vm101, %v4133, 0.0
    %4136 = vadd.xlane.f32.xlu0 %v4135
    %v4137 = vpop.xlane.xlu0 %4136
    %v4138 = vsel %vm101, %v4134, 0.0
    %4139 = vadd.xlane.f32.xlu0 %v4138
    %v4140 = vpop.xlane.xlu0 %4139
    %v4141 = vmul.f32 %v4137, %v1854
    %v4142 = vmul.f32 %v4140, %v1854
    %v4143 = vadd.f32 %v4141, 1e-05
    %v4144 = vadd.f32 %v4142, 1e-05
    %v4145 = vrsqrt.pop %v4143
    %v4146 = vrsqrt.pop %v4144
    %v4147 = vmul.f32 %v4131, %v4145
    %v4148 = vmul.f32 %v4132, %v4146
    %v4150 = vlaneseq
    %v4151 = vshrl.u32 %v4150, 7
    %v4152 = vsub.s32 0, %v4151
    %v4153 = vrot.slane %v2149, %v4152
    %v4155 = vmul.f32 %v4147, %v4153
    %v4156 = vmul.f32 %v4148, %v4153
    %v4158 = vlaneseq
    %v4159 = vshrl.u32 %v4158, 7
    %v4160 = vsub.s32 0, %v4159
    %v4161 = vrot.slane %v2151, %v4160
    %v4163 = vadd.f32 %v4155, %v4161
    %v4164 = vadd.f32 %v4156, %v4161
    %v4165 = vld [vmem:[%s13] sm:$0x1]
    %v4166 = vld [vmem:[%s14] sm:$0x1]
    %v4167 = vsel %vm101, %v4163, 0.0
    %4168 = vadd.xlane.f32.xlu0 %v4167
    %v4169 = vpop.xlane.xlu0 %4168
    %v4170 = vsel %vm101, %v4164, 0.0
    %4171 = vadd.xlane.f32.xlu0 %v4170
    %v4172 = vpop.xlane.xlu0 %4171
    %v4173 = vmul.f32 %v4169, %v1854
    %v4174 = vmul.f32 %v4172, %v1854
    %v4175 = vsub.f32 %v4163, %v4173
    %v4176 = vsub.f32 %v4164, %v4174
    %v4177 = vmul.f32 %v4175, %v4175
    %v4178 = vmul.f32 %v4176, %v4176
    %v4179 = vsel %vm101, %v4177, 0.0
    %4180 = vadd.xlane.f32.xlu0 %v4179
    %v4181 = vpop.xlane.xlu0 %4180
    %v4182 = vsel %vm101, %v4178, 0.0
    %4183 = vadd.xlane.f32.xlu0 %v4182
    %v4184 = vpop.xlane.xlu0 %4183
    %v4185 = vmul.f32 %v4181, %v1854
    %v4186 = vmul.f32 %v4184, %v1854
    %v4187 = vadd.f32 %v4185, 1e-05
    %v4188 = vadd.f32 %v4186, 1e-05
    %v4189 = vrsqrt.pop %v4187
    %v4190 = vrsqrt.pop %v4188
    %v4191 = vmul.f32 %v4175, %v4189
    %v4192 = vmul.f32 %v4176, %v4190
    %v4194 = vlaneseq
    %v4195 = vshrl.u32 %v4194, 7
    %v4196 = vsub.s32 0, %v4195
    %v4197 = vrot.slane %v4165, %v4196
    %v4199 = vmul.f32 %v4191, %v4197
    %v4200 = vmul.f32 %v4192, %v4197
    %v4202 = vlaneseq
    %v4203 = vshrl.u32 %v4202, 7
    %v4204 = vsub.s32 0, %v4203
    %v4205 = vrot.slane %v4166, %v4204
    %v4207 = vadd.f32 %v4199, %v4205
    %v4208 = vadd.f32 %v4200, %v4205
    %4209 = vst.msk [vmem:[#allocation5] sm:$0xff] %vm101, %v4207
    %4210 = vst.msk [vmem:[#allocation5 + $0x8] sm:$0xff] %vm101, %v4208
    // Predicated region
    $region66: #{bran_encoder_forward.1} parent=1 // pred_check
      _
    $region67: #{bran_encoder_forward.1} parent=1 // pred_check_branch
      %4212 = sbr.rel (0) target = $region69
    $region68: #{bran_encoder_forward.1} parent=1 // pred_region
      %s4214 = ssub.s32 256, 256
      %4215 = vsyncadd [#allocation4], %s4214
      %s4216 = sshll.u32 [#allocation5], 4
      %s4217 = int_to_ptr.vmem [resolvable:$true] %s4216
      %4222 = dma.vmem_to_hbm [thread:$0]  %s4217, 256, %s15, [#allocation4], 128, 128, 8
    $region69: #{bran_encoder_forward.1} parent=1 // pred_fallthru
      _
    // Predicated region
    $region70: #{bran_encoder_forward.1} parent=1 // pred_check
      _
    $region71: #{bran_encoder_forward.1} parent=1 // pred_check_branch
      %4224 = sbr.rel (0) target = $region73
    $region72: #{bran_encoder_forward.1} parent=1 // pred_region
      %4225 = dma.done [#allocation4], 256
    $region73: #{bran_encoder_forward.1} parent=1 // pred_fallthru
      _
    %4226 = vsyncpa [#allocation3], 1
    %4227 = vsyncpa [#allocation4], 1

</llo_original>
